<compile_context>
chip_gen: v5e
topology: v5e:2x2
jax: 0.10.0
libtpu: 0.0.40
codegen_flags: <defaults>
</compile_context>

<pallas_src>
import jax
import jax.numpy as jnp
from jax.experimental import pallas as pl
from jax.experimental.pallas import tpu as pltpu


LN_EPS = 1e-5  # PyTorch nn.LayerNorm default


def _round_up(x, m):
    return ((x + m - 1) // m) * m


def _largest_divisor_tile(total, unit, max_tile):
    """Largest t = unit*k with (total // unit) % k == 0 and t <= max_tile."""
    m = total // unit
    best = 1
    for k in range(1, m + 1):
        if m % k == 0 and unit * k <= max_tile:
            best = k
    return unit * best


def _vmem_budget_bytes():
    """Per-generation VMEM budget for this kernel's tiles."""
    try:
        cap = int(pltpu.get_tpu_info().vmem_capacity_bytes)
    except Exception:
        cap = 64 << 20  # unknown part: assume the smallest (v7x-like) VMEM
    if cap <= (64 << 20):
        return 48 << 20                            # v7x: leave ~16 MiB headroom
    return min(cap - (28 << 20), 100 << 20)        # v5e / v6e: 128 MiB physical


def prenorm_linear_kernel(x_ref, gamma_ref, beta_ref, w_ref, b_ref, o_ref, y_ref):
    # x_ref: (RT, D); gamma/beta: (1, D); w_ref: (D, TN); b_ref: (1, TN)
    # y_ref: (RT, D) scratch holding LayerNorm(x)*gamma + beta in the matmul
    #        dtype; persists across the inner (DO) grid axis, so the LN vector
    #        work runs only once per row tile.
    @pl.when(pl.program_id(1) == 0)
    def _compute_layernorm():
        x = x_ref[...].astype(jnp.float32)
        d = x.shape[-1]
        mean = jnp.sum(x, axis=-1, keepdims=True) * (1.0 / d)
        xc = x - mean
        var = jnp.sum(xc * xc, axis=-1, keepdims=True) * (1.0 / d)  # two-pass variance
        inv_std = jax.lax.rsqrt(var + LN_EPS)
        y = xc * inv_std
        y = y * gamma_ref[...].astype(jnp.float32) + beta_ref[...].astype(jnp.float32)
        y_ref[...] = y.astype(y_ref.dtype)

    # fn: Linear(D -> TN). MXU matmul in the weight's native dtype (bf16 on
    # bf16 nets) with f32 accumulation.
    out = jnp.dot(y_ref[...], w_ref[...], preferred_element_type=jnp.float32)
    out = out + b_ref[...].astype(jnp.float32)
    o_ref[...] = out.astype(o_ref.dtype)


def prenorm_linear(x, gamma, beta, w, b, *, row_tile=None, n_tile=None):
    """x: (B, S, D) -> (B, S, DO). LayerNorm(D) followed by Linear(D, DO)."""
    B, S, D = x.shape
    DO = w.shape[1]
    rows = B * S
    out_dtype = x.dtype

    x_isz = jnp.dtype(x.dtype).itemsize
    w_isz = jnp.dtype(w.dtype).itemsize
    o_isz = jnp.dtype(out_dtype).itemsize
    p_isz = jnp.dtype(gamma.dtype).itemsize

    budget = _vmem_budget_bytes()
    big_vmem = budget > (64 << 20)

    # Sublane packing for the row axis (16 for bf16, 8 for f32).
    sub = 16 if x.dtype == jnp.bfloat16 else 8
    rows_sub = _round_up(rows, sub)
    do_128 = _round_up(DO, 128)

    # Keep the full weight resident (constant index_map over the whole grid ->
    # W is streamed from HBM exactly once) when it comfortably fits the budget.
    w_resident = (n_tile is None) and (2 * D * do_128 * w_isz <= budget // 3)

    desired_rt = row_tile if row_tile is not None else (512 if big_vmem else 256)
    desired_tn = n_tile if n_tile is not None else (512 if big_vmem else 256)

    def pick_tiles(drt, dtn):
        # Row tile: prefer a divisor of the sublane-padded row count (no extra
        # padding pass over x); fall back to full-tile padding only if the
        # divisor would be pathologically small.
        rt = _largest_divisor_tile(rows_sub, sub, max(drt, sub))
        if rt >= max(min(drt, rows_sub) // 2, sub):
            rows_pad = rows_sub
        else:
            rt = _round_up(min(drt, rows_sub), sub)
            rows_pad = _round_up(rows, rt)

        # DO tile (lane-dense, multiple of 128).
        if w_resident:
            tn, do_pad = do_128, do_128
        else:
            tn = _largest_divisor_tile(do_128, 128, max(dtn, 128))
            if tn >= max(min(dtn, do_128) // 2, 128):
                do_pad = do_128
            else:
                tn = _round_up(min(dtn, do_128), 128)
                do_pad = _round_up(DO, tn)

        # True VMEM footprint: buffer factor applied exactly once. W/bias and
        # gamma/beta are counted at 2 buffers so the estimate also covers the
        # non-single-buffered fallback path.
        fp = (2 * rt * D * x_isz          # x tile, double-buffered
              + 2 * rt * tn * o_isz       # out tile, double-buffered
              + 2 * D * tn * w_isz        # W tile
              + 2 * tn * w_isz            # bias tile
              + 4 * D * p_isz             # gamma + beta
              + rt * D * w_isz)           # y scratch (single)
        return rt, rows_pad, tn, do_pad, fp

    rt, rows_pad, tn, do_pad, fp = pick_tiles(desired_rt, desired_tn)
    while fp > budget and (desired_rt > sub or desired_tn > 128):
        if desired_rt > sub and (desired_rt >= desired_tn or desired_tn <= 128):
            desired_rt = max(sub, desired_rt // 2)
        elif desired_tn > 128:
            desired_tn = max(128, desired_tn // 2)
        rt, rows_pad, tn, do_pad, fp = pick_tiles(desired_rt, desired_tn)

    vmem_limit = int(min(max(fp + (4 << 20), 32 << 20), budget))

    # Wrapper-side padding (minimized).
    x2 = x.reshape(rows, D)
    if rows_pad != rows:
        x2 = jnp.pad(x2, ((0, rows_pad - rows), (0, 0)))
    w_p = w if do_pad == DO else jnp.pad(w, ((0, 0), (0, do_pad - DO)))
    b_p = b if do_pad == DO else jnp.pad(b, ((0, do_pad - DO),))

    gamma2 = gamma.reshape(1, D)
    beta2 = beta.reshape(1, D)
    b2 = b_p.reshape(1, do_pad)

    n_i, n_j = rows_pad // rt, do_pad // tn
    grid = (n_i, n_j)

    def run(single_buffer):
        def spec(shape, index_map, constant):
            # Single-buffer operands whose block index never changes.
            if constant and single_buffer:
                return pl.BlockSpec(shape, index_map, pipeline_mode=pl.Buffered(1))
            return pl.BlockSpec(shape, index_map)

        return pl.pallas_call(
            prenorm_linear_kernel,
            out_shape=jax.ShapeDtypeStruct((rows_pad, do_pad), out_dtype),
            grid_spec=pltpu.PrefetchScalarGridSpec(
                num_scalar_prefetch=0,
                grid=grid,
                in_specs=[
                    pl.BlockSpec((rt, D), lambda i, j: (i, 0)),        # x rows tile
                    spec((1, D), lambda i, j: (0, 0), True),           # gamma
                    spec((1, D), lambda i, j: (0, 0), True),           # beta
                    spec((D, tn), lambda i, j: (0, j), n_j == 1),      # W
                    spec((1, tn), lambda i, j: (0, j), n_j == 1),      # bias
                ],
                out_specs=pl.BlockSpec((rt, tn), lambda i, j: (i, j)),
                scratch_shapes=[pltpu.VMEM((rt, D), w.dtype)],         # LN result
            ),
            compiler_params=pltpu.CompilerParams(
                # rows: megacore-parallel; DO: sequential innermost so the LN
                # scratch is computed once per row tile and reused for all j.
                dimension_semantics=("parallel", "arbitrary"),
                vmem_limit_bytes=vmem_limit),
        )(x2, gamma2, beta2, w_p, b2)

    try:
        out2 = run(single_buffer=True)
    except Exception:
        # pl.Buffered(1) single-buffering unsupported on this build; identical
        # semantics with default double-buffering.
        out2 = run(single_buffer=False)

    return out2[:rows, :DO].reshape(B, S, DO)


def prenorm_reference(x, gamma, beta, w, b):
    xf = x.astype(jnp.float32)
    mean = jnp.mean(xf, axis=-1, keepdims=True)
    var = jnp.mean((xf - mean) ** 2, axis=-1, keepdims=True)
    xhat = (xf - mean) / jnp.sqrt(var + LN_EPS)
    y = xhat * gamma.astype(jnp.float32) + beta.astype(jnp.float32)
    out = y @ w.astype(jnp.float32) + b.astype(jnp.float32)
    return out.astype(x.dtype)


if __name__ == "__main__":
    key = jax.random.PRNGKey(0)
    kx, kw, kb, kg, kbt, kx2 = jax.random.split(key, 6)

    # --- f32 test: row padding (300 -> sublane multiple) and DO padding (320 -> 384),
    #     resident-W path ---
    B, S, D, DO = 2, 150, 256, 320
    x = jax.random.normal(kx, (B, S, D), dtype=jnp.float32)
    gamma = 1.0 + 0.1 * jax.random.normal(kg, (D,), dtype=jnp.float32)
    beta = 0.05 * jax.random.normal(kbt, (D,), dtype=jnp.float32)
    w = jax.random.normal(kw, (D, DO), dtype=jnp.float32) * (1.0 / jnp.sqrt(D))
    b = 0.1 * jax.random.normal(kb, (DO,), dtype=jnp.float32)

    ref = prenorm_reference(x, gamma, beta, w, b)

    out = jax.block_until_ready(prenorm_linear(x, gamma, beta, w, b))
    assert out.shape == (B, S, DO)
    assert jnp.allclose(out, ref, atol=2e-3, rtol=2e-3), "f32 mismatch vs reference"

    # --- same f32 problem with forced small tiles: exercises a multi-tile DO
    #     axis (LayerNorm scratch reuse across j > 0) and the row-pad fallback ---
    out_t = jax.block_until_ready(
        prenorm_linear(x, gamma, beta, w, b, row_tile=64, n_tile=128))
    assert out_t.shape == (B, S, DO)
    assert jnp.allclose(out_t, ref, atol=2e-3, rtol=2e-3), "tiled f32 mismatch vs reference"

    # --- bf16 test: bf16 MXU matmul path with f32 accumulation ---
    Bb, Sb, Db, DOb = 2, 64, 256, 256
    xb = jax.random.normal(kx2, (Bb, Sb, Db), dtype=jnp.float32).astype(jnp.bfloat16)
    gb = jnp.ones((Db,), dtype=jnp.bfloat16)
    btb = jnp.zeros((Db,), dtype=jnp.bfloat16)
    wb = (jax.random.normal(kw, (Db, DOb), dtype=jnp.float32)
          * (1.0 / jnp.sqrt(Db))).astype(jnp.bfloat16)
    bib = jnp.zeros((DOb,), dtype=jnp.bfloat16)

    outb = jax.block_until_ready(prenorm_linear(xb, gb, btb, wb, bib))
    refb = prenorm_reference(xb, gb, btb, wb, bib)
    assert outb.shape == (Bb, Sb, DOb)
    assert jnp.allclose(outb.astype(jnp.float32), refb.astype(jnp.float32),
                        atol=7.5e-2, rtol=7.5e-2), "bf16 mismatch vs reference"

    print("KERNEL_OK")
</pallas_src>

<mosaic_0001>
module attributes {stable_mosaic.version = 11 : i64} {
  func.func @prenorm_linear_kernel(%arg0: i32, %arg1: i32, %arg2: memref<152x256xf32, #tpu.memory_space<vmem>>, %arg3: memref<1x256xf32, #tpu.memory_space<vmem>>, %arg4: memref<1x256xf32, #tpu.memory_space<vmem>>, %arg5: memref<256x384xf32, #tpu.memory_space<vmem>>, %arg6: memref<1x384xf32, #tpu.memory_space<vmem>>, %arg7: memref<152x384xf32, #tpu.memory_space<vmem>>, %arg8: memref<152x256xf32, #tpu.memory_space<vmem>>) attributes {dimension_semantics = [#tpu.dimension_semantics<parallel>, #tpu.dimension_semantics<arbitrary>], iteration_bounds = array<i64: 2, 1>, scalar_prefetch = 0 : i64, scratch_operands = 1 : i64, tpu.core_type = #tpu.core_type<tc>, window_params = [{transform_indices = @transform_0, window_bounds = array<i64: 152, 256>}, {pipeline_mode = #tpu.pipeline_mode<synchronous>, transform_indices = @transform_1, window_bounds = array<i64: 1, 256>}, {pipeline_mode = #tpu.pipeline_mode<synchronous>, transform_indices = @transform_2, window_bounds = array<i64: 1, 256>}, {pipeline_mode = #tpu.pipeline_mode<synchronous>, transform_indices = @transform_3, window_bounds = array<i64: 256, 384>}, {pipeline_mode = #tpu.pipeline_mode<synchronous>, transform_indices = @transform_4, window_bounds = array<i64: 1, 384>}, {transform_indices = @transform_5, window_bounds = array<i64: 152, 384>}]} {
    %c0_i32 = arith.constant 0 : i32
    %0 = arith.cmpi eq, %arg1, %c0_i32 : i32
    %1 = arith.extui %0 : i1 to i32
    %c0_i32_0 = arith.constant 0 : i32
    %2 = arith.cmpi ne, %1, %c0_i32_0 : i32
    scf.if %2 {
      %c0_8 = arith.constant 0 : index
      %c0_9 = arith.constant 0 : index
      %10 = vector.load %arg2[%c0_8, %c0_9] : memref<152x256xf32, #tpu.memory_space<vmem>>, vector<152x256xf32>
      %cst_10 = arith.constant dense<0.000000e+00> : vector<152xf32>
      %11 = vector.multi_reduction <add>, %10, %cst_10 [1] : vector<152x256xf32> to vector<152xf32>
      %12 = vector.shape_cast %11 : vector<152xf32> to vector<152x1xf32>
      %cst_11 = arith.constant 3.906250e-03 : f32
      %13 = vector.broadcast %cst_11 : f32 to vector<152x1xf32>
      %14 = arith.mulf %12, %13 : vector<152x1xf32>
      %15 = vector.broadcast %14 : vector<152x1xf32> to vector<152x256xf32>
      %16 = arith.subf %10, %15 : vector<152x256xf32>
      %17 = arith.mulf %16, %16 : vector<152x256xf32>
      %cst_12 = arith.constant dense<0.000000e+00> : vector<152xf32>
      %18 = vector.multi_reduction <add>, %17, %cst_12 [1] : vector<152x256xf32> to vector<152xf32>
      %19 = vector.shape_cast %18 : vector<152xf32> to vector<152x1xf32>
      %cst_13 = arith.constant 3.906250e-03 : f32
      %20 = vector.broadcast %cst_13 : f32 to vector<152x1xf32>
      %21 = arith.mulf %19, %20 : vector<152x1xf32>
      %cst_14 = arith.constant 9.99999974E-6 : f32
      %22 = vector.broadcast %cst_14 : f32 to vector<152x1xf32>
      %23 = arith.addf %21, %22 : vector<152x1xf32>
      %24 = math.rsqrt %23 : vector<152x1xf32>
      %25 = vector.broadcast %24 : vector<152x1xf32> to vector<152x256xf32>
      %26 = arith.mulf %16, %25 : vector<152x256xf32>
      %c0_15 = arith.constant 0 : index
      %c0_16 = arith.constant 0 : index
      %27 = vector.load %arg3[%c0_15, %c0_16] : memref<1x256xf32, #tpu.memory_space<vmem>>, vector<1x256xf32>
      %28 = vector.broadcast %27 : vector<1x256xf32> to vector<152x256xf32>
      %29 = arith.mulf %26, %28 : vector<152x256xf32>
      %c0_17 = arith.constant 0 : index
      %c0_18 = arith.constant 0 : index
      %30 = vector.load %arg4[%c0_17, %c0_18] : memref<1x256xf32, #tpu.memory_space<vmem>>, vector<1x256xf32>
      %31 = vector.broadcast %30 : vector<1x256xf32> to vector<152x256xf32>
      %32 = arith.addf %29, %31 : vector<152x256xf32>
      %c0_19 = arith.constant 0 : index
      %c0_20 = arith.constant 0 : index
      %33 = vector.load %arg8[%c0_19, %c0_20] : memref<152x256xf32, #tpu.memory_space<vmem>>, vector<152x256xf32>
      tpu.vector_store %arg8[%c0_19, %c0_20], %32 {strides = array<i32>} : memref<152x256xf32, #tpu.memory_space<vmem>>, vector<152x256xf32>,
    } else {
    }
    %c0 = arith.constant 0 : index
    %c0_1 = arith.constant 0 : index
    %3 = vector.load %arg8[%c0, %c0_1] : memref<152x256xf32, #tpu.memory_space<vmem>>, vector<152x256xf32>
    %c0_2 = arith.constant 0 : index
    %c0_3 = arith.constant 0 : index
    %4 = vector.load %arg5[%c0_2, %c0_3] : memref<256x384xf32, #tpu.memory_space<vmem>>, vector<256x384xf32>
    %cst = arith.constant dense<0.000000e+00> : vector<152x384xf32>
    %5 = tpu.matmul %3, %4, %cst {dimension_numbers = #tpu.dot_dimension_numbers<[1], [0], [0], [1], [0, 0, 1, 1], [], []>} : vector<152x256xf32>, vector<256x384xf32>, vector<152x384xf32> -> vector<152x384xf32>
    %c0_4 = arith.constant 0 : index
    %c0_5 = arith.constant 0 : index
    %6 = vector.load %arg6[%c0_4, %c0_5] : memref<1x384xf32, #tpu.memory_space<vmem>>, vector<1x384xf32>
    %7 = vector.broadcast %6 : vector<1x384xf32> to vector<152x384xf32>
    %8 = arith.addf %5, %7 : vector<152x384xf32>
    %c0_6 = arith.constant 0 : index
    %c0_7 = arith.constant 0 : index
    %9 = vector.load %arg7[%c0_6, %c0_7] : memref<152x384xf32, #tpu.memory_space<vmem>>, vector<152x384xf32>
    tpu.vector_store %arg7[%c0_6, %c0_7], %8 {strides = array<i32>} : memref<152x384xf32, #tpu.memory_space<vmem>>, vector<152x384xf32>,
    return
  }
  func.func @transform_0(%arg0: i32, %arg1: i32) -> (i32, i32) {
    %c0_i32 = arith.constant 0 : i32
    %c0_i32_0 = arith.constant 0 : i32
    return %arg0, %c0_i32 : i32, i32
  }
  func.func @transform_1(%arg0: i32, %arg1: i32) -> (i32, i32) {
    %c0_i32 = arith.constant 0 : i32
    %c0_i32_0 = arith.constant 0 : i32
    %c0_i32_1 = arith.constant 0 : i32
    return %c0_i32, %c0_i32_0 : i32, i32
  }
  func.func @transform_2(%arg0: i32, %arg1: i32) -> (i32, i32) {
    %c0_i32 = arith.constant 0 : i32
    %c0_i32_0 = arith.constant 0 : i32
    %c0_i32_1 = arith.constant 0 : i32
    return %c0_i32, %c0_i32_0 : i32, i32
  }
  func.func @transform_3(%arg0: i32, %arg1: i32) -> (i32, i32) {
    %c0_i32 = arith.constant 0 : i32
    %c0_i32_0 = arith.constant 0 : i32
    return %c0_i32, %arg1 : i32, i32
  }
  func.func @transform_4(%arg0: i32, %arg1: i32) -> (i32, i32) {
    %c0_i32 = arith.constant 0 : i32
    %c0_i32_0 = arith.constant 0 : i32
    return %c0_i32, %arg1 : i32, i32
  }
  func.func @transform_5(%arg0: i32, %arg1: i32) -> (i32, i32) {
    %c0_i32 = arith.constant 0 : i32
    return %arg0, %arg1 : i32, i32
  }
}

module attributes {stable_mosaic.version = 11 : i64} {
  func.func @prenorm_linear_kernel(%arg0: i32, %arg1: i32, %arg2: memref<152x256xf32, #tpu.memory_space<vmem>>, %arg3: memref<1x256xf32, #tpu.memory_space<vmem>>, %arg4: memref<1x256xf32, #tpu.memory_space<vmem>>, %arg5: memref<256x384xf32, #tpu.memory_space<vmem>>, %arg6: memref<1x384xf32, #tpu.memory_space<vmem>>, %arg7: memref<152x384xf32, #tpu.memory_space<vmem>>, %arg8: memref<152x256xf32, #tpu.memory_space<vmem>>) attributes {dimension_semantics = [#tpu.dimension_semantics<parallel>, #tpu.dimension_semantics<arbitrary>], iteration_bounds = array<i64: 2, 1>, scalar_prefetch = 0 : i64, scratch_operands = 1 : i64, tpu.core_type = #tpu.core_type<tc>, window_params = [{transform_indices = @transform_0, window_bounds = array<i64: 152, 256>}, {pipeline_mode = #tpu.pipeline_mode<synchronous>, transform_indices = @transform_1, window_bounds = array<i64: 1, 256>}, {pipeline_mode = #tpu.pipeline_mode<synchronous>, transform_indices = @transform_2, window_bounds = array<i64: 1, 256>}, {transform_indices = @transform_3, window_bounds = array<i64: 256, 384>}, {transform_indices = @transform_4, window_bounds = array<i64: 1, 384>}, {transform_indices = @transform_5, window_bounds = array<i64: 152, 384>}]} {
    %c0_i32 = arith.constant 0 : i32
    %0 = arith.cmpi eq, %arg1, %c0_i32 : i32
    %1 = arith.extui %0 : i1 to i32
    %c0_i32_0 = arith.constant 0 : i32
    %2 = arith.cmpi ne, %1, %c0_i32_0 : i32
    scf.if %2 {
      %c0_8 = arith.constant 0 : index
      %c0_9 = arith.constant 0 : index
      %10 = vector.load %arg2[%c0_8, %c0_9] : memref<152x256xf32, #tpu.memory_space<vmem>>, vector<152x256xf32>
      %cst_10 = arith.constant dense<0.000000e+00> : vector<152xf32>
      %11 = vector.multi_reduction <add>, %10, %cst_10 [1] : vector<152x256xf32> to vector<152xf32>
      %12 = vector.shape_cast %11 : vector<152xf32> to vector<152x1xf32>
      %cst_11 = arith.constant 3.906250e-03 : f32
      %13 = vector.broadcast %cst_11 : f32 to vector<152x1xf32>
      %14 = arith.mulf %12, %13 : vector<152x1xf32>
      %15 = vector.broadcast %14 : vector<152x1xf32> to vector<152x256xf32>
      %16 = arith.subf %10, %15 : vector<152x256xf32>
      %17 = arith.mulf %16, %16 : vector<152x256xf32>
      %cst_12 = arith.constant dense<0.000000e+00> : vector<152xf32>
      %18 = vector.multi_reduction <add>, %17, %cst_12 [1] : vector<152x256xf32> to vector<152xf32>
      %19 = vector.shape_cast %18 : vector<152xf32> to vector<152x1xf32>
      %cst_13 = arith.constant 3.906250e-03 : f32
      %20 = vector.broadcast %cst_13 : f32 to vector<152x1xf32>
      %21 = arith.mulf %19, %20 : vector<152x1xf32>
      %cst_14 = arith.constant 9.99999974E-6 : f32
      %22 = vector.broadcast %cst_14 : f32 to vector<152x1xf32>
      %23 = arith.addf %21, %22 : vector<152x1xf32>
      %24 = math.rsqrt %23 : vector<152x1xf32>
      %25 = vector.broadcast %24 : vector<152x1xf32> to vector<152x256xf32>
      %26 = arith.mulf %16, %25 : vector<152x256xf32>
      %c0_15 = arith.constant 0 : index
      %c0_16 = arith.constant 0 : index
      %27 = vector.load %arg3[%c0_15, %c0_16] : memref<1x256xf32, #tpu.memory_space<vmem>>, vector<1x256xf32>
      %28 = vector.broadcast %27 : vector<1x256xf32> to vector<152x256xf32>
      %29 = arith.mulf %26, %28 : vector<152x256xf32>
      %c0_17 = arith.constant 0 : index
      %c0_18 = arith.constant 0 : index
      %30 = vector.load %arg4[%c0_17, %c0_18] : memref<1x256xf32, #tpu.memory_space<vmem>>, vector<1x256xf32>
      %31 = vector.broadcast %30 : vector<1x256xf32> to vector<152x256xf32>
      %32 = arith.addf %29, %31 : vector<152x256xf32>
      %c0_19 = arith.constant 0 : index
      %c0_20 = arith.constant 0 : index
      %33 = vector.load %arg8[%c0_19, %c0_20] : memref<152x256xf32, #tpu.memory_space<vmem>>, vector<152x256xf32>
      tpu.vector_store %arg8[%c0_19, %c0_20], %32 {strides = array<i32>} : memref<152x256xf32, #tpu.memory_space<vmem>>, vector<152x256xf32>,
    } else {
    }
    %c0 = arith.constant 0 : index
    %c0_1 = arith.constant 0 : index
    %3 = vector.load %arg8[%c0, %c0_1] : memref<152x256xf32, #tpu.memory_space<vmem>>, vector<152x256xf32>
    %c0_2 = arith.constant 0 : index
    %c0_3 = arith.constant 0 : index
    %4 = vector.load %arg5[%c0_2, %c0_3] : memref<256x384xf32, #tpu.memory_space<vmem>>, vector<256x384xf32>
    %cst = arith.constant dense<0.000000e+00> : vector<152x384xf32>
    %5 = tpu.matmul %3, %4, %cst {dimension_numbers = #tpu.dot_dimension_numbers<[1], [0], [0], [1], [0, 0, 1, 1], [], []>} : vector<152x256xf32>, vector<256x384xf32>, vector<152x384xf32> -> vector<152x384xf32>
    %c0_4 = arith.constant 0 : index
    %c0_5 = arith.constant 0 : index
    %6 = vector.load %arg6[%c0_4, %c0_5] : memref<1x384xf32, #tpu.memory_space<vmem>>, vector<1x384xf32>
    %7 = vector.broadcast %6 : vector<1x384xf32> to vector<152x384xf32>
    %8 = arith.addf %5, %7 : vector<152x384xf32>
    %c0_6 = arith.constant 0 : index
    %c0_7 = arith.constant 0 : index
    %9 = vector.load %arg7[%c0_6, %c0_7] : memref<152x384xf32, #tpu.memory_space<vmem>>, vector<152x384xf32>
    tpu.vector_store %arg7[%c0_6, %c0_7], %8 {strides = array<i32>} : memref<152x384xf32, #tpu.memory_space<vmem>>, vector<152x384xf32>,
    return
  }
  func.func @transform_0(%arg0: i32, %arg1: i32) -> (i32, i32) {
    %c0_i32 = arith.constant 0 : i32
    %c0_i32_0 = arith.constant 0 : i32
    return %arg0, %c0_i32 : i32, i32
  }
  func.func @transform_1(%arg0: i32, %arg1: i32) -> (i32, i32) {
    %c0_i32 = arith.constant 0 : i32
    %c0_i32_0 = arith.constant 0 : i32
    %c0_i32_1 = arith.constant 0 : i32
    return %c0_i32, %c0_i32_0 : i32, i32
  }
  func.func @transform_2(%arg0: i32, %arg1: i32) -> (i32, i32) {
    %c0_i32 = arith.constant 0 : i32
    %c0_i32_0 = arith.constant 0 : i32
    %c0_i32_1 = arith.constant 0 : i32
    return %c0_i32, %c0_i32_0 : i32, i32
  }
  func.func @transform_3(%arg0: i32, %arg1: i32) -> (i32, i32) {
    %c0_i32 = arith.constant 0 : i32
    %c0_i32_0 = arith.constant 0 : i32
    return %c0_i32, %arg1 : i32, i32
  }
  func.func @transform_4(%arg0: i32, %arg1: i32) -> (i32, i32) {
    %c0_i32 = arith.constant 0 : i32
    %c0_i32_0 = arith.constant 0 : i32
    return %c0_i32, %arg1 : i32, i32
  }
  func.func @transform_5(%arg0: i32, %arg1: i32) -> (i32, i32) {
    %c0_i32 = arith.constant 0 : i32
    return %arg0, %arg1 : i32, i32
  }
}

</mosaic_0001>

<llo_original>
// kernel: tpu_custom_call.1
$region0: #{tpu_custom_call.1}
  #allocation0 [shape = 'u32[]', space=smem, size = 0x4, offset = 0x4, fixed_abs, tag = 'smem constant byte address 0x4 - core index']
  #allocation1 [shape = 'u32[72,128]{1,0:T(1,128)}', space=vmem, size = 0x9000, scoped, tag = 'internal scratch']
  #allocation2 [shape = 'f32[152,256]{1,0:T(8,128)}', space=vmem, size = 0x26000, scoped, tag = 'scratch operand']
  %s0 = inlined_call_operand.hbm [shape: f32[304,256], index: 0, kind: input, shape index: {}]
  %s1 = inlined_call_operand.hbm [shape: f32[1,256], index: 1, kind: input, shape index: {}]
  %s2 = inlined_call_operand.hbm [shape: f32[1,256], index: 2, kind: input, shape index: {}]
  %s3 = inlined_call_operand.hbm [shape: f32[256,384], index: 3, kind: input, shape index: {}]
  %s4 = inlined_call_operand.vmem [shape: f32[1,384], index: 4, kind: input, shape index: {}]
  %s5 = inlined_call_operand.hbm [shape: f32[304,384], index: 5, kind: output, shape index: {}]
  %s6 = sld [smem:[#allocation0]]
  $region73: #{tpu_custom_call.1} parent=0
    _
  %s8 = ssub.s32 1, %s6
  %s9 = scalar_select 0, %s8, %s6
  $region1: #{tpu_custom_call.1} parent=0
    #allocation3 [shape = 'u8[311296]{0}', space=vmem, size = 0x4c000, scoped, tag = 'input window, operand 0']
    #allocation4 [shape = 's32[2]{0}', space=sflag, size = 0x8, scoped, tag = 'scoped memory for tpu_custom_call.1']
    #allocation5 [shape = 's32[2]{0}', space=sflag, size = 0x8, scoped, tag = 'scoped memory for tpu_custom_call.1']
    #allocation6 [shape = 'u8[1024]{0}', space=vmem, size = 0x400, scoped, tag = 'input window, operand 1, single buffered']
    #allocation7 [shape = 's32[1]{0}', space=sflag, size = 0x4, scoped, tag = 'scoped memory for tpu_custom_call.1']
    #allocation8 [shape = 'u8[1024]{0}', space=vmem, size = 0x400, scoped, tag = 'input window, operand 2, single buffered']
    #allocation9 [shape = 'u8[393216]{0}', space=vmem, size = 0x60000, scoped, tag = 'input window, operand 3, single buffered']
    #allocation10 [shape = 's32[1]{0}', space=sflag, size = 0x4, scoped, tag = 'scoped memory for tpu_custom_call.1']
    #allocation11 [shape = 'u8[466944]{0}', space=vmem, size = 0x72000, scoped, tag = 'output window, operand 0']
    %10 = vsyncpa [#allocation4], 0
    %s11 = scalar_lea.sflag [#allocation4], 1
    %12 = vsyncpa %s11, 0
    %13 = vsyncpa [#allocation7], 0
    %14 = vsyncpa [#allocation10], 0
    %15 = vsyncpa [#allocation5], 0
    %s16 = scalar_lea.sflag [#allocation5], 1
    %17 = vsyncpa %s16, 0
    loop: start=0, step=1, limit=4
    $region2: #{tpu_custom_call.1} parent=1 // loop_pre_header
      _
    $region3: #{tpu_custom_call.1} parent=1 // loop_header
      %s19 = sphi 0, %s23
      %p20 = scmp.ge.s32.totalorder %s19, 4
      %s26 = sphi 0, %s38
      %s27 = sphi 0, %s34
      %s28 = sphi 0, %s26
      %s29 = sphi 0, %s27
      %s30 = sphi 0, %s28
      %s31 = sphi 0, %s29
      %s41 = sphi 0, %s43
      %s44 = sphi 0, %s41
      %s45 = sphi 0, %s44
      %s61 = sphi 0, %s45
      %s65 = sphi 0, %s65
      %s67 = sphi 0, %s65
      %s68 = sphi 0, %s67
      %s82 = sphi 0, %s68
      %s86 = sphi 0, %s86
      %s88 = sphi 0, %s86
      %s89 = sphi 0, %s88
      %s103 = sphi 0, %s89
      %s109 = sphi 0, %s111
      %s112 = sphi 0, %s109
      %s113 = sphi 0, %s112
      %s129 = sphi 0, %s113
      %s135 = sphi 0, %s137
      %s138 = sphi 0, %s135
      %s139 = sphi 0, %s138
      %s155 = sphi 0, %s139
      %s163 = sphi 0, %s165
      %s166 = sphi 0, %s163
      %s167 = sphi 0, %s166
      %s183 = sphi 0, %s167
    $region4: #{tpu_custom_call.1} parent=1 // loop_header_branch
      %22 = sbr.rel (%p20) target = $region8
    $region5: #{tpu_custom_call.1} parent=1 // loop_body
      %s24 = ssub.s32 %s19, 1
      %s25 = ssub.s32 %s19, 2
      %s32 = sadd.s32 1, %s27
      %p33 = scmp.ge.s32.totalorder %s32, 1
      %s34 = scalar_select %p33, 0, %s32
      %s35 = sadd.s32 1, %s26
      %s36 = scalar_select %p33, %s35, %s26
      %p37 = scmp.ge.s32.totalorder %s36, 2
      %s38 = scalar_select %p37, 0, %s36
      %s39 = ssub.s32 %s26, %s38
      %p40 = scmp.eq.s32.totalorder %s39, 0
      %s42 = sadd.s32 %s41, 1
      %s43 = scalar_select %p40, %s41, %s42
      %p46 = pneg %p40
      %p47 = scmp.eq.s32.totalorder %s19, 1
      %p48 = por %p46, %p47
      %p49 = scmp.ne.s32.totalorder %s41, %s44
      %p50 = scmp.eq.s32.totalorder %s19, 0
      %p51 = por %p49, %p50
      %p52 = scmp.ne.s32.totalorder %s41, %s44
      %p53 = scmp.eq.s32.totalorder %s24, 1
      %p54 = por %p52, %p53
      %p55 = scmp.ne.s32.totalorder %s44, %s45
      %p56 = scmp.eq.s32.totalorder %s24, 0
      %p57 = por %p55, %p56
      %p58 = scmp.ne.s32.totalorder %s44, %s45
      %p59 = scmp.eq.s32.totalorder %s25, 1
      %p60 = por %p58, %p59
      %p62 = scmp.ne.s32.totalorder %s45, %s61
      %p63 = scmp.eq.s32.totalorder %s25, 0
      %p64 = por %p62, %p63
      %s66 = sadd.s32 %s65, 1
      %p69 = scmp.eq.s32.totalorder %s19, 1
      %p70 = scmp.ne.s32.totalorder %s65, %s67
      %p71 = scmp.eq.s32.totalorder %s19, 0
      %p72 = por %p70, %p71
      %p73 = scmp.ne.s32.totalorder %s65, %s67
      %p74 = scmp.eq.s32.totalorder %s24, 1
      %p75 = por %p73, %p74
      %p76 = scmp.ne.s32.totalorder %s67, %s68
      %p77 = scmp.eq.s32.totalorder %s24, 0
      %p78 = por %p76, %p77
      %p79 = scmp.ne.s32.totalorder %s67, %s68
      %p80 = scmp.eq.s32.totalorder %s25, 1
      %p81 = por %p79, %p80
      %p83 = scmp.ne.s32.totalorder %s68, %s82
      %p84 = scmp.eq.s32.totalorder %s25, 0
      %p85 = por %p83, %p84
      %s87 = sadd.s32 %s86, 1
      %p90 = scmp.eq.s32.totalorder %s19, 1
      %p91 = scmp.ne.s32.totalorder %s86, %s88
      %p92 = scmp.eq.s32.totalorder %s19, 0
      %p93 = por %p91, %p92
      %p94 = scmp.ne.s32.totalorder %s86, %s88
      %p95 = scmp.eq.s32.totalorder %s24, 1
      %p96 = por %p94, %p95
      %p97 = scmp.ne.s32.totalorder %s88, %s89
      %p98 = scmp.eq.s32.totalorder %s24, 0
      %p99 = por %p97, %p98
      %p100 = scmp.ne.s32.totalorder %s88, %s89
      %p101 = scmp.eq.s32.totalorder %s25, 1
      %p102 = por %p100, %p101
      %p104 = scmp.ne.s32.totalorder %s89, %s103
      %p105 = scmp.eq.s32.totalorder %s25, 0
      %p106 = por %p104, %p105
      %s107 = ssub.s32 %s27, %s34
      %p108 = scmp.eq.s32.totalorder %s107, 0
      %s110 = sadd.s32 %s109, 1
      %s111 = scalar_select %p108, %s109, %s110
      %p114 = pneg %p108
      %p115 = scmp.eq.s32.totalorder %s19, 1
      %p116 = por %p114, %p115
      %p117 = scmp.ne.s32.totalorder %s109, %s112
      %p118 = scmp.eq.s32.totalorder %s19, 0
      %p119 = por %p117, %p118
      %p120 = scmp.ne.s32.totalorder %s109, %s112
      %p121 = scmp.eq.s32.totalorder %s24, 1
      %p122 = por %p120, %p121
      %p123 = scmp.ne.s32.totalorder %s112, %s113
      %p124 = scmp.eq.s32.totalorder %s24, 0
      %p125 = por %p123, %p124
      %p126 = scmp.ne.s32.totalorder %s112, %s113
      %p127 = scmp.eq.s32.totalorder %s25, 1
      %p128 = por %p126, %p127
      %p130 = scmp.ne.s32.totalorder %s113, %s129
      %p131 = scmp.eq.s32.totalorder %s25, 0
      %p132 = por %p130, %p131
      %s133 = ssub.s32 %s27, %s34
      %p134 = scmp.eq.s32.totalorder %s133, 0
      %s136 = sadd.s32 %s135, 1
      %s137 = scalar_select %p134, %s135, %s136
      %p140 = pneg %p134
      %p141 = scmp.eq.s32.totalorder %s19, 1
      %p142 = por %p140, %p141
      %p143 = scmp.ne.s32.totalorder %s135, %s138
      %p144 = scmp.eq.s32.totalorder %s19, 0
      %p145 = por %p143, %p144
      %p146 = scmp.ne.s32.totalorder %s135, %s138
      %p147 = scmp.eq.s32.totalorder %s24, 1
      %p148 = por %p146, %p147
      %p149 = scmp.ne.s32.totalorder %s138, %s139
      %p150 = scmp.eq.s32.totalorder %s24, 0
      %p151 = por %p149, %p150
      %p152 = scmp.ne.s32.totalorder %s138, %s139
      %p153 = scmp.eq.s32.totalorder %s25, 1
      %p154 = por %p152, %p153
      %p156 = scmp.ne.s32.totalorder %s139, %s155
      %p157 = scmp.eq.s32.totalorder %s25, 0
      %p158 = por %p156, %p157
      %s159 = ssub.s32 %s26, %s38
      %s160 = ssub.s32 %s27, %s34
      %s161 = sor.u32 %s159, %s160
      %p162 = scmp.eq.s32.totalorder %s161, 0
      %s164 = sadd.s32 %s163, 1
      %s165 = scalar_select %p162, %s163, %s164
      %p168 = pneg %p162
      %p169 = scmp.eq.s32.totalorder %s19, 1
      %p170 = por %p168, %p169
      %p171 = scmp.ne.s32.totalorder %s163, %s166
      %p172 = scmp.eq.s32.totalorder %s19, 0
      %p173 = por %p171, %p172
      %p174 = scmp.ne.s32.totalorder %s163, %s166
      %p175 = scmp.eq.s32.totalorder %s24, 1
      %p176 = por %p174, %p175
      %p177 = scmp.ne.s32.totalorder %s166, %s167
      %p178 = scmp.eq.s32.totalorder %s24, 0
      %p179 = por %p177, %p178
      %p180 = scmp.ne.s32.totalorder %s166, %s167
      %p181 = scmp.eq.s32.totalorder %s25, 1
      %p182 = por %p180, %p181
      %p184 = scmp.ne.s32.totalorder %s167, %s183
      %p185 = scmp.eq.s32.totalorder %s25, 0
      %p186 = por %p184, %p185
      %p187 = scmp.le.s32.totalorder 1, %s19
      %p188 = scmp.lt.s32.totalorder %s19, 3
      %p189 = pnand %p187, %p188
      %p190 = pneg %p189
      // Predicated region
      $region9: #{tpu_custom_call.1} parent=5 // pred_check
        _
      $region10: #{tpu_custom_call.1} parent=5 // pred_check_branch
        %192 = sbr.rel (%p189) target = $region12
      $region11: #{tpu_custom_call.1} parent=5 // pred_region
        %s193 = ssub.s32 %s19, 1
        // Predicated region
        $region13: #{tpu_custom_call.1} parent=11 // pred_check
          %p194 = pneg %p78
        $region14: #{tpu_custom_call.1} parent=11 // pred_check_branch
          %196 = sbr.rel (%p194) target = $region16
        $region15: #{tpu_custom_call.1} parent=11 // pred_region
          %198 = vsyncadd [#allocation7], 0
          %s200 = sshll.u32 %s1, 4
          %s201 = int_to_ptr.hbm [resolvable:$true] %s200
          %s202 = sshll.u32 [#allocation6], 4
          %s203 = int_to_ptr.vmem [resolvable:$true] %s202
          %205 = dma.hbm_to_vmem [thread:$0]  %s201, 32, %s203, [#allocation7]
        $region16: #{tpu_custom_call.1} parent=11 // pred_fallthru
          _
        // Predicated region
        $region17: #{tpu_custom_call.1} parent=11 // pred_check
          %p206 = pneg %p99
        $region18: #{tpu_custom_call.1} parent=11 // pred_check_branch
          %208 = sbr.rel (%p206) target = $region20
        $region19: #{tpu_custom_call.1} parent=11 // pred_region
          %210 = vsyncadd [#allocation7], 0
          %s212 = sshll.u32 %s2, 4
          %s213 = int_to_ptr.hbm [resolvable:$true] %s212
          %s214 = sshll.u32 [#allocation8], 4
          %s215 = int_to_ptr.vmem [resolvable:$true] %s214
          %217 = dma.hbm_to_vmem [thread:$0]  %s213, 32, %s215, [#allocation7]
        $region20: #{tpu_custom_call.1} parent=11 // pred_fallthru
          _
        // Predicated region
        $region21: #{tpu_custom_call.1} parent=11 // pred_check
          %p218 = pneg %p125
        $region22: #{tpu_custom_call.1} parent=11 // pred_check_branch
          %220 = sbr.rel (%p218) target = $region24
        $region23: #{tpu_custom_call.1} parent=11 // pred_region
          %s221 = smul.u32 3, %s29
          %223 = vsyncadd [#allocation10], 0
          %s224 = smul.addr %s221, 8
          %s225 = scalar_lea.hbm %s3, %s224
          %s226 = sshll.u32 %s225, 4
          %s227 = int_to_ptr.hbm [resolvable:$true] %s226
          %s228 = sshll.u32 [#allocation9], 4
          %s229 = int_to_ptr.vmem [resolvable:$true] %s228
          %234 = dma.hbm_to_vmem [thread:$0]  %s227, 12288, %s229, [#allocation10], 384, 384, 24
        $region24: #{tpu_custom_call.1} parent=11 // pred_fallthru
          _
        // Predicated region
        $region25: #{tpu_custom_call.1} parent=11 // pred_check
          %p235 = pneg %p151
        $region26: #{tpu_custom_call.1} parent=11 // pred_check_branch
          %237 = sbr.rel (%p235) target = $region28
        $region27: #{tpu_custom_call.1} parent=11 // pred_region
          %s238 = smul.u32 3, %s29
          %p239 = scmp.lt.s32.totalorder %s238, 2
          %s240 = scalar_select %p239, %s238, 2
          %s241 = scalar_lea.vmem %s4, %s240
          %s242 = smul.u32 3, %s29
        $region28: #{tpu_custom_call.1} parent=11 // pred_fallthru
          _
      $region12: #{tpu_custom_call.1} parent=5 // pred_fallthru
        _
      %p243 = scmp.lt.s32.totalorder %s19, 2
      // Predicated region
      $region29: #{tpu_custom_call.1} parent=5 // pred_check
        %p244 = pneg %p243
      $region30: #{tpu_custom_call.1} parent=5 // pred_check_branch
        %246 = sbr.rel (%p244) target = $region32
      $region31: #{tpu_custom_call.1} parent=5 // pred_region
        // Predicated region
        $region33: #{tpu_custom_call.1} parent=31 // pred_check
          %p247 = pneg %p51
        $region34: #{tpu_custom_call.1} parent=31 // pred_check_branch
          %249 = sbr.rel (%p247) target = $region36
        $region35: #{tpu_custom_call.1} parent=31 // pred_region
          %s250 = sand.u32 %s41, 1
          %s251 = scalar_lea.sflag [#allocation4], %s250
          %s252 = sand.u32 %s41, 1
          %s253 = smul.addr %s252, 304
          %s254 = scalar_lea.vmem [#allocation3], %s253
          %s255 = smul.u32 19, %s26
          %257 = vsyncadd %s251, 0
          %s258 = smul.addr %s255, 2
          %s259 = smul.addr %s258, 8
          %s260 = scalar_lea.hbm %s0, %s259
          %s261 = sshll.u32 %s260, 4
          %s262 = int_to_ptr.hbm [resolvable:$true] %s261
          %s263 = sshll.u32 %s254, 4
          %s264 = int_to_ptr.vmem [resolvable:$true] %s263
          %269 = dma.hbm_to_vmem [thread:$0]  %s262, 4864, %s264, %s251, 256, 256, 16
        $region36: #{tpu_custom_call.1} parent=31 // pred_fallthru
          _
      $region32: #{tpu_custom_call.1} parent=5 // pred_fallthru
        _
      %p270 = scmp.le.s32.totalorder 1, %s19
      %p271 = scmp.lt.s32.totalorder %s19, 3
      %p272 = pnand %p270, %p271
      %p273 = pneg %p272
      // Predicated region
      $region37: #{tpu_custom_call.1} parent=5 // pred_check
        _
      $region38: #{tpu_custom_call.1} parent=5 // pred_check_branch
        %275 = sbr.rel (%p272) target = $region40
      $region39: #{tpu_custom_call.1} parent=5 // pred_region
        %s276 = ssub.s32 %s19, 1
        %s277 = sand.u32 %s44, 1
        %s278 = scalar_lea.sflag [#allocation4], %s277
        %s279 = sand.u32 %s44, 1
        %s280 = smul.addr %s279, 304
        %s281 = scalar_lea.vmem [#allocation3], %s280
        // Predicated region
        $region41: #{tpu_custom_call.1} parent=39 // pred_check
          %p282 = pneg %p57
        $region42: #{tpu_custom_call.1} parent=39 // pred_check_branch
          %284 = sbr.rel (%p282) target = $region44
        $region43: #{tpu_custom_call.1} parent=39 // pred_region
          %286 = dma.done %s278, 4864
        $region44: #{tpu_custom_call.1} parent=39 // pred_fallthru
          _
        // Predicated region
        $region45: #{tpu_custom_call.1} parent=39 // pred_check
          %p287 = pneg %p78
        $region46: #{tpu_custom_call.1} parent=39 // pred_check_branch
          %289 = sbr.rel (%p287) target = $region48
        $region47: #{tpu_custom_call.1} parent=39 // pred_region
          %291 = dma.done [#allocation7], 32
        $region48: #{tpu_custom_call.1} parent=39 // pred_fallthru
          _
        // Predicated region
        $region49: #{tpu_custom_call.1} parent=39 // pred_check
          %p292 = pneg %p99
        $region50: #{tpu_custom_call.1} parent=39 // pred_check_branch
          %294 = sbr.rel (%p292) target = $region52
        $region51: #{tpu_custom_call.1} parent=39 // pred_region
          %296 = dma.done [#allocation7], 32
        $region52: #{tpu_custom_call.1} parent=39 // pred_fallthru
          _
        // Predicated region
        $region53: #{tpu_custom_call.1} parent=39 // pred_check
          %p297 = pneg %p125
        $region54: #{tpu_custom_call.1} parent=39 // pred_check_branch
          %299 = sbr.rel (%p297) target = $region56
        $region55: #{tpu_custom_call.1} parent=39 // pred_region
          %301 = dma.done [#allocation10], 12288
        $region56: #{tpu_custom_call.1} parent=39 // pred_fallthru
          _
        %s302 = sand.u32 %s44, 1
        %s303 = scalar_lea.sflag [#allocation4], %s302
        %s304 = sand.u32 %s44, 1
        %s305 = smul.addr %s304, 304
        %s306 = scalar_lea.vmem [#allocation3], %s305
        %p307 = pneg %p57
        %p308 = pneg %p54
        %p309 = pneg %p78
        %p310 = pneg %p75
        %p311 = pneg %p99
        %p312 = pneg %p96
        %p313 = pneg %p125
        %p314 = pneg %p122
        %s315 = smul.u32 3, %s29
        %p316 = scmp.lt.s32.totalorder %s315, 2
        %s317 = scalar_select %p316, %s315, 2
        %s318 = scalar_lea.vmem %s4, %s317
        %p319 = pneg %p151
        %p320 = pneg %p148
        %p321 = pneg %p179
        %p322 = pneg %p176
        %s323 = sand.u32 %s166, 1
        %s324 = scalar_lea.sflag [#allocation5], %s323
        %s325 = sand.u32 %s166, 1
        %s326 = smul.addr %s325, 456
        %s327 = scalar_lea.vmem [#allocation11], %s326
        %s328 = smul.u32 19, %s28
        %s329 = smul.u32 3, %s29
        %s330 = smul.u32 3, %s29
        %p331 = scmp.lt.s32.totalorder %s330, 2
        %s332 = scalar_select %p331, %s330, 2
        %s333 = scalar_lea.vmem %s4, %s332
        %s334 = smul.u32 3, %s29
        %s335 = smul.u32 19, %s28
        %s336 = smul.u32 3, %s29
        %p337 = scmp.eq.s32.totalorder %s29, 0
        // Predicated region
        $region57: #{tpu_custom_call.1} parent=39 // pred_check
          %p338 = pneg %p337
        $region58: #{tpu_custom_call.1} parent=39 // pred_check_branch
          %340 = sbr.rel (%p338) target = $region60
        $region59: #{tpu_custom_call.1} parent=39 // pred_region
          %v341 = vld [vmem:[%s281] sm:$0xff]
          %v342 = vld [vmem:[%s281 + $0x8] sm:$0xff]
          %v343 = vld [vmem:[%s281 + $0x10] sm:$0xff]
          %v344 = vld [vmem:[%s281 + $0x18] sm:$0xff]
          %v345 = vld [vmem:[%s281 + $0x20] sm:$0xff]
          %v346 = vld [vmem:[%s281 + $0x28] sm:$0xff]
          %v347 = vld [vmem:[%s281 + $0x30] sm:$0xff]
          %v348 = vld [vmem:[%s281 + $0x38] sm:$0xff]
          %v349 = vld [vmem:[%s281 + $0x40] sm:$0xff]
          %v350 = vld [vmem:[%s281 + $0x48] sm:$0xff]
          %v351 = vld [vmem:[%s281 + $0x50] sm:$0xff]
          %v352 = vld [vmem:[%s281 + $0x58] sm:$0xff]
          %v353 = vld [vmem:[%s281 + $0x60] sm:$0xff]
          %v354 = vld [vmem:[%s281 + $0x68] sm:$0xff]
          %v355 = vld [vmem:[%s281 + $0x70] sm:$0xff]
          %v356 = vld [vmem:[%s281 + $0x78] sm:$0xff]
          %v357 = vld [vmem:[%s281 + $0x80] sm:$0xff]
          %v358 = vld [vmem:[%s281 + $0x88] sm:$0xff]
          %v359 = vld [vmem:[%s281 + $0x90] sm:$0xff]
          %v360 = vld [vmem:[%s281 + $0x98] sm:$0xff]
          %v361 = vld [vmem:[%s281 + $0xa0] sm:$0xff]
          %v362 = vld [vmem:[%s281 + $0xa8] sm:$0xff]
          %v363 = vld [vmem:[%s281 + $0xb0] sm:$0xff]
          %v364 = vld [vmem:[%s281 + $0xb8] sm:$0xff]
          %v365 = vld [vmem:[%s281 + $0xc0] sm:$0xff]
          %v366 = vld [vmem:[%s281 + $0xc8] sm:$0xff]
          %v367 = vld [vmem:[%s281 + $0xd0] sm:$0xff]
          %v368 = vld [vmem:[%s281 + $0xd8] sm:$0xff]
          %v369 = vld [vmem:[%s281 + $0xe0] sm:$0xff]
          %v370 = vld [vmem:[%s281 + $0xe8] sm:$0xff]
          %v371 = vld [vmem:[%s281 + $0xf0] sm:$0xff]
          %v372 = vld [vmem:[%s281 + $0xf8] sm:$0xff]
          %v373 = vld [vmem:[%s281 + $0x100] sm:$0xff]
          %v374 = vld [vmem:[%s281 + $0x108] sm:$0xff]
          %v375 = vld [vmem:[%s281 + $0x110] sm:$0xff]
          %v376 = vld [vmem:[%s281 + $0x118] sm:$0xff]
          %v377 = vld [vmem:[%s281 + $0x120] sm:$0xff]
          %v378 = vld [vmem:[%s281 + $0x128] sm:$0xff]
          %v379 = vadd.f32 %v341, %v342
          %380 = vadd.xlane.f32.xlu0 %v379
          %v381 = vpop.xlane.xlu0 %380
          %v382 = vadd.f32 %v343, %v344
          %383 = vadd.xlane.f32.xlu0 %v382
          %v384 = vpop.xlane.xlu0 %383
          %v385 = vadd.f32 %v345, %v346
          %386 = vadd.xlane.f32.xlu0 %v385
          %v387 = vpop.xlane.xlu0 %386
          %v388 = vadd.f32 %v347, %v348
          %389 = vadd.xlane.f32.xlu0 %v388
          %v390 = vpop.xlane.xlu0 %389
          %v391 = vadd.f32 %v349, %v350
          %392 = vadd.xlane.f32.xlu0 %v391
          %v393 = vpop.xlane.xlu0 %392
          %v394 = vadd.f32 %v351, %v352
          %395 = vadd.xlane.f32.xlu0 %v394
          %v396 = vpop.xlane.xlu0 %395
          %v397 = vadd.f32 %v353, %v354
          %398 = vadd.xlane.f32.xlu0 %v397
          %v399 = vpop.xlane.xlu0 %398
          %v400 = vadd.f32 %v355, %v356
          %401 = vadd.xlane.f32.xlu0 %v400
          %v402 = vpop.xlane.xlu0 %401
          %v403 = vadd.f32 %v357, %v358
          %404 = vadd.xlane.f32.xlu0 %v403
          %v405 = vpop.xlane.xlu0 %404
          %v406 = vadd.f32 %v359, %v360
          %407 = vadd.xlane.f32.xlu0 %v406
          %v408 = vpop.xlane.xlu0 %407
          %v409 = vadd.f32 %v361, %v362
          %410 = vadd.xlane.f32.xlu0 %v409
          %v411 = vpop.xlane.xlu0 %410
          %v412 = vadd.f32 %v363, %v364
          %413 = vadd.xlane.f32.xlu0 %v412
          %v414 = vpop.xlane.xlu0 %413
          %v415 = vadd.f32 %v365, %v366
          %416 = vadd.xlane.f32.xlu0 %v415
          %v417 = vpop.xlane.xlu0 %416
          %v418 = vadd.f32 %v367, %v368
          %419 = vadd.xlane.f32.xlu0 %v418
          %v420 = vpop.xlane.xlu0 %419
          %v421 = vadd.f32 %v369, %v370
          %422 = vadd.xlane.f32.xlu0 %v421
          %v423 = vpop.xlane.xlu0 %422
          %v424 = vadd.f32 %v371, %v372
          %425 = vadd.xlane.f32.xlu0 %v424
          %v426 = vpop.xlane.xlu0 %425
          %v427 = vadd.f32 %v373, %v374
          %428 = vadd.xlane.f32.xlu0 %v427
          %v429 = vpop.xlane.xlu0 %428
          %v430 = vadd.f32 %v375, %v376
          %431 = vadd.xlane.f32.xlu0 %v430
          %v432 = vpop.xlane.xlu0 %431
          %v433 = vadd.f32 %v377, %v378
          %434 = vadd.xlane.f32.xlu0 %v433
          %v435 = vpop.xlane.xlu0 %434
          %v436 = vmul.f32 %v381, 0.00390625
          %v437 = vmul.f32 %v384, 0.00390625
          %v438 = vmul.f32 %v387, 0.00390625
          %v439 = vmul.f32 %v390, 0.00390625
          %v440 = vmul.f32 %v393, 0.00390625
          %v441 = vmul.f32 %v396, 0.00390625
          %v442 = vmul.f32 %v399, 0.00390625
          %v443 = vmul.f32 %v402, 0.00390625
          %v444 = vmul.f32 %v405, 0.00390625
          %v445 = vmul.f32 %v408, 0.00390625
          %v446 = vmul.f32 %v411, 0.00390625
          %v447 = vmul.f32 %v414, 0.00390625
          %v448 = vmul.f32 %v417, 0.00390625
          %v449 = vmul.f32 %v420, 0.00390625
          %v450 = vmul.f32 %v423, 0.00390625
          %v451 = vmul.f32 %v426, 0.00390625
          %v452 = vmul.f32 %v429, 0.00390625
          %v453 = vmul.f32 %v432, 0.00390625
          %v454 = vmul.f32 %v435, 0.00390625
          %v455 = vsub.f32 %v341, %v436
          %v456 = vsub.f32 %v342, %v436
          %v457 = vsub.f32 %v343, %v437
          %v458 = vsub.f32 %v344, %v437
          %v459 = vsub.f32 %v345, %v438
          %v460 = vsub.f32 %v346, %v438
          %v461 = vsub.f32 %v347, %v439
          %v462 = vsub.f32 %v348, %v439
          %v463 = vsub.f32 %v349, %v440
          %v464 = vsub.f32 %v350, %v440
          %v465 = vsub.f32 %v351, %v441
          %v466 = vsub.f32 %v352, %v441
          %v467 = vsub.f32 %v353, %v442
          %v468 = vsub.f32 %v354, %v442
          %v469 = vsub.f32 %v355, %v443
          %v470 = vsub.f32 %v356, %v443
          %v471 = vsub.f32 %v357, %v444
          %v472 = vsub.f32 %v358, %v444
          %v473 = vsub.f32 %v359, %v445
          %v474 = vsub.f32 %v360, %v445
          %v475 = vsub.f32 %v361, %v446
          %v476 = vsub.f32 %v362, %v446
          %v477 = vsub.f32 %v363, %v447
          %v478 = vsub.f32 %v364, %v447
          %v479 = vsub.f32 %v365, %v448
          %v480 = vsub.f32 %v366, %v448
          %v481 = vsub.f32 %v367, %v449
          %v482 = vsub.f32 %v368, %v449
          %v483 = vsub.f32 %v369, %v450
          %v484 = vsub.f32 %v370, %v450
          %v485 = vsub.f32 %v371, %v451
          %v486 = vsub.f32 %v372, %v451
          %v487 = vsub.f32 %v373, %v452
          %v488 = vsub.f32 %v374, %v452
          %v489 = vsub.f32 %v375, %v453
          %v490 = vsub.f32 %v376, %v453
          %v491 = vsub.f32 %v377, %v454
          %v492 = vsub.f32 %v378, %v454
          %v493 = vmul.f32 %v455, %v455
          %v494 = vmul.f32 %v456, %v456
          %v495 = vmul.f32 %v457, %v457
          %v496 = vmul.f32 %v458, %v458
          %v497 = vmul.f32 %v459, %v459
          %v498 = vmul.f32 %v460, %v460
          %v499 = vmul.f32 %v461, %v461
          %v500 = vmul.f32 %v462, %v462
          %v501 = vmul.f32 %v463, %v463
          %v502 = vmul.f32 %v464, %v464
          %v503 = vmul.f32 %v465, %v465
          %v504 = vmul.f32 %v466, %v466
          %v505 = vmul.f32 %v467, %v467
          %v506 = vmul.f32 %v468, %v468
          %v507 = vmul.f32 %v469, %v469
          %v508 = vmul.f32 %v470, %v470
          %v509 = vmul.f32 %v471, %v471
          %v510 = vmul.f32 %v472, %v472
          %v511 = vmul.f32 %v473, %v473
          %v512 = vmul.f32 %v474, %v474
          %v513 = vmul.f32 %v475, %v475
          %v514 = vmul.f32 %v476, %v476
          %v515 = vmul.f32 %v477, %v477
          %v516 = vmul.f32 %v478, %v478
          %v517 = vmul.f32 %v479, %v479
          %v518 = vmul.f32 %v480, %v480
          %v519 = vmul.f32 %v481, %v481
          %v520 = vmul.f32 %v482, %v482
          %v521 = vmul.f32 %v483, %v483
          %v522 = vmul.f32 %v484, %v484
          %v523 = vmul.f32 %v485, %v485
          %v524 = vmul.f32 %v486, %v486
          %v525 = vmul.f32 %v487, %v487
          %v526 = vmul.f32 %v488, %v488
          %v527 = vmul.f32 %v489, %v489
          %v528 = vmul.f32 %v490, %v490
          %v529 = vmul.f32 %v491, %v491
          %v530 = vmul.f32 %v492, %v492
          %v531 = vadd.f32 %v493, %v494
          %532 = vadd.xlane.f32.xlu0 %v531
          %v533 = vpop.xlane.xlu0 %532
          %v534 = vadd.f32 %v495, %v496
          %535 = vadd.xlane.f32.xlu0 %v534
          %v536 = vpop.xlane.xlu0 %535
          %v537 = vadd.f32 %v497, %v498
          %538 = vadd.xlane.f32.xlu0 %v537
          %v539 = vpop.xlane.xlu0 %538
          %v540 = vadd.f32 %v499, %v500
          %541 = vadd.xlane.f32.xlu0 %v540
          %v542 = vpop.xlane.xlu0 %541
          %v543 = vadd.f32 %v501, %v502
          %544 = vadd.xlane.f32.xlu0 %v543
          %v545 = vpop.xlane.xlu0 %544
          %v546 = vadd.f32 %v503, %v504
          %547 = vadd.xlane.f32.xlu0 %v546
          %v548 = vpop.xlane.xlu0 %547
          %v549 = vadd.f32 %v505, %v506
          %550 = vadd.xlane.f32.xlu0 %v549
          %v551 = vpop.xlane.xlu0 %550
          %v552 = vadd.f32 %v507, %v508
          %553 = vadd.xlane.f32.xlu0 %v552
          %v554 = vpop.xlane.xlu0 %553
          %v555 = vadd.f32 %v509, %v510
          %556 = vadd.xlane.f32.xlu0 %v555
          %v557 = vpop.xlane.xlu0 %556
          %v558 = vadd.f32 %v511, %v512
          %559 = vadd.xlane.f32.xlu0 %v558
          %v560 = vpop.xlane.xlu0 %559
          %v561 = vadd.f32 %v513, %v514
          %562 = vadd.xlane.f32.xlu0 %v561
          %v563 = vpop.xlane.xlu0 %562
          %v564 = vadd.f32 %v515, %v516
          %565 = vadd.xlane.f32.xlu0 %v564
          %v566 = vpop.xlane.xlu0 %565
          %v567 = vadd.f32 %v517, %v518
          %568 = vadd.xlane.f32.xlu0 %v567
          %v569 = vpop.xlane.xlu0 %568
          %v570 = vadd.f32 %v519, %v520
          %571 = vadd.xlane.f32.xlu0 %v570
          %v572 = vpop.xlane.xlu0 %571
          %v573 = vadd.f32 %v521, %v522
          %574 = vadd.xlane.f32.xlu0 %v573
          %v575 = vpop.xlane.xlu0 %574
          %v576 = vadd.f32 %v523, %v524
          %577 = vadd.xlane.f32.xlu0 %v576
          %v578 = vpop.xlane.xlu0 %577
          %v579 = vadd.f32 %v525, %v526
          %580 = vadd.xlane.f32.xlu0 %v579
          %v581 = vpop.xlane.xlu0 %580
          %v582 = vadd.f32 %v527, %v528
          %583 = vadd.xlane.f32.xlu0 %v582
          %v584 = vpop.xlane.xlu0 %583
          %v585 = vadd.f32 %v529, %v530
          %586 = vadd.xlane.f32.xlu0 %v585
          %v587 = vpop.xlane.xlu0 %586
          %v588 = vmul.f32 %v533, 0.00390625
          %v589 = vmul.f32 %v536, 0.00390625
          %v590 = vmul.f32 %v539, 0.00390625
          %v591 = vmul.f32 %v542, 0.00390625
          %v592 = vmul.f32 %v545, 0.00390625
          %v593 = vmul.f32 %v548, 0.00390625
          %v594 = vmul.f32 %v551, 0.00390625
          %v595 = vmul.f32 %v554, 0.00390625
          %v596 = vmul.f32 %v557, 0.00390625
          %v597 = vmul.f32 %v560, 0.00390625
          %v598 = vmul.f32 %v563, 0.00390625
          %v599 = vmul.f32 %v566, 0.00390625
          %v600 = vmul.f32 %v569, 0.00390625
          %v601 = vmul.f32 %v572, 0.00390625
          %v602 = vmul.f32 %v575, 0.00390625
          %v603 = vmul.f32 %v578, 0.00390625
          %v604 = vmul.f32 %v581, 0.00390625
          %v605 = vmul.f32 %v584, 0.00390625
          %v606 = vmul.f32 %v587, 0.00390625
          %v607 = vadd.f32 %v588, 1e-05
          %v608 = vadd.f32 %v589, 1e-05
          %v609 = vadd.f32 %v590, 1e-05
          %v610 = vadd.f32 %v591, 1e-05
          %v611 = vadd.f32 %v592, 1e-05
          %v612 = vadd.f32 %v593, 1e-05
          %v613 = vadd.f32 %v594, 1e-05
          %v614 = vadd.f32 %v595, 1e-05
          %v615 = vadd.f32 %v596, 1e-05
          %v616 = vadd.f32 %v597, 1e-05
          %v617 = vadd.f32 %v598, 1e-05
          %v618 = vadd.f32 %v599, 1e-05
          %v619 = vadd.f32 %v600, 1e-05
          %v620 = vadd.f32 %v601, 1e-05
          %v621 = vadd.f32 %v602, 1e-05
          %v622 = vadd.f32 %v603, 1e-05
          %v623 = vadd.f32 %v604, 1e-05
          %v624 = vadd.f32 %v605, 1e-05
          %v625 = vadd.f32 %v606, 1e-05
          %v626 = vrsqrt.pop %v607
          %v627 = vmul.f32 %v626, %v607
          %v628 = vmul.f32 %v627, %v626
          %v629 = vmul.f32 0.5, %v628
          %v630 = vsub.f32 1.5, %v629
          %v631 = vmul.f32 %v626, %v630
          %vm632 = vweird.f32 %v607
          %vm633 = vweird.f32 %v626
          %vm634 = vmor %vm632, %vm633
          %v635 = vsel %vm634, %v626, %v631
          %v636 = vrsqrt.pop %v608
          %v637 = vmul.f32 %v636, %v608
          %v638 = vmul.f32 %v637, %v636
          %v639 = vmul.f32 0.5, %v638
          %v640 = vsub.f32 1.5, %v639
          %v641 = vmul.f32 %v636, %v640
          %vm642 = vweird.f32 %v608
          %vm643 = vweird.f32 %v636
          %vm644 = vmor %vm642, %vm643
          %v645 = vsel %vm644, %v636, %v641
          %v646 = vrsqrt.pop %v609
          %v647 = vmul.f32 %v646, %v609
          %v648 = vmul.f32 %v647, %v646
          %v649 = vmul.f32 0.5, %v648
          %v650 = vsub.f32 1.5, %v649
          %v651 = vmul.f32 %v646, %v650
          %vm652 = vweird.f32 %v609
          %vm653 = vweird.f32 %v646
          %vm654 = vmor %vm652, %vm653
          %v655 = vsel %vm654, %v646, %v651
          %v656 = vrsqrt.pop %v610
          %v657 = vmul.f32 %v656, %v610
          %v658 = vmul.f32 %v657, %v656
          %v659 = vmul.f32 0.5, %v658
          %v660 = vsub.f32 1.5, %v659
          %v661 = vmul.f32 %v656, %v660
          %vm662 = vweird.f32 %v610
          %vm663 = vweird.f32 %v656
          %vm664 = vmor %vm662, %vm663
          %v665 = vsel %vm664, %v656, %v661
          %v666 = vrsqrt.pop %v611
          %v667 = vmul.f32 %v666, %v611
          %v668 = vmul.f32 %v667, %v666
          %v669 = vmul.f32 0.5, %v668
          %v670 = vsub.f32 1.5, %v669
          %v671 = vmul.f32 %v666, %v670
          %vm672 = vweird.f32 %v611
          %vm673 = vweird.f32 %v666
          %vm674 = vmor %vm672, %vm673
          %v675 = vsel %vm674, %v666, %v671
          %v676 = vrsqrt.pop %v612
          %v677 = vmul.f32 %v676, %v612
          %v678 = vmul.f32 %v677, %v676
          %v679 = vmul.f32 0.5, %v678
          %v680 = vsub.f32 1.5, %v679
          %v681 = vmul.f32 %v676, %v680
          %vm682 = vweird.f32 %v612
          %vm683 = vweird.f32 %v676
          %vm684 = vmor %vm682, %vm683
          %v685 = vsel %vm684, %v676, %v681
          %v686 = vrsqrt.pop %v613
          %v687 = vmul.f32 %v686, %v613
          %v688 = vmul.f32 %v687, %v686
          %v689 = vmul.f32 0.5, %v688
          %v690 = vsub.f32 1.5, %v689
          %v691 = vmul.f32 %v686, %v690
          %vm692 = vweird.f32 %v613
          %vm693 = vweird.f32 %v686
          %vm694 = vmor %vm692, %vm693
          %v695 = vsel %vm694, %v686, %v691
          %v696 = vrsqrt.pop %v614
          %v697 = vmul.f32 %v696, %v614
          %v698 = vmul.f32 %v697, %v696
          %v699 = vmul.f32 0.5, %v698
          %v700 = vsub.f32 1.5, %v699
          %v701 = vmul.f32 %v696, %v700
          %vm702 = vweird.f32 %v614
          %vm703 = vweird.f32 %v696
          %vm704 = vmor %vm702, %vm703
          %v705 = vsel %vm704, %v696, %v701
          %v706 = vrsqrt.pop %v615
          %v707 = vmul.f32 %v706, %v615
          %v708 = vmul.f32 %v707, %v706
          %v709 = vmul.f32 0.5, %v708
          %v710 = vsub.f32 1.5, %v709
          %v711 = vmul.f32 %v706, %v710
          %vm712 = vweird.f32 %v615
          %vm713 = vweird.f32 %v706
          %vm714 = vmor %vm712, %vm713
          %v715 = vsel %vm714, %v706, %v711
          %v716 = vrsqrt.pop %v616
          %v717 = vmul.f32 %v716, %v616
          %v718 = vmul.f32 %v717, %v716
          %v719 = vmul.f32 0.5, %v718
          %v720 = vsub.f32 1.5, %v719
          %v721 = vmul.f32 %v716, %v720
          %vm722 = vweird.f32 %v616
          %vm723 = vweird.f32 %v716
          %vm724 = vmor %vm722, %vm723
          %v725 = vsel %vm724, %v716, %v721
          %v726 = vrsqrt.pop %v617
          %v727 = vmul.f32 %v726, %v617
          %v728 = vmul.f32 %v727, %v726
          %v729 = vmul.f32 0.5, %v728
          %v730 = vsub.f32 1.5, %v729
          %v731 = vmul.f32 %v726, %v730
          %vm732 = vweird.f32 %v617
          %vm733 = vweird.f32 %v726
          %vm734 = vmor %vm732, %vm733
          %v735 = vsel %vm734, %v726, %v731
          %v736 = vrsqrt.pop %v618
          %v737 = vmul.f32 %v736, %v618
          %v738 = vmul.f32 %v737, %v736
          %v739 = vmul.f32 0.5, %v738
          %v740 = vsub.f32 1.5, %v739
          %v741 = vmul.f32 %v736, %v740
          %vm742 = vweird.f32 %v618
          %vm743 = vweird.f32 %v736
          %vm744 = vmor %vm742, %vm743
          %v745 = vsel %vm744, %v736, %v741
          %v746 = vrsqrt.pop %v619
          %v747 = vmul.f32 %v746, %v619
          %v748 = vmul.f32 %v747, %v746
          %v749 = vmul.f32 0.5, %v748
          %v750 = vsub.f32 1.5, %v749
          %v751 = vmul.f32 %v746, %v750
          %vm752 = vweird.f32 %v619
          %vm753 = vweird.f32 %v746
          %vm754 = vmor %vm752, %vm753
          %v755 = vsel %vm754, %v746, %v751
          %v756 = vrsqrt.pop %v620
          %v757 = vmul.f32 %v756, %v620
          %v758 = vmul.f32 %v757, %v756
          %v759 = vmul.f32 0.5, %v758
          %v760 = vsub.f32 1.5, %v759
          %v761 = vmul.f32 %v756, %v760
          %vm762 = vweird.f32 %v620
          %vm763 = vweird.f32 %v756
          %vm764 = vmor %vm762, %vm763
          %v765 = vsel %vm764, %v756, %v761
          %v766 = vrsqrt.pop %v621
          %v767 = vmul.f32 %v766, %v621
          %v768 = vmul.f32 %v767, %v766
          %v769 = vmul.f32 0.5, %v768
          %v770 = vsub.f32 1.5, %v769
          %v771 = vmul.f32 %v766, %v770
          %vm772 = vweird.f32 %v621
          %vm773 = vweird.f32 %v766
          %vm774 = vmor %vm772, %vm773
          %v775 = vsel %vm774, %v766, %v771
          %v776 = vrsqrt.pop %v622
          %v777 = vmul.f32 %v776, %v622
          %v778 = vmul.f32 %v777, %v776
          %v779 = vmul.f32 0.5, %v778
          %v780 = vsub.f32 1.5, %v779
          %v781 = vmul.f32 %v776, %v780
          %vm782 = vweird.f32 %v622
          %vm783 = vweird.f32 %v776
          %vm784 = vmor %vm782, %vm783
          %v785 = vsel %vm784, %v776, %v781
          %v786 = vrsqrt.pop %v623
          %v787 = vmul.f32 %v786, %v623
          %v788 = vmul.f32 %v787, %v786
          %v789 = vmul.f32 0.5, %v788
          %v790 = vsub.f32 1.5, %v789
          %v791 = vmul.f32 %v786, %v790
          %vm792 = vweird.f32 %v623
          %vm793 = vweird.f32 %v786
          %vm794 = vmor %vm792, %vm793
          %v795 = vsel %vm794, %v786, %v791
          %v796 = vrsqrt.pop %v624
          %v797 = vmul.f32 %v796, %v624
          %v798 = vmul.f32 %v797, %v796
          %v799 = vmul.f32 0.5, %v798
          %v800 = vsub.f32 1.5, %v799
          %v801 = vmul.f32 %v796, %v800
          %vm802 = vweird.f32 %v624
          %vm803 = vweird.f32 %v796
          %vm804 = vmor %vm802, %vm803
          %v805 = vsel %vm804, %v796, %v801
          %v806 = vrsqrt.pop %v625
          %v807 = vmul.f32 %v806, %v625
          %v808 = vmul.f32 %v807, %v806
          %v809 = vmul.f32 0.5, %v808
          %v810 = vsub.f32 1.5, %v809
          %v811 = vmul.f32 %v806, %v810
          %vm812 = vweird.f32 %v625
          %vm813 = vweird.f32 %v806
          %vm814 = vmor %vm812, %vm813
          %v815 = vsel %vm814, %v806, %v811
          %v816 = vmul.f32 %v455, %v635
          %v817 = vmul.f32 %v456, %v635
          %v818 = vmul.f32 %v457, %v645
          %v819 = vmul.f32 %v458, %v645
          %v820 = vmul.f32 %v459, %v655
          %v821 = vmul.f32 %v460, %v655
          %v822 = vmul.f32 %v461, %v665
          %v823 = vmul.f32 %v462, %v665
          %v824 = vmul.f32 %v463, %v675
          %v825 = vmul.f32 %v464, %v675
          %v826 = vmul.f32 %v465, %v685
          %v827 = vmul.f32 %v466, %v685
          %v828 = vmul.f32 %v467, %v695
          %v829 = vmul.f32 %v468, %v695
          %v830 = vmul.f32 %v469, %v705
          %v831 = vmul.f32 %v470, %v705
          %v832 = vmul.f32 %v471, %v715
          %v833 = vmul.f32 %v472, %v715
          %v834 = vmul.f32 %v473, %v725
          %v835 = vmul.f32 %v474, %v725
          %v836 = vmul.f32 %v475, %v735
          %v837 = vmul.f32 %v476, %v735
          %v838 = vmul.f32 %v477, %v745
          %v839 = vmul.f32 %v478, %v745
          %v840 = vmul.f32 %v479, %v755
          %v841 = vmul.f32 %v480, %v755
          %v842 = vmul.f32 %v481, %v765
          %v843 = vmul.f32 %v482, %v765
          %v844 = vmul.f32 %v483, %v775
          %v845 = vmul.f32 %v484, %v775
          %v846 = vmul.f32 %v485, %v785
          %v847 = vmul.f32 %v486, %v785
          %v848 = vmul.f32 %v487, %v795
          %v849 = vmul.f32 %v488, %v795
          %v850 = vmul.f32 %v489, %v805
          %v851 = vmul.f32 %v490, %v805
          %v852 = vmul.f32 %v491, %v815
          %v853 = vmul.f32 %v492, %v815
          %v854 = vld [vmem:[#allocation6] sm:$0x3]
          %v856 = vperm.slane %v854, 0
          %v857 = vperm.slane %v854, 1
          %v860 = vmul.f32 %v816, %v856
          %v861 = vmul.f32 %v817, %v857
          %v862 = vmul.f32 %v818, %v856
          %v863 = vmul.f32 %v819, %v857
          %v864 = vmul.f32 %v820, %v856
          %v865 = vmul.f32 %v821, %v857
          %v866 = vmul.f32 %v822, %v856
          %v867 = vmul.f32 %v823, %v857
          %v868 = vmul.f32 %v824, %v856
          %v869 = vmul.f32 %v825, %v857
          %v870 = vmul.f32 %v826, %v856
          %v871 = vmul.f32 %v827, %v857
          %v872 = vmul.f32 %v828, %v856
          %v873 = vmul.f32 %v829, %v857
          %v874 = vmul.f32 %v830, %v856
          %v875 = vmul.f32 %v831, %v857
          %v876 = vmul.f32 %v832, %v856
          %v877 = vmul.f32 %v833, %v857
          %v878 = vmul.f32 %v834, %v856
          %v879 = vmul.f32 %v835, %v857
          %v880 = vmul.f32 %v836, %v856
          %v881 = vmul.f32 %v837, %v857
          %v882 = vmul.f32 %v838, %v856
          %v883 = vmul.f32 %v839, %v857
          %v884 = vmul.f32 %v840, %v856
          %v885 = vmul.f32 %v841, %v857
          %v886 = vmul.f32 %v842, %v856
          %v887 = vmul.f32 %v843, %v857
          %v888 = vmul.f32 %v844, %v856
          %v889 = vmul.f32 %v845, %v857
          %v890 = vmul.f32 %v846, %v856
          %v891 = vmul.f32 %v847, %v857
          %v892 = vmul.f32 %v848, %v856
          %v893 = vmul.f32 %v849, %v857
          %v894 = vmul.f32 %v850, %v856
          %v895 = vmul.f32 %v851, %v857
          %v896 = vmul.f32 %v852, %v856
          %v897 = vmul.f32 %v853, %v857
          %v898 = vld [vmem:[#allocation8] sm:$0x3]
          %v900 = vperm.slane %v898, 0
          %v901 = vperm.slane %v898, 1
          %v904 = vadd.f32 %v860, %v900
          %v905 = vadd.f32 %v861, %v901
          %v906 = vadd.f32 %v862, %v900
          %v907 = vadd.f32 %v863, %v901
          %v908 = vadd.f32 %v864, %v900
          %v909 = vadd.f32 %v865, %v901
          %v910 = vadd.f32 %v866, %v900
          %v911 = vadd.f32 %v867, %v901
          %v912 = vadd.f32 %v868, %v900
          %v913 = vadd.f32 %v869, %v901
          %v914 = vadd.f32 %v870, %v900
          %v915 = vadd.f32 %v871, %v901
          %v916 = vadd.f32 %v872, %v900
          %v917 = vadd.f32 %v873, %v901
          %v918 = vadd.f32 %v874, %v900
          %v919 = vadd.f32 %v875, %v901
          %v920 = vadd.f32 %v876, %v900
          %v921 = vadd.f32 %v877, %v901
          %v922 = vadd.f32 %v878, %v900
          %v923 = vadd.f32 %v879, %v901
          %v924 = vadd.f32 %v880, %v900
          %v925 = vadd.f32 %v881, %v901
          %v926 = vadd.f32 %v882, %v900
          %v927 = vadd.f32 %v883, %v901
          %v928 = vadd.f32 %v884, %v900
          %v929 = vadd.f32 %v885, %v901
          %v930 = vadd.f32 %v886, %v900
          %v931 = vadd.f32 %v887, %v901
          %v932 = vadd.f32 %v888, %v900
          %v933 = vadd.f32 %v889, %v901
          %v934 = vadd.f32 %v890, %v900
          %v935 = vadd.f32 %v891, %v901
          %v936 = vadd.f32 %v892, %v900
          %v937 = vadd.f32 %v893, %v901
          %v938 = vadd.f32 %v894, %v900
          %v939 = vadd.f32 %v895, %v901
          %v940 = vadd.f32 %v896, %v900
          %v941 = vadd.f32 %v897, %v901
          %942 = vst [vmem:[#allocation2] sm:$0xff] %v904
          %943 = vst [vmem:[#allocation2 + $0x8] sm:$0xff] %v905
          %944 = vst [vmem:[#allocation2 + $0x10] sm:$0xff] %v906
          %945 = vst [vmem:[#allocation2 + $0x18] sm:$0xff] %v907
          %946 = vst [vmem:[#allocation2 + $0x20] sm:$0xff] %v908
          %947 = vst [vmem:[#allocation2 + $0x28] sm:$0xff] %v909
          %948 = vst [vmem:[#allocation2 + $0x30] sm:$0xff] %v910
          %949 = vst [vmem:[#allocation2 + $0x38] sm:$0xff] %v911
          %950 = vst [vmem:[#allocation2 + $0x40] sm:$0xff] %v912
          %951 = vst [vmem:[#allocation2 + $0x48] sm:$0xff] %v913
          %952 = vst [vmem:[#allocation2 + $0x50] sm:$0xff] %v914
          %953 = vst [vmem:[#allocation2 + $0x58] sm:$0xff] %v915
          %954 = vst [vmem:[#allocation2 + $0x60] sm:$0xff] %v916
          %955 = vst [vmem:[#allocation2 + $0x68] sm:$0xff] %v917
          %956 = vst [vmem:[#allocation2 + $0x70] sm:$0xff] %v918
          %957 = vst [vmem:[#allocation2 + $0x78] sm:$0xff] %v919
          %958 = vst [vmem:[#allocation2 + $0x80] sm:$0xff] %v920
          %959 = vst [vmem:[#allocation2 + $0x88] sm:$0xff] %v921
          %960 = vst [vmem:[#allocation2 + $0x90] sm:$0xff] %v922
          %961 = vst [vmem:[#allocation2 + $0x98] sm:$0xff] %v923
          %962 = vst [vmem:[#allocation2 + $0xa0] sm:$0xff] %v924
          %963 = vst [vmem:[#allocation2 + $0xa8] sm:$0xff] %v925
          %964 = vst [vmem:[#allocation2 + $0xb0] sm:$0xff] %v926
          %965 = vst [vmem:[#allocation2 + $0xb8] sm:$0xff] %v927
          %966 = vst [vmem:[#allocation2 + $0xc0] sm:$0xff] %v928
          %967 = vst [vmem:[#allocation2 + $0xc8] sm:$0xff] %v929
          %968 = vst [vmem:[#allocation2 + $0xd0] sm:$0xff] %v930
          %969 = vst [vmem:[#allocation2 + $0xd8] sm:$0xff] %v931
          %970 = vst [vmem:[#allocation2 + $0xe0] sm:$0xff] %v932
          %971 = vst [vmem:[#allocation2 + $0xe8] sm:$0xff] %v933
          %972 = vst [vmem:[#allocation2 + $0xf0] sm:$0xff] %v934
          %973 = vst [vmem:[#allocation2 + $0xf8] sm:$0xff] %v935
          %974 = vst [vmem:[#allocation2 + $0x100] sm:$0xff] %v936
          %975 = vst [vmem:[#allocation2 + $0x108] sm:$0xff] %v937
          %976 = vst [vmem:[#allocation2 + $0x110] sm:$0xff] %v938
          %977 = vst [vmem:[#allocation2 + $0x118] sm:$0xff] %v939
          %978 = vst [vmem:[#allocation2 + $0x120] sm:$0xff] %v940
          %979 = vst [vmem:[#allocation2 + $0x128] sm:$0xff] %v941
        $region60: #{tpu_custom_call.1} parent=39 // pred_fallthru
          _
        %v980 = vld [vmem:[#allocation2] sm:$0xff]
        %v981 = vld [vmem:[#allocation2 + $0x8] sm:$0xff]
        %v982 = vld [vmem:[#allocation2 + $0x10] sm:$0xff]
        %v983 = vld [vmem:[#allocation2 + $0x18] sm:$0xff]
        %v984 = vld [vmem:[#allocation2 + $0x20] sm:$0xff]
        %v985 = vld [vmem:[#allocation2 + $0x28] sm:$0xff]
        %v986 = vld [vmem:[#allocation2 + $0x30] sm:$0xff]
        %v987 = vld [vmem:[#allocation2 + $0x38] sm:$0xff]
        %v988 = vld [vmem:[#allocation2 + $0x40] sm:$0xff]
        %v989 = vld [vmem:[#allocation2 + $0x48] sm:$0xff]
        %v990 = vld [vmem:[#allocation2 + $0x50] sm:$0xff]
        %v991 = vld [vmem:[#allocation2 + $0x58] sm:$0xff]
        %v992 = vld [vmem:[#allocation2 + $0x60] sm:$0xff]
        %v993 = vld [vmem:[#allocation2 + $0x68] sm:$0xff]
        %v994 = vld [vmem:[#allocation2 + $0x70] sm:$0xff]
        %v995 = vld [vmem:[#allocation2 + $0x78] sm:$0xff]
        %v996 = vld [vmem:[#allocation2 + $0x80] sm:$0xff]
        %v997 = vld [vmem:[#allocation2 + $0x88] sm:$0xff]
        %v998 = vld [vmem:[#allocation2 + $0x90] sm:$0xff]
        %v999 = vld [vmem:[#allocation2 + $0x98] sm:$0xff]
        %v1000 = vld [vmem:[#allocation2 + $0xa0] sm:$0xff]
        %v1001 = vld [vmem:[#allocation2 + $0xa8] sm:$0xff]
        %v1002 = vld [vmem:[#allocation2 + $0xb0] sm:$0xff]
        %v1003 = vld [vmem:[#allocation2 + $0xb8] sm:$0xff]
        %v1004 = vld [vmem:[#allocation2 + $0xc0] sm:$0xff]
        %v1005 = vld [vmem:[#allocation2 + $0xc8] sm:$0xff]
        %v1006 = vld [vmem:[#allocation2 + $0xd0] sm:$0xff]
        %v1007 = vld [vmem:[#allocation2 + $0xd8] sm:$0xff]
        %v1008 = vld [vmem:[#allocation2 + $0xe0] sm:$0xff]
        %v1009 = vld [vmem:[#allocation2 + $0xe8] sm:$0xff]
        %v1010 = vld [vmem:[#allocation2 + $0xf0] sm:$0xff]
        %v1011 = vld [vmem:[#allocation2 + $0xf8] sm:$0xff]
        %v1012 = vld [vmem:[#allocation2 + $0x100] sm:$0xff]
        %v1013 = vld [vmem:[#allocation2 + $0x108] sm:$0xff]
        %v1014 = vld [vmem:[#allocation2 + $0x110] sm:$0xff]
        %v1015 = vld [vmem:[#allocation2 + $0x118] sm:$0xff]
        %v1016 = vld [vmem:[#allocation2 + $0x120] sm:$0xff]
        %v1017 = vld [vmem:[#allocation2 + $0x128] sm:$0xff]
        %v1018 = vld [vmem:[#allocation9] sm:$0xff]
        %v1019 = vld [vmem:[#allocation9 + $0x8] sm:$0xff]
        %v1020 = vld [vmem:[#allocation9 + $0x10] sm:$0xff]
        %v1021 = vld [vmem:[#allocation9 + $0x18] sm:$0xff]
        %v1022 = vld [vmem:[#allocation9 + $0x20] sm:$0xff]
        %v1023 = vld [vmem:[#allocation9 + $0x28] sm:$0xff]
        %v1024 = vld [vmem:[#allocation9 + $0x30] sm:$0xff]
        %v1025 = vld [vmem:[#allocation9 + $0x38] sm:$0xff]
        %v1026 = vld [vmem:[#allocation9 + $0x40] sm:$0xff]
        %v1027 = vld [vmem:[#allocation9 + $0x48] sm:$0xff]
        %v1028 = vld [vmem:[#allocation9 + $0x50] sm:$0xff]
        %v1029 = vld [vmem:[#allocation9 + $0x58] sm:$0xff]
        %v1030 = vld [vmem:[#allocation9 + $0x60] sm:$0xff]
        %v1031 = vld [vmem:[#allocation9 + $0x68] sm:$0xff]
        %v1032 = vld [vmem:[#allocation9 + $0x70] sm:$0xff]
        %v1033 = vld [vmem:[#allocation9 + $0x78] sm:$0xff]
        %v1034 = vld [vmem:[#allocation9 + $0x80] sm:$0xff]
        %v1035 = vld [vmem:[#allocation9 + $0x88] sm:$0xff]
        %v1036 = vld [vmem:[#allocation9 + $0x90] sm:$0xff]
        %v1037 = vld [vmem:[#allocation9 + $0x98] sm:$0xff]
        %v1038 = vld [vmem:[#allocation9 + $0xa0] sm:$0xff]
        %v1039 = vld [vmem:[#allocation9 + $0xa8] sm:$0xff]
        %v1040 = vld [vmem:[#allocation9 + $0xb0] sm:$0xff]
        %v1041 = vld [vmem:[#allocation9 + $0xb8] sm:$0xff]
        %v1042 = vld [vmem:[#allocation9 + $0xc0] sm:$0xff]
        %v1043 = vld [vmem:[#allocation9 + $0xc8] sm:$0xff]
        %v1044 = vld [vmem:[#allocation9 + $0xd0] sm:$0xff]
        %v1045 = vld [vmem:[#allocation9 + $0xd8] sm:$0xff]
        %v1046 = vld [vmem:[#allocation9 + $0xe0] sm:$0xff]
        %v1047 = vld [vmem:[#allocation9 + $0xe8] sm:$0xff]
        %v1048 = vld [vmem:[#allocation9 + $0xf0] sm:$0xff]
        %v1049 = vld [vmem:[#allocation9 + $0xf8] sm:$0xff]
        %v1050 = vld [vmem:[#allocation9 + $0x100] sm:$0xff]
        %v1051 = vld [vmem:[#allocation9 + $0x108] sm:$0xff]
        %v1052 = vld [vmem:[#allocation9 + $0x110] sm:$0xff]
        %v1053 = vld [vmem:[#allocation9 + $0x118] sm:$0xff]
        %v1054 = vld [vmem:[#allocation9 + $0x120] sm:$0xff]
        %v1055 = vld [vmem:[#allocation9 + $0x128] sm:$0xff]
        %v1056 = vld [vmem:[#allocation9 + $0x130] sm:$0xff]
        %v1057 = vld [vmem:[#allocation9 + $0x138] sm:$0xff]
        %v1058 = vld [vmem:[#allocation9 + $0x140] sm:$0xff]
        %v1059 = vld [vmem:[#allocation9 + $0x148] sm:$0xff]
        %v1060 = vld [vmem:[#allocation9 + $0x150] sm:$0xff]
        %v1061 = vld [vmem:[#allocation9 + $0x158] sm:$0xff]
        %v1062 = vld [vmem:[#allocation9 + $0x160] sm:$0xff]
        %v1063 = vld [vmem:[#allocation9 + $0x168] sm:$0xff]
        %v1064 = vld [vmem:[#allocation9 + $0x170] sm:$0xff]
        %v1065 = vld [vmem:[#allocation9 + $0x178] sm:$0xff]
        %v1066 = vld [vmem:[#allocation9 + $0x180] sm:$0xff]
        %v1067 = vld [vmem:[#allocation9 + $0x188] sm:$0xff]
        %v1068 = vld [vmem:[#allocation9 + $0x190] sm:$0xff]
        %v1069 = vld [vmem:[#allocation9 + $0x198] sm:$0xff]
        %v1070 = vld [vmem:[#allocation9 + $0x1a0] sm:$0xff]
        %v1071 = vld [vmem:[#allocation9 + $0x1a8] sm:$0xff]
        %v1072 = vld [vmem:[#allocation9 + $0x1b0] sm:$0xff]
        %v1073 = vld [vmem:[#allocation9 + $0x1b8] sm:$0xff]
        %v1074 = vld [vmem:[#allocation9 + $0x1c0] sm:$0xff]
        %v1075 = vld [vmem:[#allocation9 + $0x1c8] sm:$0xff]
        %v1076 = vld [vmem:[#allocation9 + $0x1d0] sm:$0xff]
        %v1077 = vld [vmem:[#allocation9 + $0x1d8] sm:$0xff]
        %v1078 = vld [vmem:[#allocation9 + $0x1e0] sm:$0xff]
        %v1079 = vld [vmem:[#allocation9 + $0x1e8] sm:$0xff]
        %v1080 = vld [vmem:[#allocation9 + $0x1f0] sm:$0xff]
        %v1081 = vld [vmem:[#allocation9 + $0x1f8] sm:$0xff]
        %v1082 = vld [vmem:[#allocation9 + $0x200] sm:$0xff]
        %v1083 = vld [vmem:[#allocation9 + $0x208] sm:$0xff]
        %v1084 = vld [vmem:[#allocation9 + $0x210] sm:$0xff]
        %v1085 = vld [vmem:[#allocation9 + $0x218] sm:$0xff]
        %v1086 = vld [vmem:[#allocation9 + $0x220] sm:$0xff]
        %v1087 = vld [vmem:[#allocation9 + $0x228] sm:$0xff]
        %v1088 = vld [vmem:[#allocation9 + $0x230] sm:$0xff]
        %v1089 = vld [vmem:[#allocation9 + $0x238] sm:$0xff]
        %v1090 = vld [vmem:[#allocation9 + $0x240] sm:$0xff]
        %v1091 = vld [vmem:[#allocation9 + $0x248] sm:$0xff]
        %v1092 = vld [vmem:[#allocation9 + $0x250] sm:$0xff]
        %v1093 = vld [vmem:[#allocation9 + $0x258] sm:$0xff]
        %v1094 = vld [vmem:[#allocation9 + $0x260] sm:$0xff]
        %v1095 = vld [vmem:[#allocation9 + $0x268] sm:$0xff]
        %v1096 = vld [vmem:[#allocation9 + $0x270] sm:$0xff]
        %v1097 = vld [vmem:[#allocation9 + $0x278] sm:$0xff]
        %v1098 = vld [vmem:[#allocation9 + $0x280] sm:$0xff]
        %v1099 = vld [vmem:[#allocation9 + $0x288] sm:$0xff]
        %v1100 = vld [vmem:[#allocation9 + $0x290] sm:$0xff]
        %v1101 = vld [vmem:[#allocation9 + $0x298] sm:$0xff]
        %v1102 = vld [vmem:[#allocation9 + $0x2a0] sm:$0xff]
        %v1103 = vld [vmem:[#allocation9 + $0x2a8] sm:$0xff]
        %v1104 = vld [vmem:[#allocation9 + $0x2b0] sm:$0xff]
        %v1105 = vld [vmem:[#allocation9 + $0x2b8] sm:$0xff]
        %v1106 = vld [vmem:[#allocation9 + $0x2c0] sm:$0xff]
        %v1107 = vld [vmem:[#allocation9 + $0x2c8] sm:$0xff]
        %v1108 = vld [vmem:[#allocation9 + $0x2d0] sm:$0xff]
        %v1109 = vld [vmem:[#allocation9 + $0x2d8] sm:$0xff]
        %v1110 = vld [vmem:[#allocation9 + $0x2e0] sm:$0xff]
        %v1111 = vld [vmem:[#allocation9 + $0x2e8] sm:$0xff]
        %v1112 = vld [vmem:[#allocation9 + $0x2f0] sm:$0xff]
        %v1113 = vld [vmem:[#allocation9 + $0x2f8] sm:$0xff]
        %v1114 = vld [vmem:[%s333] sm:$0x7]
        %v1116 = vperm.slane %v1114, 0
        %v1117 = vperm.slane %v1114, 1
        %v1118 = vperm.slane %v1114, 2
        %1122 = vmatpush.msra.mxu0 %v1063
        %1123 = vmatpush.msra.mxu0 %v1060
        %1124 = vmatpush.msra.mxu0 %v1057
        %1125 = vmatpush.msra.mxu0 %v1054
        %1126 = vmatpush.msra.mxu0 %v1051
        %1127 = vmatpush.msra.mxu0 %v1048
        %1128 = vmatpush.msra.mxu0 %v1045
        %1129 = vmatpush.msra.mxu0 %v1042
        %1130 = vmatpush.msra.mxu0 %v1039
        %1131 = vmatpush.msra.mxu0 %v1036
        %1132 = vmatpush.msra.mxu0 %v1033
        %1133 = vmatpush.msra.mxu0 %v1030
        %1134 = vmatpush.msra.mxu0 %v1027
        %1135 = vmatpush.msra.mxu0 %v1024
        %1136 = vmatpush.msra.mxu0 %v1021
        %1137 = vmatpush.msra.mxu0 %v1018
        %1138 = vmatmul.f32.gmra.mxu0 %v980
        %v1139 = vpop.f32.mrf.mxu0
        %v1140 = vadd.f32 %v1116, %v1139
        %1141 = vmatmul.f32.gmra.mxu0 %v982
        %v1142 = vpop.f32.mrf.mxu0
        %v1143 = vadd.f32 %v1116, %v1142
        %1144 = vmatmul.f32.gmra.mxu0 %v984
        %v1145 = vpop.f32.mrf.mxu0
        %v1146 = vadd.f32 %v1116, %v1145
        %1147 = vmatmul.f32.gmra.mxu0 %v986
        %v1148 = vpop.f32.mrf.mxu0
        %v1149 = vadd.f32 %v1116, %v1148
        %1150 = vmatmul.f32.gmra.mxu0 %v988
        %v1151 = vpop.f32.mrf.mxu0
        %v1152 = vadd.f32 %v1116, %v1151
        %1153 = vmatmul.f32.gmra.mxu0 %v990
        %v1154 = vpop.f32.mrf.mxu0
        %v1155 = vadd.f32 %v1116, %v1154
        %1156 = vmatmul.f32.gmra.mxu0 %v992
        %v1157 = vpop.f32.mrf.mxu0
        %v1158 = vadd.f32 %v1116, %v1157
        %1159 = vmatmul.f32.gmra.mxu0 %v994
        %v1160 = vpop.f32.mrf.mxu0
        %v1161 = vadd.f32 %v1116, %v1160
        %1162 = vmatmul.f32.gmra.mxu0 %v996
        %v1163 = vpop.f32.mrf.mxu0
        %v1164 = vadd.f32 %v1116, %v1163
        %1165 = vmatmul.f32.gmra.mxu0 %v998
        %v1166 = vpop.f32.mrf.mxu0
        %v1167 = vadd.f32 %v1116, %v1166
        %1168 = vmatmul.f32.gmra.mxu0 %v1000
        %v1169 = vpop.f32.mrf.mxu0
        %v1170 = vadd.f32 %v1116, %v1169
        %1171 = vmatmul.f32.gmra.mxu0 %v1002
        %v1172 = vpop.f32.mrf.mxu0
        %v1173 = vadd.f32 %v1116, %v1172
        %1174 = vmatmul.f32.gmra.mxu0 %v1004
        %v1175 = vpop.f32.mrf.mxu0
        %v1176 = vadd.f32 %v1116, %v1175
        %1177 = vmatmul.f32.gmra.mxu0 %v1006
        %v1178 = vpop.f32.mrf.mxu0
        %v1179 = vadd.f32 %v1116, %v1178
        %1180 = vmatmul.f32.gmra.mxu0 %v1008
        %v1181 = vpop.f32.mrf.mxu0
        %v1182 = vadd.f32 %v1116, %v1181
        %1183 = vmatmul.f32.gmra.mxu0 %v1010
        %v1184 = vpop.f32.mrf.mxu0
        %v1185 = vadd.f32 %v1116, %v1184
        %1186 = vmatmul.f32.gmra.mxu0 %v1012
        %v1187 = vpop.f32.mrf.mxu0
        %v1188 = vadd.f32 %v1116, %v1187
        %1189 = vmatmul.f32.gmra.mxu0 %v1014
        %v1190 = vpop.f32.mrf.mxu0
        %v1191 = vadd.f32 %v1116, %v1190
        %1192 = vmatmul.f32.gmra.mxu0 %v1016
        %v1193 = vpop.f32.mrf.mxu0
        %v1194 = vadd.f32 %v1116, %v1193
        %1195 = vdwg.mxu0
        %1196 = vmatpush.msra.mxu0 %v1111
        %1197 = vmatpush.msra.mxu0 %v1108
        %1198 = vmatpush.msra.mxu0 %v1105
        %1199 = vmatpush.msra.mxu0 %v1102
        %1200 = vmatpush.msra.mxu0 %v1099
        %1201 = vmatpush.msra.mxu0 %v1096
        %1202 = vmatpush.msra.mxu0 %v1093
        %1203 = vmatpush.msra.mxu0 %v1090
        %1204 = vmatpush.msra.mxu0 %v1087
        %1205 = vmatpush.msra.mxu0 %v1084
        %1206 = vmatpush.msra.mxu0 %v1081
        %1207 = vmatpush.msra.mxu0 %v1078
        %1208 = vmatpush.msra.mxu0 %v1075
        %1209 = vmatpush.msra.mxu0 %v1072
        %1210 = vmatpush.msra.mxu0 %v1069
        %1211 = vmatpush.msra.mxu0 %v1066
        %1212 = vmatmul.f32.gmra.mxu0 %v981
        %v1213 = vpop.f32.mrf.mxu0
        %v1214 = vadd.f32 %v1140, %v1213
        %1215 = vmatmul.f32.gmra.mxu0 %v983
        %v1216 = vpop.f32.mrf.mxu0
        %v1217 = vadd.f32 %v1143, %v1216
        %1218 = vmatmul.f32.gmra.mxu0 %v985
        %v1219 = vpop.f32.mrf.mxu0
        %v1220 = vadd.f32 %v1146, %v1219
        %1221 = vmatmul.f32.gmra.mxu0 %v987
        %v1222 = vpop.f32.mrf.mxu0
        %v1223 = vadd.f32 %v1149, %v1222
        %1224 = vmatmul.f32.gmra.mxu0 %v989
        %v1225 = vpop.f32.mrf.mxu0
        %v1226 = vadd.f32 %v1152, %v1225
        %1227 = vmatmul.f32.gmra.mxu0 %v991
        %v1228 = vpop.f32.mrf.mxu0
        %v1229 = vadd.f32 %v1155, %v1228
        %1230 = vmatmul.f32.gmra.mxu0 %v993
        %v1231 = vpop.f32.mrf.mxu0
        %v1232 = vadd.f32 %v1158, %v1231
        %1233 = vmatmul.f32.gmra.mxu0 %v995
        %v1234 = vpop.f32.mrf.mxu0
        %v1235 = vadd.f32 %v1161, %v1234
        %1236 = vmatmul.f32.gmra.mxu0 %v997
        %v1237 = vpop.f32.mrf.mxu0
        %v1238 = vadd.f32 %v1164, %v1237
        %1239 = vmatmul.f32.gmra.mxu0 %v999
        %v1240 = vpop.f32.mrf.mxu0
        %v1241 = vadd.f32 %v1167, %v1240
        %1242 = vmatmul.f32.gmra.mxu0 %v1001
        %v1243 = vpop.f32.mrf.mxu0
        %v1244 = vadd.f32 %v1170, %v1243
        %1245 = vmatmul.f32.gmra.mxu0 %v1003
        %v1246 = vpop.f32.mrf.mxu0
        %v1247 = vadd.f32 %v1173, %v1246
        %1248 = vmatmul.f32.gmra.mxu0 %v1005
        %v1249 = vpop.f32.mrf.mxu0
        %v1250 = vadd.f32 %v1176, %v1249
        %1251 = vmatmul.f32.gmra.mxu0 %v1007
        %v1252 = vpop.f32.mrf.mxu0
        %v1253 = vadd.f32 %v1179, %v1252
        %1254 = vmatmul.f32.gmra.mxu0 %v1009
        %v1255 = vpop.f32.mrf.mxu0
        %v1256 = vadd.f32 %v1182, %v1255
        %1257 = vmatmul.f32.gmra.mxu0 %v1011
        %v1258 = vpop.f32.mrf.mxu0
        %v1259 = vadd.f32 %v1185, %v1258
        %1260 = vmatmul.f32.gmra.mxu0 %v1013
        %v1261 = vpop.f32.mrf.mxu0
        %v1262 = vadd.f32 %v1188, %v1261
        %1263 = vmatmul.f32.gmra.mxu0 %v1015
        %v1264 = vpop.f32.mrf.mxu0
        %v1265 = vadd.f32 %v1191, %v1264
        %1266 = vmatmul.f32.gmra.mxu0 %v1017
        %v1267 = vpop.f32.mrf.mxu0
        %v1268 = vadd.f32 %v1194, %v1267
        %1269 = vdwg.mxu0
        %1270 = vmatpush.msra.mxu0 %v1064
        %1271 = vmatpush.msra.mxu0 %v1061
        %1272 = vmatpush.msra.mxu0 %v1058
        %1273 = vmatpush.msra.mxu0 %v1055
        %1274 = vmatpush.msra.mxu0 %v1052
        %1275 = vmatpush.msra.mxu0 %v1049
        %1276 = vmatpush.msra.mxu0 %v1046
        %1277 = vmatpush.msra.mxu0 %v1043
        %1278 = vmatpush.msra.mxu0 %v1040
        %1279 = vmatpush.msra.mxu0 %v1037
        %1280 = vmatpush.msra.mxu0 %v1034
        %1281 = vmatpush.msra.mxu0 %v1031
        %1282 = vmatpush.msra.mxu0 %v1028
        %1283 = vmatpush.msra.mxu0 %v1025
        %1284 = vmatpush.msra.mxu0 %v1022
        %1285 = vmatpush.msra.mxu0 %v1019
        %1286 = vmatmul.f32.gmra.mxu0 %v980
        %v1287 = vpop.f32.mrf.mxu0
        %v1288 = vadd.f32 %v1117, %v1287
        %1289 = vmatmul.f32.gmra.mxu0 %v982
        %v1290 = vpop.f32.mrf.mxu0
        %v1291 = vadd.f32 %v1117, %v1290
        %1292 = vmatmul.f32.gmra.mxu0 %v984
        %v1293 = vpop.f32.mrf.mxu0
        %v1294 = vadd.f32 %v1117, %v1293
        %1295 = vmatmul.f32.gmra.mxu0 %v986
        %v1296 = vpop.f32.mrf.mxu0
        %v1297 = vadd.f32 %v1117, %v1296
        %1298 = vmatmul.f32.gmra.mxu0 %v988
        %v1299 = vpop.f32.mrf.mxu0
        %v1300 = vadd.f32 %v1117, %v1299
        %1301 = vmatmul.f32.gmra.mxu0 %v990
        %v1302 = vpop.f32.mrf.mxu0
        %v1303 = vadd.f32 %v1117, %v1302
        %1304 = vmatmul.f32.gmra.mxu0 %v992
        %v1305 = vpop.f32.mrf.mxu0
        %v1306 = vadd.f32 %v1117, %v1305
        %1307 = vmatmul.f32.gmra.mxu0 %v994
        %v1308 = vpop.f32.mrf.mxu0
        %v1309 = vadd.f32 %v1117, %v1308
        %1310 = vmatmul.f32.gmra.mxu0 %v996
        %v1311 = vpop.f32.mrf.mxu0
        %v1312 = vadd.f32 %v1117, %v1311
        %1313 = vmatmul.f32.gmra.mxu0 %v998
        %v1314 = vpop.f32.mrf.mxu0
        %v1315 = vadd.f32 %v1117, %v1314
        %1316 = vmatmul.f32.gmra.mxu0 %v1000
        %v1317 = vpop.f32.mrf.mxu0
        %v1318 = vadd.f32 %v1117, %v1317
        %1319 = vmatmul.f32.gmra.mxu0 %v1002
        %v1320 = vpop.f32.mrf.mxu0
        %v1321 = vadd.f32 %v1117, %v1320
        %1322 = vmatmul.f32.gmra.mxu0 %v1004
        %v1323 = vpop.f32.mrf.mxu0
        %v1324 = vadd.f32 %v1117, %v1323
        %1325 = vmatmul.f32.gmra.mxu0 %v1006
        %v1326 = vpop.f32.mrf.mxu0
        %v1327 = vadd.f32 %v1117, %v1326
        %1328 = vmatmul.f32.gmra.mxu0 %v1008
        %v1329 = vpop.f32.mrf.mxu0
        %v1330 = vadd.f32 %v1117, %v1329
        %1331 = vmatmul.f32.gmra.mxu0 %v1010
        %v1332 = vpop.f32.mrf.mxu0
        %v1333 = vadd.f32 %v1117, %v1332
        %1334 = vmatmul.f32.gmra.mxu0 %v1012
        %v1335 = vpop.f32.mrf.mxu0
        %v1336 = vadd.f32 %v1117, %v1335
        %1337 = vmatmul.f32.gmra.mxu0 %v1014
        %v1338 = vpop.f32.mrf.mxu0
        %v1339 = vadd.f32 %v1117, %v1338
        %1340 = vmatmul.f32.gmra.mxu0 %v1016
        %v1341 = vpop.f32.mrf.mxu0
        %v1342 = vadd.f32 %v1117, %v1341
        %1343 = vdwg.mxu0
        %1344 = vmatpush.msra.mxu0 %v1112
        %1345 = vmatpush.msra.mxu0 %v1109
        %1346 = vmatpush.msra.mxu0 %v1106
        %1347 = vmatpush.msra.mxu0 %v1103
        %1348 = vmatpush.msra.mxu0 %v1100
        %1349 = vmatpush.msra.mxu0 %v1097
        %1350 = vmatpush.msra.mxu0 %v1094
        %1351 = vmatpush.msra.mxu0 %v1091
        %1352 = vmatpush.msra.mxu0 %v1088
        %1353 = vmatpush.msra.mxu0 %v1085
        %1354 = vmatpush.msra.mxu0 %v1082
        %1355 = vmatpush.msra.mxu0 %v1079
        %1356 = vmatpush.msra.mxu0 %v1076
        %1357 = vmatpush.msra.mxu0 %v1073
        %1358 = vmatpush.msra.mxu0 %v1070
        %1359 = vmatpush.msra.mxu0 %v1067
        %1360 = vmatmul.f32.gmra.mxu0 %v981
        %v1361 = vpop.f32.mrf.mxu0
        %v1362 = vadd.f32 %v1288, %v1361
        %1363 = vmatmul.f32.gmra.mxu0 %v983
        %v1364 = vpop.f32.mrf.mxu0
        %v1365 = vadd.f32 %v1291, %v1364
        %1366 = vmatmul.f32.gmra.mxu0 %v985
        %v1367 = vpop.f32.mrf.mxu0
        %v1368 = vadd.f32 %v1294, %v1367
        %1369 = vmatmul.f32.gmra.mxu0 %v987
        %v1370 = vpop.f32.mrf.mxu0
        %v1371 = vadd.f32 %v1297, %v1370
        %1372 = vmatmul.f32.gmra.mxu0 %v989
        %v1373 = vpop.f32.mrf.mxu0
        %v1374 = vadd.f32 %v1300, %v1373
        %1375 = vmatmul.f32.gmra.mxu0 %v991
        %v1376 = vpop.f32.mrf.mxu0
        %v1377 = vadd.f32 %v1303, %v1376
        %1378 = vmatmul.f32.gmra.mxu0 %v993
        %v1379 = vpop.f32.mrf.mxu0
        %v1380 = vadd.f32 %v1306, %v1379
        %1381 = vmatmul.f32.gmra.mxu0 %v995
        %v1382 = vpop.f32.mrf.mxu0
        %v1383 = vadd.f32 %v1309, %v1382
        %1384 = vmatmul.f32.gmra.mxu0 %v997
        %v1385 = vpop.f32.mrf.mxu0
        %v1386 = vadd.f32 %v1312, %v1385
        %1387 = vmatmul.f32.gmra.mxu0 %v999
        %v1388 = vpop.f32.mrf.mxu0
        %v1389 = vadd.f32 %v1315, %v1388
        %1390 = vmatmul.f32.gmra.mxu0 %v1001
        %v1391 = vpop.f32.mrf.mxu0
        %v1392 = vadd.f32 %v1318, %v1391
        %1393 = vmatmul.f32.gmra.mxu0 %v1003
        %v1394 = vpop.f32.mrf.mxu0
        %v1395 = vadd.f32 %v1321, %v1394
        %1396 = vmatmul.f32.gmra.mxu0 %v1005
        %v1397 = vpop.f32.mrf.mxu0
        %v1398 = vadd.f32 %v1324, %v1397
        %1399 = vmatmul.f32.gmra.mxu0 %v1007
        %v1400 = vpop.f32.mrf.mxu0
        %v1401 = vadd.f32 %v1327, %v1400
        %1402 = vmatmul.f32.gmra.mxu0 %v1009
        %v1403 = vpop.f32.mrf.mxu0
        %v1404 = vadd.f32 %v1330, %v1403
        %1405 = vmatmul.f32.gmra.mxu0 %v1011
        %v1406 = vpop.f32.mrf.mxu0
        %v1407 = vadd.f32 %v1333, %v1406
        %1408 = vmatmul.f32.gmra.mxu0 %v1013
        %v1409 = vpop.f32.mrf.mxu0
        %v1410 = vadd.f32 %v1336, %v1409
        %1411 = vmatmul.f32.gmra.mxu0 %v1015
        %v1412 = vpop.f32.mrf.mxu0
        %v1413 = vadd.f32 %v1339, %v1412
        %1414 = vmatmul.f32.gmra.mxu0 %v1017
        %v1415 = vpop.f32.mrf.mxu0
        %v1416 = vadd.f32 %v1342, %v1415
        %1417 = vdwg.mxu0
        %1418 = vmatpush.msra.mxu0 %v1065
        %1419 = vmatpush.msra.mxu0 %v1062
        %1420 = vmatpush.msra.mxu0 %v1059
        %1421 = vmatpush.msra.mxu0 %v1056
        %1422 = vmatpush.msra.mxu0 %v1053
        %1423 = vmatpush.msra.mxu0 %v1050
        %1424 = vmatpush.msra.mxu0 %v1047
        %1425 = vmatpush.msra.mxu0 %v1044
        %1426 = vmatpush.msra.mxu0 %v1041
        %1427 = vmatpush.msra.mxu0 %v1038
        %1428 = vmatpush.msra.mxu0 %v1035
        %1429 = vmatpush.msra.mxu0 %v1032
        %1430 = vmatpush.msra.mxu0 %v1029
        %1431 = vmatpush.msra.mxu0 %v1026
        %1432 = vmatpush.msra.mxu0 %v1023
        %1433 = vmatpush.msra.mxu0 %v1020
        %1434 = vmatmul.f32.gmra.mxu0 %v980
        %v1435 = vpop.f32.mrf.mxu0
        %v1436 = vadd.f32 %v1118, %v1435
        %1437 = vmatmul.f32.gmra.mxu0 %v982
        %v1438 = vpop.f32.mrf.mxu0
        %v1439 = vadd.f32 %v1118, %v1438
        %1440 = vmatmul.f32.gmra.mxu0 %v984
        %v1441 = vpop.f32.mrf.mxu0
        %v1442 = vadd.f32 %v1118, %v1441
        %1443 = vmatmul.f32.gmra.mxu0 %v986
        %v1444 = vpop.f32.mrf.mxu0
        %v1445 = vadd.f32 %v1118, %v1444
        %1446 = vmatmul.f32.gmra.mxu0 %v988
        %v1447 = vpop.f32.mrf.mxu0
        %v1448 = vadd.f32 %v1118, %v1447
        %1449 = vmatmul.f32.gmra.mxu0 %v990
        %v1450 = vpop.f32.mrf.mxu0
        %v1451 = vadd.f32 %v1118, %v1450
        %1452 = vmatmul.f32.gmra.mxu0 %v992
        %v1453 = vpop.f32.mrf.mxu0
        %v1454 = vadd.f32 %v1118, %v1453
        %1455 = vmatmul.f32.gmra.mxu0 %v994
        %v1456 = vpop.f32.mrf.mxu0
        %v1457 = vadd.f32 %v1118, %v1456
        %1458 = vmatmul.f32.gmra.mxu0 %v996
        %v1459 = vpop.f32.mrf.mxu0
        %v1460 = vadd.f32 %v1118, %v1459
        %1461 = vmatmul.f32.gmra.mxu0 %v998
        %v1462 = vpop.f32.mrf.mxu0
        %v1463 = vadd.f32 %v1118, %v1462
        %1464 = vmatmul.f32.gmra.mxu0 %v1000
        %v1465 = vpop.f32.mrf.mxu0
        %v1466 = vadd.f32 %v1118, %v1465
        %1467 = vmatmul.f32.gmra.mxu0 %v1002
        %v1468 = vpop.f32.mrf.mxu0
        %v1469 = vadd.f32 %v1118, %v1468
        %1470 = vmatmul.f32.gmra.mxu0 %v1004
        %v1471 = vpop.f32.mrf.mxu0
        %v1472 = vadd.f32 %v1118, %v1471
        %1473 = vmatmul.f32.gmra.mxu0 %v1006
        %v1474 = vpop.f32.mrf.mxu0
        %v1475 = vadd.f32 %v1118, %v1474
        %1476 = vmatmul.f32.gmra.mxu0 %v1008
        %v1477 = vpop.f32.mrf.mxu0
        %v1478 = vadd.f32 %v1118, %v1477
        %1479 = vmatmul.f32.gmra.mxu0 %v1010
        %v1480 = vpop.f32.mrf.mxu0
        %v1481 = vadd.f32 %v1118, %v1480
        %1482 = vmatmul.f32.gmra.mxu0 %v1012
        %v1483 = vpop.f32.mrf.mxu0
        %v1484 = vadd.f32 %v1118, %v1483
        %1485 = vmatmul.f32.gmra.mxu0 %v1014
        %v1486 = vpop.f32.mrf.mxu0
        %v1487 = vadd.f32 %v1118, %v1486
        %1488 = vmatmul.f32.gmra.mxu0 %v1016
        %v1489 = vpop.f32.mrf.mxu0
        %v1490 = vadd.f32 %v1118, %v1489
        %1491 = vdwg.mxu0
        %1492 = vmatpush.msra.mxu0 %v1113
        %1493 = vmatpush.msra.mxu0 %v1110
        %1494 = vmatpush.msra.mxu0 %v1107
        %1495 = vmatpush.msra.mxu0 %v1104
        %1496 = vmatpush.msra.mxu0 %v1101
        %1497 = vmatpush.msra.mxu0 %v1098
        %1498 = vmatpush.msra.mxu0 %v1095
        %1499 = vmatpush.msra.mxu0 %v1092
        %1500 = vmatpush.msra.mxu0 %v1089
        %1501 = vmatpush.msra.mxu0 %v1086
        %1502 = vmatpush.msra.mxu0 %v1083
        %1503 = vmatpush.msra.mxu0 %v1080
        %1504 = vmatpush.msra.mxu0 %v1077
        %1505 = vmatpush.msra.mxu0 %v1074
        %1506 = vmatpush.msra.mxu0 %v1071
        %1507 = vmatpush.msra.mxu0 %v1068
        %1508 = vmatmul.f32.gmra.mxu0 %v981
        %v1509 = vpop.f32.mrf.mxu0
        %v1510 = vadd.f32 %v1436, %v1509
        %1511 = vmatmul.f32.gmra.mxu0 %v983
        %v1512 = vpop.f32.mrf.mxu0
        %v1513 = vadd.f32 %v1439, %v1512
        %1514 = vmatmul.f32.gmra.mxu0 %v985
        %v1515 = vpop.f32.mrf.mxu0
        %v1516 = vadd.f32 %v1442, %v1515
        %1517 = vmatmul.f32.gmra.mxu0 %v987
        %v1518 = vpop.f32.mrf.mxu0
        %v1519 = vadd.f32 %v1445, %v1518
        %1520 = vmatmul.f32.gmra.mxu0 %v989
        %v1521 = vpop.f32.mrf.mxu0
        %v1522 = vadd.f32 %v1448, %v1521
        %1523 = vmatmul.f32.gmra.mxu0 %v991
        %v1524 = vpop.f32.mrf.mxu0
        %v1525 = vadd.f32 %v1451, %v1524
        %1526 = vmatmul.f32.gmra.mxu0 %v993
        %v1527 = vpop.f32.mrf.mxu0
        %v1528 = vadd.f32 %v1454, %v1527
        %1529 = vmatmul.f32.gmra.mxu0 %v995
        %v1530 = vpop.f32.mrf.mxu0
        %v1531 = vadd.f32 %v1457, %v1530
        %1532 = vmatmul.f32.gmra.mxu0 %v997
        %v1533 = vpop.f32.mrf.mxu0
        %v1534 = vadd.f32 %v1460, %v1533
        %1535 = vmatmul.f32.gmra.mxu0 %v999
        %v1536 = vpop.f32.mrf.mxu0
        %v1537 = vadd.f32 %v1463, %v1536
        %1538 = vmatmul.f32.gmra.mxu0 %v1001
        %v1539 = vpop.f32.mrf.mxu0
        %v1540 = vadd.f32 %v1466, %v1539
        %1541 = vmatmul.f32.gmra.mxu0 %v1003
        %v1542 = vpop.f32.mrf.mxu0
        %v1543 = vadd.f32 %v1469, %v1542
        %1544 = vmatmul.f32.gmra.mxu0 %v1005
        %v1545 = vpop.f32.mrf.mxu0
        %v1546 = vadd.f32 %v1472, %v1545
        %1547 = vmatmul.f32.gmra.mxu0 %v1007
        %v1548 = vpop.f32.mrf.mxu0
        %v1549 = vadd.f32 %v1475, %v1548
        %1550 = vmatmul.f32.gmra.mxu0 %v1009
        %v1551 = vpop.f32.mrf.mxu0
        %v1552 = vadd.f32 %v1478, %v1551
        %1553 = vmatmul.f32.gmra.mxu0 %v1011
        %v1554 = vpop.f32.mrf.mxu0
        %v1555 = vadd.f32 %v1481, %v1554
        %1556 = vmatmul.f32.gmra.mxu0 %v1013
        %v1557 = vpop.f32.mrf.mxu0
        %v1558 = vadd.f32 %v1484, %v1557
        %1559 = vmatmul.f32.gmra.mxu0 %v1015
        %v1560 = vpop.f32.mrf.mxu0
        %v1561 = vadd.f32 %v1487, %v1560
        %1562 = vmatmul.f32.gmra.mxu0 %v1017
        %v1563 = vpop.f32.mrf.mxu0
        %v1564 = vadd.f32 %v1490, %v1563
        %1565 = vdwg.mxu0
        %1566 = vst [vmem:[%s327] sm:$0xff] %v1214
        %1567 = vst [vmem:[%s327 + $0x8] sm:$0xff] %v1362
        %1568 = vst [vmem:[%s327 + $0x10] sm:$0xff] %v1510
        %1569 = vst [vmem:[%s327 + $0x18] sm:$0xff] %v1217
        %1570 = vst [vmem:[%s327 + $0x20] sm:$0xff] %v1365
        %1571 = vst [vmem:[%s327 + $0x28] sm:$0xff] %v1513
        %1572 = vst [vmem:[%s327 + $0x30] sm:$0xff] %v1220
        %1573 = vst [vmem:[%s327 + $0x38] sm:$0xff] %v1368
        %1574 = vst [vmem:[%s327 + $0x40] sm:$0xff] %v1516
        %1575 = vst [vmem:[%s327 + $0x48] sm:$0xff] %v1223
        %1576 = vst [vmem:[%s327 + $0x50] sm:$0xff] %v1371
        %1577 = vst [vmem:[%s327 + $0x58] sm:$0xff] %v1519
        %1578 = vst [vmem:[%s327 + $0x60] sm:$0xff] %v1226
        %1579 = vst [vmem:[%s327 + $0x68] sm:$0xff] %v1374
        %1580 = vst [vmem:[%s327 + $0x70] sm:$0xff] %v1522
        %1581 = vst [vmem:[%s327 + $0x78] sm:$0xff] %v1229
        %1582 = vst [vmem:[%s327 + $0x80] sm:$0xff] %v1377
        %1583 = vst [vmem:[%s327 + $0x88] sm:$0xff] %v1525
        %1584 = vst [vmem:[%s327 + $0x90] sm:$0xff] %v1232
        %1585 = vst [vmem:[%s327 + $0x98] sm:$0xff] %v1380
        %1586 = vst [vmem:[%s327 + $0xa0] sm:$0xff] %v1528
        %1587 = vst [vmem:[%s327 + $0xa8] sm:$0xff] %v1235
        %1588 = vst [vmem:[%s327 + $0xb0] sm:$0xff] %v1383
        %1589 = vst [vmem:[%s327 + $0xb8] sm:$0xff] %v1531
        %1590 = vst [vmem:[%s327 + $0xc0] sm:$0xff] %v1238
        %1591 = vst [vmem:[%s327 + $0xc8] sm:$0xff] %v1386
        %1592 = vst [vmem:[%s327 + $0xd0] sm:$0xff] %v1534
        %1593 = vst [vmem:[%s327 + $0xd8] sm:$0xff] %v1241
        %1594 = vst [vmem:[%s327 + $0xe0] sm:$0xff] %v1389
        %1595 = vst [vmem:[%s327 + $0xe8] sm:$0xff] %v1537
        %1596 = vst [vmem:[%s327 + $0xf0] sm:$0xff] %v1244
        %1597 = vst [vmem:[%s327 + $0xf8] sm:$0xff] %v1392
        %1598 = vst [vmem:[%s327 + $0x100] sm:$0xff] %v1540
        %1599 = vst [vmem:[%s327 + $0x108] sm:$0xff] %v1247
        %1600 = vst [vmem:[%s327 + $0x110] sm:$0xff] %v1395
        %1601 = vst [vmem:[%s327 + $0x118] sm:$0xff] %v1543
        %1602 = vst [vmem:[%s327 + $0x120] sm:$0xff] %v1250
        %1603 = vst [vmem:[%s327 + $0x128] sm:$0xff] %v1398
        %1604 = vst [vmem:[%s327 + $0x130] sm:$0xff] %v1546
        %1605 = vst [vmem:[%s327 + $0x138] sm:$0xff] %v1253
        %1606 = vst [vmem:[%s327 + $0x140] sm:$0xff] %v1401
        %1607 = vst [vmem:[%s327 + $0x148] sm:$0xff] %v1549
        %1608 = vst [vmem:[%s327 + $0x150] sm:$0xff] %v1256
        %1609 = vst [vmem:[%s327 + $0x158] sm:$0xff] %v1404
        %1610 = vst [vmem:[%s327 + $0x160] sm:$0xff] %v1552
        %1611 = vst [vmem:[%s327 + $0x168] sm:$0xff] %v1259
        %1612 = vst [vmem:[%s327 + $0x170] sm:$0xff] %v1407
        %1613 = vst [vmem:[%s327 + $0x178] sm:$0xff] %v1555
        %1614 = vst [vmem:[%s327 + $0x180] sm:$0xff] %v1262
        %1615 = vst [vmem:[%s327 + $0x188] sm:$0xff] %v1410
        %1616 = vst [vmem:[%s327 + $0x190] sm:$0xff] %v1558
        %1617 = vst [vmem:[%s327 + $0x198] sm:$0xff] %v1265
        %1618 = vst [vmem:[%s327 + $0x1a0] sm:$0xff] %v1413
        %1619 = vst [vmem:[%s327 + $0x1a8] sm:$0xff] %v1561
        %1620 = vst [vmem:[%s327 + $0x1b0] sm:$0xff] %v1268
        %1621 = vst [vmem:[%s327 + $0x1b8] sm:$0xff] %v1416
        %1622 = vst [vmem:[%s327 + $0x1c0] sm:$0xff] %v1564
        %s1623 = sand.u32 %s166, 1
        %s1624 = scalar_lea.sflag [#allocation5], %s1623
        %s1625 = sand.u32 %s166, 1
        %s1626 = smul.addr %s1625, 456
        %s1627 = scalar_lea.vmem [#allocation11], %s1626
        // Predicated region
        $region61: #{tpu_custom_call.1} parent=39 // pred_check
          %p1628 = pneg %p176
        $region62: #{tpu_custom_call.1} parent=39 // pred_check_branch
          %1630 = sbr.rel (%p1628) target = $region64
        $region63: #{tpu_custom_call.1} parent=39 // pred_region
          %s1631 = smul.u32 19, %s28
          %s1632 = smul.u32 3, %s29
          %1634 = vsyncadd %s1624, 0
          %s1635 = smul.addr %s1631, 3
          %s1636 = sadd.s32 %s1632, %s1635
          %s1637 = smul.addr %s1636, 8
          %s1638 = scalar_lea.hbm %s5, %s1637
          %s1639 = sshll.u32 %s1627, 4
          %s1640 = int_to_ptr.vmem [resolvable:$true] %s1639
          %s1641 = sshll.u32 %s1638, 4
          %s1642 = int_to_ptr.hbm [resolvable:$true] %s1641
          %1647 = dma.vmem_to_hbm [thread:$0]  %s1640, 7296, %s1642, %s1624, 384, 384, 24
        $region64: #{tpu_custom_call.1} parent=39 // pred_fallthru
          _
      $region40: #{tpu_custom_call.1} parent=5 // pred_fallthru
        _
      %p1648 = scmp.le.s32.totalorder 2, %s19
      // Predicated region
      $region65: #{tpu_custom_call.1} parent=5 // pred_check
        %p1649 = pneg %p1648
      $region66: #{tpu_custom_call.1} parent=5 // pred_check_branch
        %1651 = sbr.rel (%p1649) target = $region68
      $region67: #{tpu_custom_call.1} parent=5 // pred_region
        %s1652 = ssub.s32 %s19, 2
        // Predicated region
        $region69: #{tpu_custom_call.1} parent=67 // pred_check
          %p1653 = pneg %p182
        $region70: #{tpu_custom_call.1} parent=67 // pred_check_branch
          %1655 = sbr.rel (%p1653) target = $region72
        $region71: #{tpu_custom_call.1} parent=67 // pred_region
          %s1656 = sand.u32 %s167, 1
          %s1657 = scalar_lea.sflag [#allocation5], %s1656
          %s1658 = sand.u32 %s167, 1
          %s1659 = smul.addr %s1658, 456
          %s1660 = scalar_lea.vmem [#allocation11], %s1659
          %1662 = dma.done %s1657, 7296
        $region72: #{tpu_custom_call.1} parent=67 // pred_fallthru
          _
      $region68: #{tpu_custom_call.1} parent=5 // pred_fallthru
        _
    $region6: #{tpu_custom_call.1} parent=1 // loop_footer
      %s23 = sadd.s32 1, %s19
    $region7: #{tpu_custom_call.1} parent=1 // loop_footer_branch
      %18 = sbr.rel target = $region3
    $region8: #{tpu_custom_call.1} parent=1 // loop_exit
      _
    %1663 = vsyncpa [#allocation4], 1
    %s1664 = scalar_lea.sflag [#allocation4], 1
    %1665 = vsyncpa %s1664, 1
    %1666 = vsyncpa [#allocation7], 1
    %1667 = vsyncpa [#allocation10], 1
    %1668 = vsyncpa [#allocation5], 1
    %s1669 = scalar_lea.sflag [#allocation5], 1
    %1670 = vsyncpa %s1669, 1

// kernel: tpu_custom_call.1
$region0: #{tpu_custom_call.1}
  #allocation0 [shape = 'u32[]', space=smem, size = 0x4, offset = 0x4, fixed_abs, tag = 'smem constant byte address 0x4 - core index']
  #allocation1 [shape = 'u32[72,128]{1,0:T(1,128)}', space=vmem, size = 0x9000, scoped, tag = 'internal scratch']
  #allocation2 [shape = 'f32[152,256]{1,0:T(8,128)}', space=vmem, size = 0x26000, scoped, tag = 'scratch operand']
  %s0 = inlined_call_operand.hbm [shape: f32[304,256], index: 0, kind: input, shape index: {}]
  %s1 = inlined_call_operand.hbm [shape: f32[1,256], index: 1, kind: input, shape index: {}]
  %s2 = inlined_call_operand.hbm [shape: f32[1,256], index: 2, kind: input, shape index: {}]
  %s3 = inlined_call_operand.hbm [shape: f32[256,384], index: 3, kind: input, shape index: {}]
  %s4 = inlined_call_operand.vmem [shape: f32[1,384], index: 4, kind: input, shape index: {}]
  %s5 = inlined_call_operand.hbm [shape: f32[304,384], index: 5, kind: output, shape index: {}]
  %s6 = sld [smem:[#allocation0]]
  $region73: #{tpu_custom_call.1} parent=0
    _
  %s8 = ssub.s32 1, %s6
  %s9 = scalar_select 0, %s8, %s6
  $region1: #{tpu_custom_call.1} parent=0
    #allocation3 [shape = 'u8[311296]{0}', space=vmem, size = 0x4c000, scoped, tag = 'input window, operand 0']
    #allocation4 [shape = 's32[2]{0}', space=sflag, size = 0x8, scoped, tag = 'scoped memory for tpu_custom_call.1']
    #allocation5 [shape = 's32[2]{0}', space=sflag, size = 0x8, scoped, tag = 'scoped memory for tpu_custom_call.1']
    #allocation6 [shape = 'u8[1024]{0}', space=vmem, size = 0x400, scoped, tag = 'input window, operand 1, single buffered']
    #allocation7 [shape = 's32[1]{0}', space=sflag, size = 0x4, scoped, tag = 'scoped memory for tpu_custom_call.1']
    #allocation8 [shape = 'u8[1024]{0}', space=vmem, size = 0x400, scoped, tag = 'input window, operand 2, single buffered']
    #allocation9 [shape = 'u8[393216]{0}', space=vmem, size = 0x60000, scoped, tag = 'input window, operand 3, single buffered']
    #allocation10 [shape = 's32[1]{0}', space=sflag, size = 0x4, scoped, tag = 'scoped memory for tpu_custom_call.1']
    #allocation11 [shape = 'u8[466944]{0}', space=vmem, size = 0x72000, scoped, tag = 'output window, operand 0']
    %10 = vsyncpa [#allocation4], 0
    %s11 = scalar_lea.sflag [#allocation4], 1
    %12 = vsyncpa %s11, 0
    %13 = vsyncpa [#allocation7], 0
    %14 = vsyncpa [#allocation10], 0
    %15 = vsyncpa [#allocation5], 0
    %s16 = scalar_lea.sflag [#allocation5], 1
    %17 = vsyncpa %s16, 0
    loop: start=0, step=1, limit=4
    $region2: #{tpu_custom_call.1} parent=1 // loop_pre_header
      _
    $region3: #{tpu_custom_call.1} parent=1 // loop_header
      %s19 = sphi 0, %s23
      %p20 = scmp.ge.s32.totalorder %s19, 4
      %s26 = sphi 0, %s38
      %s27 = sphi 0, %s34
      %s28 = sphi 0, %s26
      %s29 = sphi 0, %s27
      %s30 = sphi 0, %s28
      %s31 = sphi 0, %s29
      %s41 = sphi 0, %s43
      %s44 = sphi 0, %s41
      %s45 = sphi 0, %s44
      %s61 = sphi 0, %s45
      %s65 = sphi 0, %s65
      %s67 = sphi 0, %s65
      %s68 = sphi 0, %s67
      %s82 = sphi 0, %s68
      %s86 = sphi 0, %s86
      %s88 = sphi 0, %s86
      %s89 = sphi 0, %s88
      %s103 = sphi 0, %s89
      %s109 = sphi 0, %s111
      %s112 = sphi 0, %s109
      %s113 = sphi 0, %s112
      %s129 = sphi 0, %s113
      %s135 = sphi 0, %s137
      %s138 = sphi 0, %s135
      %s139 = sphi 0, %s138
      %s155 = sphi 0, %s139
      %s163 = sphi 0, %s165
      %s166 = sphi 0, %s163
      %s167 = sphi 0, %s166
      %s183 = sphi 0, %s167
    $region4: #{tpu_custom_call.1} parent=1 // loop_header_branch
      %22 = sbr.rel (%p20) target = $region8
    $region5: #{tpu_custom_call.1} parent=1 // loop_body
      %s24 = ssub.s32 %s19, 1
      %s25 = ssub.s32 %s19, 2
      %s32 = sadd.s32 1, %s27
      %p33 = scmp.ge.s32.totalorder %s32, 1
      %s34 = scalar_select %p33, 0, %s32
      %s35 = sadd.s32 1, %s26
      %s36 = scalar_select %p33, %s35, %s26
      %p37 = scmp.ge.s32.totalorder %s36, 2
      %s38 = scalar_select %p37, 0, %s36
      %s39 = ssub.s32 %s26, %s38
      %p40 = scmp.eq.s32.totalorder %s39, 0
      %s42 = sadd.s32 %s41, 1
      %s43 = scalar_select %p40, %s41, %s42
      %p46 = pneg %p40
      %p47 = scmp.eq.s32.totalorder %s19, 1
      %p48 = por %p46, %p47
      %p49 = scmp.ne.s32.totalorder %s41, %s44
      %p50 = scmp.eq.s32.totalorder %s19, 0
      %p51 = por %p49, %p50
      %p52 = scmp.ne.s32.totalorder %s41, %s44
      %p53 = scmp.eq.s32.totalorder %s24, 1
      %p54 = por %p52, %p53
      %p55 = scmp.ne.s32.totalorder %s44, %s45
      %p56 = scmp.eq.s32.totalorder %s24, 0
      %p57 = por %p55, %p56
      %p58 = scmp.ne.s32.totalorder %s44, %s45
      %p59 = scmp.eq.s32.totalorder %s25, 1
      %p60 = por %p58, %p59
      %p62 = scmp.ne.s32.totalorder %s45, %s61
      %p63 = scmp.eq.s32.totalorder %s25, 0
      %p64 = por %p62, %p63
      %s66 = sadd.s32 %s65, 1
      %p69 = scmp.eq.s32.totalorder %s19, 1
      %p70 = scmp.ne.s32.totalorder %s65, %s67
      %p71 = scmp.eq.s32.totalorder %s19, 0
      %p72 = por %p70, %p71
      %p73 = scmp.ne.s32.totalorder %s65, %s67
      %p74 = scmp.eq.s32.totalorder %s24, 1
      %p75 = por %p73, %p74
      %p76 = scmp.ne.s32.totalorder %s67, %s68
      %p77 = scmp.eq.s32.totalorder %s24, 0
      %p78 = por %p76, %p77
      %p79 = scmp.ne.s32.totalorder %s67, %s68
      %p80 = scmp.eq.s32.totalorder %s25, 1
      %p81 = por %p79, %p80
      %p83 = scmp.ne.s32.totalorder %s68, %s82
      %p84 = scmp.eq.s32.totalorder %s25, 0
      %p85 = por %p83, %p84
      %s87 = sadd.s32 %s86, 1
      %p90 = scmp.eq.s32.totalorder %s19, 1
      %p91 = scmp.ne.s32.totalorder %s86, %s88
      %p92 = scmp.eq.s32.totalorder %s19, 0
      %p93 = por %p91, %p92
      %p94 = scmp.ne.s32.totalorder %s86, %s88
      %p95 = scmp.eq.s32.totalorder %s24, 1
      %p96 = por %p94, %p95
      %p97 = scmp.ne.s32.totalorder %s88, %s89
      %p98 = scmp.eq.s32.totalorder %s24, 0
      %p99 = por %p97, %p98
      %p100 = scmp.ne.s32.totalorder %s88, %s89
      %p101 = scmp.eq.s32.totalorder %s25, 1
      %p102 = por %p100, %p101
      %p104 = scmp.ne.s32.totalorder %s89, %s103
      %p105 = scmp.eq.s32.totalorder %s25, 0
      %p106 = por %p104, %p105
      %s107 = ssub.s32 %s27, %s34
      %p108 = scmp.eq.s32.totalorder %s107, 0
      %s110 = sadd.s32 %s109, 1
      %s111 = scalar_select %p108, %s109, %s110
      %p114 = pneg %p108
      %p115 = scmp.eq.s32.totalorder %s19, 1
      %p116 = por %p114, %p115
      %p117 = scmp.ne.s32.totalorder %s109, %s112
      %p118 = scmp.eq.s32.totalorder %s19, 0
      %p119 = por %p117, %p118
      %p120 = scmp.ne.s32.totalorder %s109, %s112
      %p121 = scmp.eq.s32.totalorder %s24, 1
      %p122 = por %p120, %p121
      %p123 = scmp.ne.s32.totalorder %s112, %s113
      %p124 = scmp.eq.s32.totalorder %s24, 0
      %p125 = por %p123, %p124
      %p126 = scmp.ne.s32.totalorder %s112, %s113
      %p127 = scmp.eq.s32.totalorder %s25, 1
      %p128 = por %p126, %p127
      %p130 = scmp.ne.s32.totalorder %s113, %s129
      %p131 = scmp.eq.s32.totalorder %s25, 0
      %p132 = por %p130, %p131
      %s133 = ssub.s32 %s27, %s34
      %p134 = scmp.eq.s32.totalorder %s133, 0
      %s136 = sadd.s32 %s135, 1
      %s137 = scalar_select %p134, %s135, %s136
      %p140 = pneg %p134
      %p141 = scmp.eq.s32.totalorder %s19, 1
      %p142 = por %p140, %p141
      %p143 = scmp.ne.s32.totalorder %s135, %s138
      %p144 = scmp.eq.s32.totalorder %s19, 0
      %p145 = por %p143, %p144
      %p146 = scmp.ne.s32.totalorder %s135, %s138
      %p147 = scmp.eq.s32.totalorder %s24, 1
      %p148 = por %p146, %p147
      %p149 = scmp.ne.s32.totalorder %s138, %s139
      %p150 = scmp.eq.s32.totalorder %s24, 0
      %p151 = por %p149, %p150
      %p152 = scmp.ne.s32.totalorder %s138, %s139
      %p153 = scmp.eq.s32.totalorder %s25, 1
      %p154 = por %p152, %p153
      %p156 = scmp.ne.s32.totalorder %s139, %s155
      %p157 = scmp.eq.s32.totalorder %s25, 0
      %p158 = por %p156, %p157
      %s159 = ssub.s32 %s26, %s38
      %s160 = ssub.s32 %s27, %s34
      %s161 = sor.u32 %s159, %s160
      %p162 = scmp.eq.s32.totalorder %s161, 0
      %s164 = sadd.s32 %s163, 1
      %s165 = scalar_select %p162, %s163, %s164
      %p168 = pneg %p162
      %p169 = scmp.eq.s32.totalorder %s19, 1
      %p170 = por %p168, %p169
      %p171 = scmp.ne.s32.totalorder %s163, %s166
      %p172 = scmp.eq.s32.totalorder %s19, 0
      %p173 = por %p171, %p172
      %p174 = scmp.ne.s32.totalorder %s163, %s166
      %p175 = scmp.eq.s32.totalorder %s24, 1
      %p176 = por %p174, %p175
      %p177 = scmp.ne.s32.totalorder %s166, %s167
      %p178 = scmp.eq.s32.totalorder %s24, 0
      %p179 = por %p177, %p178
      %p180 = scmp.ne.s32.totalorder %s166, %s167
      %p181 = scmp.eq.s32.totalorder %s25, 1
      %p182 = por %p180, %p181
      %p184 = scmp.ne.s32.totalorder %s167, %s183
      %p185 = scmp.eq.s32.totalorder %s25, 0
      %p186 = por %p184, %p185
      %p187 = scmp.le.s32.totalorder 1, %s19
      %p188 = scmp.lt.s32.totalorder %s19, 3
      %p189 = pnand %p187, %p188
      %p190 = pneg %p189
      // Predicated region
      $region9: #{tpu_custom_call.1} parent=5 // pred_check
        _
      $region10: #{tpu_custom_call.1} parent=5 // pred_check_branch
        %192 = sbr.rel (%p189) target = $region12
      $region11: #{tpu_custom_call.1} parent=5 // pred_region
        %s193 = ssub.s32 %s19, 1
        // Predicated region
        $region13: #{tpu_custom_call.1} parent=11 // pred_check
          %p194 = pneg %p78
        $region14: #{tpu_custom_call.1} parent=11 // pred_check_branch
          %196 = sbr.rel (%p194) target = $region16
        $region15: #{tpu_custom_call.1} parent=11 // pred_region
          %198 = vsyncadd [#allocation7], 0
          %s200 = sshll.u32 %s1, 4
          %s201 = int_to_ptr.hbm [resolvable:$true] %s200
          %s202 = sshll.u32 [#allocation6], 4
          %s203 = int_to_ptr.vmem [resolvable:$true] %s202
          %205 = dma.hbm_to_vmem [thread:$0]  %s201, 32, %s203, [#allocation7]
        $region16: #{tpu_custom_call.1} parent=11 // pred_fallthru
          _
        // Predicated region
        $region17: #{tpu_custom_call.1} parent=11 // pred_check
          %p206 = pneg %p99
        $region18: #{tpu_custom_call.1} parent=11 // pred_check_branch
          %208 = sbr.rel (%p206) target = $region20
        $region19: #{tpu_custom_call.1} parent=11 // pred_region
          %210 = vsyncadd [#allocation7], 0
          %s212 = sshll.u32 %s2, 4
          %s213 = int_to_ptr.hbm [resolvable:$true] %s212
          %s214 = sshll.u32 [#allocation8], 4
          %s215 = int_to_ptr.vmem [resolvable:$true] %s214
          %217 = dma.hbm_to_vmem [thread:$0]  %s213, 32, %s215, [#allocation7]
        $region20: #{tpu_custom_call.1} parent=11 // pred_fallthru
          _
        // Predicated region
        $region21: #{tpu_custom_call.1} parent=11 // pred_check
          %p218 = pneg %p125
        $region22: #{tpu_custom_call.1} parent=11 // pred_check_branch
          %220 = sbr.rel (%p218) target = $region24
        $region23: #{tpu_custom_call.1} parent=11 // pred_region
          %s221 = smul.u32 3, %s29
          %223 = vsyncadd [#allocation10], 0
          %s224 = smul.addr %s221, 8
          %s225 = scalar_lea.hbm %s3, %s224
          %s226 = sshll.u32 %s225, 4
          %s227 = int_to_ptr.hbm [resolvable:$true] %s226
          %s228 = sshll.u32 [#allocation9], 4
          %s229 = int_to_ptr.vmem [resolvable:$true] %s228
          %234 = dma.hbm_to_vmem [thread:$0]  %s227, 12288, %s229, [#allocation10], 384, 384, 24
        $region24: #{tpu_custom_call.1} parent=11 // pred_fallthru
          _
        // Predicated region
        $region25: #{tpu_custom_call.1} parent=11 // pred_check
          %p235 = pneg %p151
        $region26: #{tpu_custom_call.1} parent=11 // pred_check_branch
          %237 = sbr.rel (%p235) target = $region28
        $region27: #{tpu_custom_call.1} parent=11 // pred_region
          %s238 = smul.u32 3, %s29
          %p239 = scmp.lt.s32.totalorder %s238, 2
          %s240 = scalar_select %p239, %s238, 2
          %s241 = scalar_lea.vmem %s4, %s240
          %s242 = smul.u32 3, %s29
        $region28: #{tpu_custom_call.1} parent=11 // pred_fallthru
          _
      $region12: #{tpu_custom_call.1} parent=5 // pred_fallthru
        _
      %p243 = scmp.lt.s32.totalorder %s19, 2
      // Predicated region
      $region29: #{tpu_custom_call.1} parent=5 // pred_check
        %p244 = pneg %p243
      $region30: #{tpu_custom_call.1} parent=5 // pred_check_branch
        %246 = sbr.rel (%p244) target = $region32
      $region31: #{tpu_custom_call.1} parent=5 // pred_region
        // Predicated region
        $region33: #{tpu_custom_call.1} parent=31 // pred_check
          %p247 = pneg %p51
        $region34: #{tpu_custom_call.1} parent=31 // pred_check_branch
          %249 = sbr.rel (%p247) target = $region36
        $region35: #{tpu_custom_call.1} parent=31 // pred_region
          %s250 = sand.u32 %s41, 1
          %s251 = scalar_lea.sflag [#allocation4], %s250
          %s252 = sand.u32 %s41, 1
          %s253 = smul.addr %s252, 304
          %s254 = scalar_lea.vmem [#allocation3], %s253
          %s255 = smul.u32 19, %s26
          %257 = vsyncadd %s251, 0
          %s258 = smul.addr %s255, 2
          %s259 = smul.addr %s258, 8
          %s260 = scalar_lea.hbm %s0, %s259
          %s261 = sshll.u32 %s260, 4
          %s262 = int_to_ptr.hbm [resolvable:$true] %s261
          %s263 = sshll.u32 %s254, 4
          %s264 = int_to_ptr.vmem [resolvable:$true] %s263
          %269 = dma.hbm_to_vmem [thread:$0]  %s262, 4864, %s264, %s251, 256, 256, 16
        $region36: #{tpu_custom_call.1} parent=31 // pred_fallthru
          _
      $region32: #{tpu_custom_call.1} parent=5 // pred_fallthru
        _
      %p270 = scmp.le.s32.totalorder 1, %s19
      %p271 = scmp.lt.s32.totalorder %s19, 3
      %p272 = pnand %p270, %p271
      %p273 = pneg %p272
      // Predicated region
      $region37: #{tpu_custom_call.1} parent=5 // pred_check
        _
      $region38: #{tpu_custom_call.1} parent=5 // pred_check_branch
        %275 = sbr.rel (%p272) target = $region40
      $region39: #{tpu_custom_call.1} parent=5 // pred_region
        %s276 = ssub.s32 %s19, 1
        %s277 = sand.u32 %s44, 1
        %s278 = scalar_lea.sflag [#allocation4], %s277
        %s279 = sand.u32 %s44, 1
        %s280 = smul.addr %s279, 304
        %s281 = scalar_lea.vmem [#allocation3], %s280
        // Predicated region
        $region41: #{tpu_custom_call.1} parent=39 // pred_check
          %p282 = pneg %p57
        $region42: #{tpu_custom_call.1} parent=39 // pred_check_branch
          %284 = sbr.rel (%p282) target = $region44
        $region43: #{tpu_custom_call.1} parent=39 // pred_region
          %286 = dma.done %s278, 4864
        $region44: #{tpu_custom_call.1} parent=39 // pred_fallthru
          _
        // Predicated region
        $region45: #{tpu_custom_call.1} parent=39 // pred_check
          %p287 = pneg %p78
        $region46: #{tpu_custom_call.1} parent=39 // pred_check_branch
          %289 = sbr.rel (%p287) target = $region48
        $region47: #{tpu_custom_call.1} parent=39 // pred_region
          %291 = dma.done [#allocation7], 32
        $region48: #{tpu_custom_call.1} parent=39 // pred_fallthru
          _
        // Predicated region
        $region49: #{tpu_custom_call.1} parent=39 // pred_check
          %p292 = pneg %p99
        $region50: #{tpu_custom_call.1} parent=39 // pred_check_branch
          %294 = sbr.rel (%p292) target = $region52
        $region51: #{tpu_custom_call.1} parent=39 // pred_region
          %296 = dma.done [#allocation7], 32
        $region52: #{tpu_custom_call.1} parent=39 // pred_fallthru
          _
        // Predicated region
        $region53: #{tpu_custom_call.1} parent=39 // pred_check
          %p297 = pneg %p125
        $region54: #{tpu_custom_call.1} parent=39 // pred_check_branch
          %299 = sbr.rel (%p297) target = $region56
        $region55: #{tpu_custom_call.1} parent=39 // pred_region
          %301 = dma.done [#allocation10], 12288
        $region56: #{tpu_custom_call.1} parent=39 // pred_fallthru
          _
        %s302 = sand.u32 %s44, 1
        %s303 = scalar_lea.sflag [#allocation4], %s302
        %s304 = sand.u32 %s44, 1
        %s305 = smul.addr %s304, 304
        %s306 = scalar_lea.vmem [#allocation3], %s305
        %p307 = pneg %p57
        %p308 = pneg %p54
        %p309 = pneg %p78
        %p310 = pneg %p75
        %p311 = pneg %p99
        %p312 = pneg %p96
        %p313 = pneg %p125
        %p314 = pneg %p122
        %s315 = smul.u32 3, %s29
        %p316 = scmp.lt.s32.totalorder %s315, 2
        %s317 = scalar_select %p316, %s315, 2
        %s318 = scalar_lea.vmem %s4, %s317
        %p319 = pneg %p151
        %p320 = pneg %p148
        %p321 = pneg %p179
        %p322 = pneg %p176
        %s323 = sand.u32 %s166, 1
        %s324 = scalar_lea.sflag [#allocation5], %s323
        %s325 = sand.u32 %s166, 1
        %s326 = smul.addr %s325, 456
        %s327 = scalar_lea.vmem [#allocation11], %s326
        %s328 = smul.u32 19, %s28
        %s329 = smul.u32 3, %s29
        %s330 = smul.u32 3, %s29
        %p331 = scmp.lt.s32.totalorder %s330, 2
        %s332 = scalar_select %p331, %s330, 2
        %s333 = scalar_lea.vmem %s4, %s332
        %s334 = smul.u32 3, %s29
        %s335 = smul.u32 19, %s28
        %s336 = smul.u32 3, %s29
        %p337 = scmp.eq.s32.totalorder %s29, 0
        // Predicated region
        $region57: #{tpu_custom_call.1} parent=39 // pred_check
          %p338 = pneg %p337
        $region58: #{tpu_custom_call.1} parent=39 // pred_check_branch
          %340 = sbr.rel (%p338) target = $region60
        $region59: #{tpu_custom_call.1} parent=39 // pred_region
          %v341 = vld [vmem:[%s281] sm:$0xff]
          %v342 = vld [vmem:[%s281 + $0x8] sm:$0xff]
          %v343 = vld [vmem:[%s281 + $0x10] sm:$0xff]
          %v344 = vld [vmem:[%s281 + $0x18] sm:$0xff]
          %v345 = vld [vmem:[%s281 + $0x20] sm:$0xff]
          %v346 = vld [vmem:[%s281 + $0x28] sm:$0xff]
          %v347 = vld [vmem:[%s281 + $0x30] sm:$0xff]
          %v348 = vld [vmem:[%s281 + $0x38] sm:$0xff]
          %v349 = vld [vmem:[%s281 + $0x40] sm:$0xff]
          %v350 = vld [vmem:[%s281 + $0x48] sm:$0xff]
          %v351 = vld [vmem:[%s281 + $0x50] sm:$0xff]
          %v352 = vld [vmem:[%s281 + $0x58] sm:$0xff]
          %v353 = vld [vmem:[%s281 + $0x60] sm:$0xff]
          %v354 = vld [vmem:[%s281 + $0x68] sm:$0xff]
          %v355 = vld [vmem:[%s281 + $0x70] sm:$0xff]
          %v356 = vld [vmem:[%s281 + $0x78] sm:$0xff]
          %v357 = vld [vmem:[%s281 + $0x80] sm:$0xff]
          %v358 = vld [vmem:[%s281 + $0x88] sm:$0xff]
          %v359 = vld [vmem:[%s281 + $0x90] sm:$0xff]
          %v360 = vld [vmem:[%s281 + $0x98] sm:$0xff]
          %v361 = vld [vmem:[%s281 + $0xa0] sm:$0xff]
          %v362 = vld [vmem:[%s281 + $0xa8] sm:$0xff]
          %v363 = vld [vmem:[%s281 + $0xb0] sm:$0xff]
          %v364 = vld [vmem:[%s281 + $0xb8] sm:$0xff]
          %v365 = vld [vmem:[%s281 + $0xc0] sm:$0xff]
          %v366 = vld [vmem:[%s281 + $0xc8] sm:$0xff]
          %v367 = vld [vmem:[%s281 + $0xd0] sm:$0xff]
          %v368 = vld [vmem:[%s281 + $0xd8] sm:$0xff]
          %v369 = vld [vmem:[%s281 + $0xe0] sm:$0xff]
          %v370 = vld [vmem:[%s281 + $0xe8] sm:$0xff]
          %v371 = vld [vmem:[%s281 + $0xf0] sm:$0xff]
          %v372 = vld [vmem:[%s281 + $0xf8] sm:$0xff]
          %v373 = vld [vmem:[%s281 + $0x100] sm:$0xff]
          %v374 = vld [vmem:[%s281 + $0x108] sm:$0xff]
          %v375 = vld [vmem:[%s281 + $0x110] sm:$0xff]
          %v376 = vld [vmem:[%s281 + $0x118] sm:$0xff]
          %v377 = vld [vmem:[%s281 + $0x120] sm:$0xff]
          %v378 = vld [vmem:[%s281 + $0x128] sm:$0xff]
          %v379 = vadd.f32 %v341, %v342
          %380 = vadd.xlane.f32.xlu0 %v379
          %v381 = vpop.xlane.xlu0 %380
          %v382 = vadd.f32 %v343, %v344
          %383 = vadd.xlane.f32.xlu0 %v382
          %v384 = vpop.xlane.xlu0 %383
          %v385 = vadd.f32 %v345, %v346
          %386 = vadd.xlane.f32.xlu0 %v385
          %v387 = vpop.xlane.xlu0 %386
          %v388 = vadd.f32 %v347, %v348
          %389 = vadd.xlane.f32.xlu0 %v388
          %v390 = vpop.xlane.xlu0 %389
          %v391 = vadd.f32 %v349, %v350
          %392 = vadd.xlane.f32.xlu0 %v391
          %v393 = vpop.xlane.xlu0 %392
          %v394 = vadd.f32 %v351, %v352
          %395 = vadd.xlane.f32.xlu0 %v394
          %v396 = vpop.xlane.xlu0 %395
          %v397 = vadd.f32 %v353, %v354
          %398 = vadd.xlane.f32.xlu0 %v397
          %v399 = vpop.xlane.xlu0 %398
          %v400 = vadd.f32 %v355, %v356
          %401 = vadd.xlane.f32.xlu0 %v400
          %v402 = vpop.xlane.xlu0 %401
          %v403 = vadd.f32 %v357, %v358
          %404 = vadd.xlane.f32.xlu0 %v403
          %v405 = vpop.xlane.xlu0 %404
          %v406 = vadd.f32 %v359, %v360
          %407 = vadd.xlane.f32.xlu0 %v406
          %v408 = vpop.xlane.xlu0 %407
          %v409 = vadd.f32 %v361, %v362
          %410 = vadd.xlane.f32.xlu0 %v409
          %v411 = vpop.xlane.xlu0 %410
          %v412 = vadd.f32 %v363, %v364
          %413 = vadd.xlane.f32.xlu0 %v412
          %v414 = vpop.xlane.xlu0 %413
          %v415 = vadd.f32 %v365, %v366
          %416 = vadd.xlane.f32.xlu0 %v415
          %v417 = vpop.xlane.xlu0 %416
          %v418 = vadd.f32 %v367, %v368
          %419 = vadd.xlane.f32.xlu0 %v418
          %v420 = vpop.xlane.xlu0 %419
          %v421 = vadd.f32 %v369, %v370
          %422 = vadd.xlane.f32.xlu0 %v421
          %v423 = vpop.xlane.xlu0 %422
          %v424 = vadd.f32 %v371, %v372
          %425 = vadd.xlane.f32.xlu0 %v424
          %v426 = vpop.xlane.xlu0 %425
          %v427 = vadd.f32 %v373, %v374
          %428 = vadd.xlane.f32.xlu0 %v427
          %v429 = vpop.xlane.xlu0 %428
          %v430 = vadd.f32 %v375, %v376
          %431 = vadd.xlane.f32.xlu0 %v430
          %v432 = vpop.xlane.xlu0 %431
          %v433 = vadd.f32 %v377, %v378
          %434 = vadd.xlane.f32.xlu0 %v433
          %v435 = vpop.xlane.xlu0 %434
          %v436 = vmul.f32 %v381, 0.00390625
          %v437 = vmul.f32 %v384, 0.00390625
          %v438 = vmul.f32 %v387, 0.00390625
          %v439 = vmul.f32 %v390, 0.00390625
          %v440 = vmul.f32 %v393, 0.00390625
          %v441 = vmul.f32 %v396, 0.00390625
          %v442 = vmul.f32 %v399, 0.00390625
          %v443 = vmul.f32 %v402, 0.00390625
          %v444 = vmul.f32 %v405, 0.00390625
          %v445 = vmul.f32 %v408, 0.00390625
          %v446 = vmul.f32 %v411, 0.00390625
          %v447 = vmul.f32 %v414, 0.00390625
          %v448 = vmul.f32 %v417, 0.00390625
          %v449 = vmul.f32 %v420, 0.00390625
          %v450 = vmul.f32 %v423, 0.00390625
          %v451 = vmul.f32 %v426, 0.00390625
          %v452 = vmul.f32 %v429, 0.00390625
          %v453 = vmul.f32 %v432, 0.00390625
          %v454 = vmul.f32 %v435, 0.00390625
          %v455 = vsub.f32 %v341, %v436
          %v456 = vsub.f32 %v342, %v436
          %v457 = vsub.f32 %v343, %v437
          %v458 = vsub.f32 %v344, %v437
          %v459 = vsub.f32 %v345, %v438
          %v460 = vsub.f32 %v346, %v438
          %v461 = vsub.f32 %v347, %v439
          %v462 = vsub.f32 %v348, %v439
          %v463 = vsub.f32 %v349, %v440
          %v464 = vsub.f32 %v350, %v440
          %v465 = vsub.f32 %v351, %v441
          %v466 = vsub.f32 %v352, %v441
          %v467 = vsub.f32 %v353, %v442
          %v468 = vsub.f32 %v354, %v442
          %v469 = vsub.f32 %v355, %v443
          %v470 = vsub.f32 %v356, %v443
          %v471 = vsub.f32 %v357, %v444
          %v472 = vsub.f32 %v358, %v444
          %v473 = vsub.f32 %v359, %v445
          %v474 = vsub.f32 %v360, %v445
          %v475 = vsub.f32 %v361, %v446
          %v476 = vsub.f32 %v362, %v446
          %v477 = vsub.f32 %v363, %v447
          %v478 = vsub.f32 %v364, %v447
          %v479 = vsub.f32 %v365, %v448
          %v480 = vsub.f32 %v366, %v448
          %v481 = vsub.f32 %v367, %v449
          %v482 = vsub.f32 %v368, %v449
          %v483 = vsub.f32 %v369, %v450
          %v484 = vsub.f32 %v370, %v450
          %v485 = vsub.f32 %v371, %v451
          %v486 = vsub.f32 %v372, %v451
          %v487 = vsub.f32 %v373, %v452
          %v488 = vsub.f32 %v374, %v452
          %v489 = vsub.f32 %v375, %v453
          %v490 = vsub.f32 %v376, %v453
          %v491 = vsub.f32 %v377, %v454
          %v492 = vsub.f32 %v378, %v454
          %v493 = vmul.f32 %v455, %v455
          %v494 = vmul.f32 %v456, %v456
          %v495 = vmul.f32 %v457, %v457
          %v496 = vmul.f32 %v458, %v458
          %v497 = vmul.f32 %v459, %v459
          %v498 = vmul.f32 %v460, %v460
          %v499 = vmul.f32 %v461, %v461
          %v500 = vmul.f32 %v462, %v462
          %v501 = vmul.f32 %v463, %v463
          %v502 = vmul.f32 %v464, %v464
          %v503 = vmul.f32 %v465, %v465
          %v504 = vmul.f32 %v466, %v466
          %v505 = vmul.f32 %v467, %v467
          %v506 = vmul.f32 %v468, %v468
          %v507 = vmul.f32 %v469, %v469
          %v508 = vmul.f32 %v470, %v470
          %v509 = vmul.f32 %v471, %v471
          %v510 = vmul.f32 %v472, %v472
          %v511 = vmul.f32 %v473, %v473
          %v512 = vmul.f32 %v474, %v474
          %v513 = vmul.f32 %v475, %v475
          %v514 = vmul.f32 %v476, %v476
          %v515 = vmul.f32 %v477, %v477
          %v516 = vmul.f32 %v478, %v478
          %v517 = vmul.f32 %v479, %v479
          %v518 = vmul.f32 %v480, %v480
          %v519 = vmul.f32 %v481, %v481
          %v520 = vmul.f32 %v482, %v482
          %v521 = vmul.f32 %v483, %v483
          %v522 = vmul.f32 %v484, %v484
          %v523 = vmul.f32 %v485, %v485
          %v524 = vmul.f32 %v486, %v486
          %v525 = vmul.f32 %v487, %v487
          %v526 = vmul.f32 %v488, %v488
          %v527 = vmul.f32 %v489, %v489
          %v528 = vmul.f32 %v490, %v490
          %v529 = vmul.f32 %v491, %v491
          %v530 = vmul.f32 %v492, %v492
          %v531 = vadd.f32 %v493, %v494
          %532 = vadd.xlane.f32.xlu0 %v531
          %v533 = vpop.xlane.xlu0 %532
          %v534 = vadd.f32 %v495, %v496
          %535 = vadd.xlane.f32.xlu0 %v534
          %v536 = vpop.xlane.xlu0 %535
          %v537 = vadd.f32 %v497, %v498
          %538 = vadd.xlane.f32.xlu0 %v537
          %v539 = vpop.xlane.xlu0 %538
          %v540 = vadd.f32 %v499, %v500
          %541 = vadd.xlane.f32.xlu0 %v540
          %v542 = vpop.xlane.xlu0 %541
          %v543 = vadd.f32 %v501, %v502
          %544 = vadd.xlane.f32.xlu0 %v543
          %v545 = vpop.xlane.xlu0 %544
          %v546 = vadd.f32 %v503, %v504
          %547 = vadd.xlane.f32.xlu0 %v546
          %v548 = vpop.xlane.xlu0 %547
          %v549 = vadd.f32 %v505, %v506
          %550 = vadd.xlane.f32.xlu0 %v549
          %v551 = vpop.xlane.xlu0 %550
          %v552 = vadd.f32 %v507, %v508
          %553 = vadd.xlane.f32.xlu0 %v552
          %v554 = vpop.xlane.xlu0 %553
          %v555 = vadd.f32 %v509, %v510
          %556 = vadd.xlane.f32.xlu0 %v555
          %v557 = vpop.xlane.xlu0 %556
          %v558 = vadd.f32 %v511, %v512
          %559 = vadd.xlane.f32.xlu0 %v558
          %v560 = vpop.xlane.xlu0 %559
          %v561 = vadd.f32 %v513, %v514
          %562 = vadd.xlane.f32.xlu0 %v561
          %v563 = vpop.xlane.xlu0 %562
          %v564 = vadd.f32 %v515, %v516
          %565 = vadd.xlane.f32.xlu0 %v564
          %v566 = vpop.xlane.xlu0 %565
          %v567 = vadd.f32 %v517, %v518
          %568 = vadd.xlane.f32.xlu0 %v567
          %v569 = vpop.xlane.xlu0 %568
          %v570 = vadd.f32 %v519, %v520
          %571 = vadd.xlane.f32.xlu0 %v570
          %v572 = vpop.xlane.xlu0 %571
          %v573 = vadd.f32 %v521, %v522
          %574 = vadd.xlane.f32.xlu0 %v573
          %v575 = vpop.xlane.xlu0 %574
          %v576 = vadd.f32 %v523, %v524
          %577 = vadd.xlane.f32.xlu0 %v576
          %v578 = vpop.xlane.xlu0 %577
          %v579 = vadd.f32 %v525, %v526
          %580 = vadd.xlane.f32.xlu0 %v579
          %v581 = vpop.xlane.xlu0 %580
          %v582 = vadd.f32 %v527, %v528
          %583 = vadd.xlane.f32.xlu0 %v582
          %v584 = vpop.xlane.xlu0 %583
          %v585 = vadd.f32 %v529, %v530
          %586 = vadd.xlane.f32.xlu0 %v585
          %v587 = vpop.xlane.xlu0 %586
          %v588 = vmul.f32 %v533, 0.00390625
          %v589 = vmul.f32 %v536, 0.00390625
          %v590 = vmul.f32 %v539, 0.00390625
          %v591 = vmul.f32 %v542, 0.00390625
          %v592 = vmul.f32 %v545, 0.00390625
          %v593 = vmul.f32 %v548, 0.00390625
          %v594 = vmul.f32 %v551, 0.00390625
          %v595 = vmul.f32 %v554, 0.00390625
          %v596 = vmul.f32 %v557, 0.00390625
          %v597 = vmul.f32 %v560, 0.00390625
          %v598 = vmul.f32 %v563, 0.00390625
          %v599 = vmul.f32 %v566, 0.00390625
          %v600 = vmul.f32 %v569, 0.00390625
          %v601 = vmul.f32 %v572, 0.00390625
          %v602 = vmul.f32 %v575, 0.00390625
          %v603 = vmul.f32 %v578, 0.00390625
          %v604 = vmul.f32 %v581, 0.00390625
          %v605 = vmul.f32 %v584, 0.00390625
          %v606 = vmul.f32 %v587, 0.00390625
          %v607 = vadd.f32 %v588, 1e-05
          %v608 = vadd.f32 %v589, 1e-05
          %v609 = vadd.f32 %v590, 1e-05
          %v610 = vadd.f32 %v591, 1e-05
          %v611 = vadd.f32 %v592, 1e-05
          %v612 = vadd.f32 %v593, 1e-05
          %v613 = vadd.f32 %v594, 1e-05
          %v614 = vadd.f32 %v595, 1e-05
          %v615 = vadd.f32 %v596, 1e-05
          %v616 = vadd.f32 %v597, 1e-05
          %v617 = vadd.f32 %v598, 1e-05
          %v618 = vadd.f32 %v599, 1e-05
          %v619 = vadd.f32 %v600, 1e-05
          %v620 = vadd.f32 %v601, 1e-05
          %v621 = vadd.f32 %v602, 1e-05
          %v622 = vadd.f32 %v603, 1e-05
          %v623 = vadd.f32 %v604, 1e-05
          %v624 = vadd.f32 %v605, 1e-05
          %v625 = vadd.f32 %v606, 1e-05
          %v626 = vrsqrt.pop %v607
          %v627 = vmul.f32 %v626, %v607
          %v628 = vmul.f32 %v627, %v626
          %v629 = vmul.f32 0.5, %v628
          %v630 = vsub.f32 1.5, %v629
          %v631 = vmul.f32 %v626, %v630
          %vm632 = vweird.f32 %v607
          %vm633 = vweird.f32 %v626
          %vm634 = vmor %vm632, %vm633
          %v635 = vsel %vm634, %v626, %v631
          %v636 = vrsqrt.pop %v608
          %v637 = vmul.f32 %v636, %v608
          %v638 = vmul.f32 %v637, %v636
          %v639 = vmul.f32 0.5, %v638
          %v640 = vsub.f32 1.5, %v639
          %v641 = vmul.f32 %v636, %v640
          %vm642 = vweird.f32 %v608
          %vm643 = vweird.f32 %v636
          %vm644 = vmor %vm642, %vm643
          %v645 = vsel %vm644, %v636, %v641
          %v646 = vrsqrt.pop %v609
          %v647 = vmul.f32 %v646, %v609
          %v648 = vmul.f32 %v647, %v646
          %v649 = vmul.f32 0.5, %v648
          %v650 = vsub.f32 1.5, %v649
          %v651 = vmul.f32 %v646, %v650
          %vm652 = vweird.f32 %v609
          %vm653 = vweird.f32 %v646
          %vm654 = vmor %vm652, %vm653
          %v655 = vsel %vm654, %v646, %v651
          %v656 = vrsqrt.pop %v610
          %v657 = vmul.f32 %v656, %v610
          %v658 = vmul.f32 %v657, %v656
          %v659 = vmul.f32 0.5, %v658
          %v660 = vsub.f32 1.5, %v659
          %v661 = vmul.f32 %v656, %v660
          %vm662 = vweird.f32 %v610
          %vm663 = vweird.f32 %v656
          %vm664 = vmor %vm662, %vm663
          %v665 = vsel %vm664, %v656, %v661
          %v666 = vrsqrt.pop %v611
          %v667 = vmul.f32 %v666, %v611
          %v668 = vmul.f32 %v667, %v666
          %v669 = vmul.f32 0.5, %v668
          %v670 = vsub.f32 1.5, %v669
          %v671 = vmul.f32 %v666, %v670
          %vm672 = vweird.f32 %v611
          %vm673 = vweird.f32 %v666
          %vm674 = vmor %vm672, %vm673
          %v675 = vsel %vm674, %v666, %v671
          %v676 = vrsqrt.pop %v612
          %v677 = vmul.f32 %v676, %v612
          %v678 = vmul.f32 %v677, %v676
          %v679 = vmul.f32 0.5, %v678
          %v680 = vsub.f32 1.5, %v679
          %v681 = vmul.f32 %v676, %v680
          %vm682 = vweird.f32 %v612
          %vm683 = vweird.f32 %v676
          %vm684 = vmor %vm682, %vm683
          %v685 = vsel %vm684, %v676, %v681
          %v686 = vrsqrt.pop %v613
          %v687 = vmul.f32 %v686, %v613
          %v688 = vmul.f32 %v687, %v686
          %v689 = vmul.f32 0.5, %v688
          %v690 = vsub.f32 1.5, %v689
          %v691 = vmul.f32 %v686, %v690
          %vm692 = vweird.f32 %v613
          %vm693 = vweird.f32 %v686
          %vm694 = vmor %vm692, %vm693
          %v695 = vsel %vm694, %v686, %v691
          %v696 = vrsqrt.pop %v614
          %v697 = vmul.f32 %v696, %v614
          %v698 = vmul.f32 %v697, %v696
          %v699 = vmul.f32 0.5, %v698
          %v700 = vsub.f32 1.5, %v699
          %v701 = vmul.f32 %v696, %v700
          %vm702 = vweird.f32 %v614
          %vm703 = vweird.f32 %v696
          %vm704 = vmor %vm702, %vm703
          %v705 = vsel %vm704, %v696, %v701
          %v706 = vrsqrt.pop %v615
          %v707 = vmul.f32 %v706, %v615
          %v708 = vmul.f32 %v707, %v706
          %v709 = vmul.f32 0.5, %v708
          %v710 = vsub.f32 1.5, %v709
          %v711 = vmul.f32 %v706, %v710
          %vm712 = vweird.f32 %v615
          %vm713 = vweird.f32 %v706
          %vm714 = vmor %vm712, %vm713
          %v715 = vsel %vm714, %v706, %v711
          %v716 = vrsqrt.pop %v616
          %v717 = vmul.f32 %v716, %v616
          %v718 = vmul.f32 %v717, %v716
          %v719 = vmul.f32 0.5, %v718
          %v720 = vsub.f32 1.5, %v719
          %v721 = vmul.f32 %v716, %v720
          %vm722 = vweird.f32 %v616
          %vm723 = vweird.f32 %v716
          %vm724 = vmor %vm722, %vm723
          %v725 = vsel %vm724, %v716, %v721
          %v726 = vrsqrt.pop %v617
          %v727 = vmul.f32 %v726, %v617
          %v728 = vmul.f32 %v727, %v726
          %v729 = vmul.f32 0.5, %v728
          %v730 = vsub.f32 1.5, %v729
          %v731 = vmul.f32 %v726, %v730
          %vm732 = vweird.f32 %v617
          %vm733 = vweird.f32 %v726
          %vm734 = vmor %vm732, %vm733
          %v735 = vsel %vm734, %v726, %v731
          %v736 = vrsqrt.pop %v618
          %v737 = vmul.f32 %v736, %v618
          %v738 = vmul.f32 %v737, %v736
          %v739 = vmul.f32 0.5, %v738
          %v740 = vsub.f32 1.5, %v739
          %v741 = vmul.f32 %v736, %v740
          %vm742 = vweird.f32 %v618
          %vm743 = vweird.f32 %v736
          %vm744 = vmor %vm742, %vm743
          %v745 = vsel %vm744, %v736, %v741
          %v746 = vrsqrt.pop %v619
          %v747 = vmul.f32 %v746, %v619
          %v748 = vmul.f32 %v747, %v746
          %v749 = vmul.f32 0.5, %v748
          %v750 = vsub.f32 1.5, %v749
          %v751 = vmul.f32 %v746, %v750
          %vm752 = vweird.f32 %v619
          %vm753 = vweird.f32 %v746
          %vm754 = vmor %vm752, %vm753
          %v755 = vsel %vm754, %v746, %v751
          %v756 = vrsqrt.pop %v620
          %v757 = vmul.f32 %v756, %v620
          %v758 = vmul.f32 %v757, %v756
          %v759 = vmul.f32 0.5, %v758
          %v760 = vsub.f32 1.5, %v759
          %v761 = vmul.f32 %v756, %v760
          %vm762 = vweird.f32 %v620
          %vm763 = vweird.f32 %v756
          %vm764 = vmor %vm762, %vm763
          %v765 = vsel %vm764, %v756, %v761
          %v766 = vrsqrt.pop %v621
          %v767 = vmul.f32 %v766, %v621
          %v768 = vmul.f32 %v767, %v766
          %v769 = vmul.f32 0.5, %v768
          %v770 = vsub.f32 1.5, %v769
          %v771 = vmul.f32 %v766, %v770
          %vm772 = vweird.f32 %v621
          %vm773 = vweird.f32 %v766
          %vm774 = vmor %vm772, %vm773
          %v775 = vsel %vm774, %v766, %v771
          %v776 = vrsqrt.pop %v622
          %v777 = vmul.f32 %v776, %v622
          %v778 = vmul.f32 %v777, %v776
          %v779 = vmul.f32 0.5, %v778
          %v780 = vsub.f32 1.5, %v779
          %v781 = vmul.f32 %v776, %v780
          %vm782 = vweird.f32 %v622
          %vm783 = vweird.f32 %v776
          %vm784 = vmor %vm782, %vm783
          %v785 = vsel %vm784, %v776, %v781
          %v786 = vrsqrt.pop %v623
          %v787 = vmul.f32 %v786, %v623
          %v788 = vmul.f32 %v787, %v786
          %v789 = vmul.f32 0.5, %v788
          %v790 = vsub.f32 1.5, %v789
          %v791 = vmul.f32 %v786, %v790
          %vm792 = vweird.f32 %v623
          %vm793 = vweird.f32 %v786
          %vm794 = vmor %vm792, %vm793
          %v795 = vsel %vm794, %v786, %v791
          %v796 = vrsqrt.pop %v624
          %v797 = vmul.f32 %v796, %v624
          %v798 = vmul.f32 %v797, %v796
          %v799 = vmul.f32 0.5, %v798
          %v800 = vsub.f32 1.5, %v799
          %v801 = vmul.f32 %v796, %v800
          %vm802 = vweird.f32 %v624
          %vm803 = vweird.f32 %v796
          %vm804 = vmor %vm802, %vm803
          %v805 = vsel %vm804, %v796, %v801
          %v806 = vrsqrt.pop %v625
          %v807 = vmul.f32 %v806, %v625
          %v808 = vmul.f32 %v807, %v806
          %v809 = vmul.f32 0.5, %v808
          %v810 = vsub.f32 1.5, %v809
          %v811 = vmul.f32 %v806, %v810
          %vm812 = vweird.f32 %v625
          %vm813 = vweird.f32 %v806
          %vm814 = vmor %vm812, %vm813
          %v815 = vsel %vm814, %v806, %v811
          %v816 = vmul.f32 %v455, %v635
          %v817 = vmul.f32 %v456, %v635
          %v818 = vmul.f32 %v457, %v645
          %v819 = vmul.f32 %v458, %v645
          %v820 = vmul.f32 %v459, %v655
          %v821 = vmul.f32 %v460, %v655
          %v822 = vmul.f32 %v461, %v665
          %v823 = vmul.f32 %v462, %v665
          %v824 = vmul.f32 %v463, %v675
          %v825 = vmul.f32 %v464, %v675
          %v826 = vmul.f32 %v465, %v685
          %v827 = vmul.f32 %v466, %v685
          %v828 = vmul.f32 %v467, %v695
          %v829 = vmul.f32 %v468, %v695
          %v830 = vmul.f32 %v469, %v705
          %v831 = vmul.f32 %v470, %v705
          %v832 = vmul.f32 %v471, %v715
          %v833 = vmul.f32 %v472, %v715
          %v834 = vmul.f32 %v473, %v725
          %v835 = vmul.f32 %v474, %v725
          %v836 = vmul.f32 %v475, %v735
          %v837 = vmul.f32 %v476, %v735
          %v838 = vmul.f32 %v477, %v745
          %v839 = vmul.f32 %v478, %v745
          %v840 = vmul.f32 %v479, %v755
          %v841 = vmul.f32 %v480, %v755
          %v842 = vmul.f32 %v481, %v765
          %v843 = vmul.f32 %v482, %v765
          %v844 = vmul.f32 %v483, %v775
          %v845 = vmul.f32 %v484, %v775
          %v846 = vmul.f32 %v485, %v785
          %v847 = vmul.f32 %v486, %v785
          %v848 = vmul.f32 %v487, %v795
          %v849 = vmul.f32 %v488, %v795
          %v850 = vmul.f32 %v489, %v805
          %v851 = vmul.f32 %v490, %v805
          %v852 = vmul.f32 %v491, %v815
          %v853 = vmul.f32 %v492, %v815
          %v854 = vld [vmem:[#allocation6] sm:$0x3]
          %v856 = vperm.slane %v854, 0
          %v857 = vperm.slane %v854, 1
          %v860 = vmul.f32 %v816, %v856
          %v861 = vmul.f32 %v817, %v857
          %v862 = vmul.f32 %v818, %v856
          %v863 = vmul.f32 %v819, %v857
          %v864 = vmul.f32 %v820, %v856
          %v865 = vmul.f32 %v821, %v857
          %v866 = vmul.f32 %v822, %v856
          %v867 = vmul.f32 %v823, %v857
          %v868 = vmul.f32 %v824, %v856
          %v869 = vmul.f32 %v825, %v857
          %v870 = vmul.f32 %v826, %v856
          %v871 = vmul.f32 %v827, %v857
          %v872 = vmul.f32 %v828, %v856
          %v873 = vmul.f32 %v829, %v857
          %v874 = vmul.f32 %v830, %v856
          %v875 = vmul.f32 %v831, %v857
          %v876 = vmul.f32 %v832, %v856
          %v877 = vmul.f32 %v833, %v857
          %v878 = vmul.f32 %v834, %v856
          %v879 = vmul.f32 %v835, %v857
          %v880 = vmul.f32 %v836, %v856
          %v881 = vmul.f32 %v837, %v857
          %v882 = vmul.f32 %v838, %v856
          %v883 = vmul.f32 %v839, %v857
          %v884 = vmul.f32 %v840, %v856
          %v885 = vmul.f32 %v841, %v857
          %v886 = vmul.f32 %v842, %v856
          %v887 = vmul.f32 %v843, %v857
          %v888 = vmul.f32 %v844, %v856
          %v889 = vmul.f32 %v845, %v857
          %v890 = vmul.f32 %v846, %v856
          %v891 = vmul.f32 %v847, %v857
          %v892 = vmul.f32 %v848, %v856
          %v893 = vmul.f32 %v849, %v857
          %v894 = vmul.f32 %v850, %v856
          %v895 = vmul.f32 %v851, %v857
          %v896 = vmul.f32 %v852, %v856
          %v897 = vmul.f32 %v853, %v857
          %v898 = vld [vmem:[#allocation8] sm:$0x3]
          %v900 = vperm.slane %v898, 0
          %v901 = vperm.slane %v898, 1
          %v904 = vadd.f32 %v860, %v900
          %v905 = vadd.f32 %v861, %v901
          %v906 = vadd.f32 %v862, %v900
          %v907 = vadd.f32 %v863, %v901
          %v908 = vadd.f32 %v864, %v900
          %v909 = vadd.f32 %v865, %v901
          %v910 = vadd.f32 %v866, %v900
          %v911 = vadd.f32 %v867, %v901
          %v912 = vadd.f32 %v868, %v900
          %v913 = vadd.f32 %v869, %v901
          %v914 = vadd.f32 %v870, %v900
          %v915 = vadd.f32 %v871, %v901
          %v916 = vadd.f32 %v872, %v900
          %v917 = vadd.f32 %v873, %v901
          %v918 = vadd.f32 %v874, %v900
          %v919 = vadd.f32 %v875, %v901
          %v920 = vadd.f32 %v876, %v900
          %v921 = vadd.f32 %v877, %v901
          %v922 = vadd.f32 %v878, %v900
          %v923 = vadd.f32 %v879, %v901
          %v924 = vadd.f32 %v880, %v900
          %v925 = vadd.f32 %v881, %v901
          %v926 = vadd.f32 %v882, %v900
          %v927 = vadd.f32 %v883, %v901
          %v928 = vadd.f32 %v884, %v900
          %v929 = vadd.f32 %v885, %v901
          %v930 = vadd.f32 %v886, %v900
          %v931 = vadd.f32 %v887, %v901
          %v932 = vadd.f32 %v888, %v900
          %v933 = vadd.f32 %v889, %v901
          %v934 = vadd.f32 %v890, %v900
          %v935 = vadd.f32 %v891, %v901
          %v936 = vadd.f32 %v892, %v900
          %v937 = vadd.f32 %v893, %v901
          %v938 = vadd.f32 %v894, %v900
          %v939 = vadd.f32 %v895, %v901
          %v940 = vadd.f32 %v896, %v900
          %v941 = vadd.f32 %v897, %v901
          %942 = vst [vmem:[#allocation2] sm:$0xff] %v904
          %943 = vst [vmem:[#allocation2 + $0x8] sm:$0xff] %v905
          %944 = vst [vmem:[#allocation2 + $0x10] sm:$0xff] %v906
          %945 = vst [vmem:[#allocation2 + $0x18] sm:$0xff] %v907
          %946 = vst [vmem:[#allocation2 + $0x20] sm:$0xff] %v908
          %947 = vst [vmem:[#allocation2 + $0x28] sm:$0xff] %v909
          %948 = vst [vmem:[#allocation2 + $0x30] sm:$0xff] %v910
          %949 = vst [vmem:[#allocation2 + $0x38] sm:$0xff] %v911
          %950 = vst [vmem:[#allocation2 + $0x40] sm:$0xff] %v912
          %951 = vst [vmem:[#allocation2 + $0x48] sm:$0xff] %v913
          %952 = vst [vmem:[#allocation2 + $0x50] sm:$0xff] %v914
          %953 = vst [vmem:[#allocation2 + $0x58] sm:$0xff] %v915
          %954 = vst [vmem:[#allocation2 + $0x60] sm:$0xff] %v916
          %955 = vst [vmem:[#allocation2 + $0x68] sm:$0xff] %v917
          %956 = vst [vmem:[#allocation2 + $0x70] sm:$0xff] %v918
          %957 = vst [vmem:[#allocation2 + $0x78] sm:$0xff] %v919
          %958 = vst [vmem:[#allocation2 + $0x80] sm:$0xff] %v920
          %959 = vst [vmem:[#allocation2 + $0x88] sm:$0xff] %v921
          %960 = vst [vmem:[#allocation2 + $0x90] sm:$0xff] %v922
          %961 = vst [vmem:[#allocation2 + $0x98] sm:$0xff] %v923
          %962 = vst [vmem:[#allocation2 + $0xa0] sm:$0xff] %v924
          %963 = vst [vmem:[#allocation2 + $0xa8] sm:$0xff] %v925
          %964 = vst [vmem:[#allocation2 + $0xb0] sm:$0xff] %v926
          %965 = vst [vmem:[#allocation2 + $0xb8] sm:$0xff] %v927
          %966 = vst [vmem:[#allocation2 + $0xc0] sm:$0xff] %v928
          %967 = vst [vmem:[#allocation2 + $0xc8] sm:$0xff] %v929
          %968 = vst [vmem:[#allocation2 + $0xd0] sm:$0xff] %v930
          %969 = vst [vmem:[#allocation2 + $0xd8] sm:$0xff] %v931
          %970 = vst [vmem:[#allocation2 + $0xe0] sm:$0xff] %v932
          %971 = vst [vmem:[#allocation2 + $0xe8] sm:$0xff] %v933
          %972 = vst [vmem:[#allocation2 + $0xf0] sm:$0xff] %v934
          %973 = vst [vmem:[#allocation2 + $0xf8] sm:$0xff] %v935
          %974 = vst [vmem:[#allocation2 + $0x100] sm:$0xff] %v936
          %975 = vst [vmem:[#allocation2 + $0x108] sm:$0xff] %v937
          %976 = vst [vmem:[#allocation2 + $0x110] sm:$0xff] %v938
          %977 = vst [vmem:[#allocation2 + $0x118] sm:$0xff] %v939
          %978 = vst [vmem:[#allocation2 + $0x120] sm:$0xff] %v940
          %979 = vst [vmem:[#allocation2 + $0x128] sm:$0xff] %v941
        $region60: #{tpu_custom_call.1} parent=39 // pred_fallthru
          _
        %v980 = vld [vmem:[#allocation2] sm:$0xff]
        %v981 = vld [vmem:[#allocation2 + $0x8] sm:$0xff]
        %v982 = vld [vmem:[#allocation2 + $0x10] sm:$0xff]
        %v983 = vld [vmem:[#allocation2 + $0x18] sm:$0xff]
        %v984 = vld [vmem:[#allocation2 + $0x20] sm:$0xff]
        %v985 = vld [vmem:[#allocation2 + $0x28] sm:$0xff]
        %v986 = vld [vmem:[#allocation2 + $0x30] sm:$0xff]
        %v987 = vld [vmem:[#allocation2 + $0x38] sm:$0xff]
        %v988 = vld [vmem:[#allocation2 + $0x40] sm:$0xff]
        %v989 = vld [vmem:[#allocation2 + $0x48] sm:$0xff]
        %v990 = vld [vmem:[#allocation2 + $0x50] sm:$0xff]
        %v991 = vld [vmem:[#allocation2 + $0x58] sm:$0xff]
        %v992 = vld [vmem:[#allocation2 + $0x60] sm:$0xff]
        %v993 = vld [vmem:[#allocation2 + $0x68] sm:$0xff]
        %v994 = vld [vmem:[#allocation2 + $0x70] sm:$0xff]
        %v995 = vld [vmem:[#allocation2 + $0x78] sm:$0xff]
        %v996 = vld [vmem:[#allocation2 + $0x80] sm:$0xff]
        %v997 = vld [vmem:[#allocation2 + $0x88] sm:$0xff]
        %v998 = vld [vmem:[#allocation2 + $0x90] sm:$0xff]
        %v999 = vld [vmem:[#allocation2 + $0x98] sm:$0xff]
        %v1000 = vld [vmem:[#allocation2 + $0xa0] sm:$0xff]
        %v1001 = vld [vmem:[#allocation2 + $0xa8] sm:$0xff]
        %v1002 = vld [vmem:[#allocation2 + $0xb0] sm:$0xff]
        %v1003 = vld [vmem:[#allocation2 + $0xb8] sm:$0xff]
        %v1004 = vld [vmem:[#allocation2 + $0xc0] sm:$0xff]
        %v1005 = vld [vmem:[#allocation2 + $0xc8] sm:$0xff]
        %v1006 = vld [vmem:[#allocation2 + $0xd0] sm:$0xff]
        %v1007 = vld [vmem:[#allocation2 + $0xd8] sm:$0xff]
        %v1008 = vld [vmem:[#allocation2 + $0xe0] sm:$0xff]
        %v1009 = vld [vmem:[#allocation2 + $0xe8] sm:$0xff]
        %v1010 = vld [vmem:[#allocation2 + $0xf0] sm:$0xff]
        %v1011 = vld [vmem:[#allocation2 + $0xf8] sm:$0xff]
        %v1012 = vld [vmem:[#allocation2 + $0x100] sm:$0xff]
        %v1013 = vld [vmem:[#allocation2 + $0x108] sm:$0xff]
        %v1014 = vld [vmem:[#allocation2 + $0x110] sm:$0xff]
        %v1015 = vld [vmem:[#allocation2 + $0x118] sm:$0xff]
        %v1016 = vld [vmem:[#allocation2 + $0x120] sm:$0xff]
        %v1017 = vld [vmem:[#allocation2 + $0x128] sm:$0xff]
        %v1018 = vld [vmem:[#allocation9] sm:$0xff]
        %v1019 = vld [vmem:[#allocation9 + $0x8] sm:$0xff]
        %v1020 = vld [vmem:[#allocation9 + $0x10] sm:$0xff]
        %v1021 = vld [vmem:[#allocation9 + $0x18] sm:$0xff]
        %v1022 = vld [vmem:[#allocation9 + $0x20] sm:$0xff]
        %v1023 = vld [vmem:[#allocation9 + $0x28] sm:$0xff]
        %v1024 = vld [vmem:[#allocation9 + $0x30] sm:$0xff]
        %v1025 = vld [vmem:[#allocation9 + $0x38] sm:$0xff]
        %v1026 = vld [vmem:[#allocation9 + $0x40] sm:$0xff]
        %v1027 = vld [vmem:[#allocation9 + $0x48] sm:$0xff]
        %v1028 = vld [vmem:[#allocation9 + $0x50] sm:$0xff]
        %v1029 = vld [vmem:[#allocation9 + $0x58] sm:$0xff]
        %v1030 = vld [vmem:[#allocation9 + $0x60] sm:$0xff]
        %v1031 = vld [vmem:[#allocation9 + $0x68] sm:$0xff]
        %v1032 = vld [vmem:[#allocation9 + $0x70] sm:$0xff]
        %v1033 = vld [vmem:[#allocation9 + $0x78] sm:$0xff]
        %v1034 = vld [vmem:[#allocation9 + $0x80] sm:$0xff]
        %v1035 = vld [vmem:[#allocation9 + $0x88] sm:$0xff]
        %v1036 = vld [vmem:[#allocation9 + $0x90] sm:$0xff]
        %v1037 = vld [vmem:[#allocation9 + $0x98] sm:$0xff]
        %v1038 = vld [vmem:[#allocation9 + $0xa0] sm:$0xff]
        %v1039 = vld [vmem:[#allocation9 + $0xa8] sm:$0xff]
        %v1040 = vld [vmem:[#allocation9 + $0xb0] sm:$0xff]
        %v1041 = vld [vmem:[#allocation9 + $0xb8] sm:$0xff]
        %v1042 = vld [vmem:[#allocation9 + $0xc0] sm:$0xff]
        %v1043 = vld [vmem:[#allocation9 + $0xc8] sm:$0xff]
        %v1044 = vld [vmem:[#allocation9 + $0xd0] sm:$0xff]
        %v1045 = vld [vmem:[#allocation9 + $0xd8] sm:$0xff]
        %v1046 = vld [vmem:[#allocation9 + $0xe0] sm:$0xff]
        %v1047 = vld [vmem:[#allocation9 + $0xe8] sm:$0xff]
        %v1048 = vld [vmem:[#allocation9 + $0xf0] sm:$0xff]
        %v1049 = vld [vmem:[#allocation9 + $0xf8] sm:$0xff]
        %v1050 = vld [vmem:[#allocation9 + $0x100] sm:$0xff]
        %v1051 = vld [vmem:[#allocation9 + $0x108] sm:$0xff]
        %v1052 = vld [vmem:[#allocation9 + $0x110] sm:$0xff]
        %v1053 = vld [vmem:[#allocation9 + $0x118] sm:$0xff]
        %v1054 = vld [vmem:[#allocation9 + $0x120] sm:$0xff]
        %v1055 = vld [vmem:[#allocation9 + $0x128] sm:$0xff]
        %v1056 = vld [vmem:[#allocation9 + $0x130] sm:$0xff]
        %v1057 = vld [vmem:[#allocation9 + $0x138] sm:$0xff]
        %v1058 = vld [vmem:[#allocation9 + $0x140] sm:$0xff]
        %v1059 = vld [vmem:[#allocation9 + $0x148] sm:$0xff]
        %v1060 = vld [vmem:[#allocation9 + $0x150] sm:$0xff]
        %v1061 = vld [vmem:[#allocation9 + $0x158] sm:$0xff]
        %v1062 = vld [vmem:[#allocation9 + $0x160] sm:$0xff]
        %v1063 = vld [vmem:[#allocation9 + $0x168] sm:$0xff]
        %v1064 = vld [vmem:[#allocation9 + $0x170] sm:$0xff]
        %v1065 = vld [vmem:[#allocation9 + $0x178] sm:$0xff]
        %v1066 = vld [vmem:[#allocation9 + $0x180] sm:$0xff]
        %v1067 = vld [vmem:[#allocation9 + $0x188] sm:$0xff]
        %v1068 = vld [vmem:[#allocation9 + $0x190] sm:$0xff]
        %v1069 = vld [vmem:[#allocation9 + $0x198] sm:$0xff]
        %v1070 = vld [vmem:[#allocation9 + $0x1a0] sm:$0xff]
        %v1071 = vld [vmem:[#allocation9 + $0x1a8] sm:$0xff]
        %v1072 = vld [vmem:[#allocation9 + $0x1b0] sm:$0xff]
        %v1073 = vld [vmem:[#allocation9 + $0x1b8] sm:$0xff]
        %v1074 = vld [vmem:[#allocation9 + $0x1c0] sm:$0xff]
        %v1075 = vld [vmem:[#allocation9 + $0x1c8] sm:$0xff]
        %v1076 = vld [vmem:[#allocation9 + $0x1d0] sm:$0xff]
        %v1077 = vld [vmem:[#allocation9 + $0x1d8] sm:$0xff]
        %v1078 = vld [vmem:[#allocation9 + $0x1e0] sm:$0xff]
        %v1079 = vld [vmem:[#allocation9 + $0x1e8] sm:$0xff]
        %v1080 = vld [vmem:[#allocation9 + $0x1f0] sm:$0xff]
        %v1081 = vld [vmem:[#allocation9 + $0x1f8] sm:$0xff]
        %v1082 = vld [vmem:[#allocation9 + $0x200] sm:$0xff]
        %v1083 = vld [vmem:[#allocation9 + $0x208] sm:$0xff]
        %v1084 = vld [vmem:[#allocation9 + $0x210] sm:$0xff]
        %v1085 = vld [vmem:[#allocation9 + $0x218] sm:$0xff]
        %v1086 = vld [vmem:[#allocation9 + $0x220] sm:$0xff]
        %v1087 = vld [vmem:[#allocation9 + $0x228] sm:$0xff]
        %v1088 = vld [vmem:[#allocation9 + $0x230] sm:$0xff]
        %v1089 = vld [vmem:[#allocation9 + $0x238] sm:$0xff]
        %v1090 = vld [vmem:[#allocation9 + $0x240] sm:$0xff]
        %v1091 = vld [vmem:[#allocation9 + $0x248] sm:$0xff]
        %v1092 = vld [vmem:[#allocation9 + $0x250] sm:$0xff]
        %v1093 = vld [vmem:[#allocation9 + $0x258] sm:$0xff]
        %v1094 = vld [vmem:[#allocation9 + $0x260] sm:$0xff]
        %v1095 = vld [vmem:[#allocation9 + $0x268] sm:$0xff]
        %v1096 = vld [vmem:[#allocation9 + $0x270] sm:$0xff]
        %v1097 = vld [vmem:[#allocation9 + $0x278] sm:$0xff]
        %v1098 = vld [vmem:[#allocation9 + $0x280] sm:$0xff]
        %v1099 = vld [vmem:[#allocation9 + $0x288] sm:$0xff]
        %v1100 = vld [vmem:[#allocation9 + $0x290] sm:$0xff]
        %v1101 = vld [vmem:[#allocation9 + $0x298] sm:$0xff]
        %v1102 = vld [vmem:[#allocation9 + $0x2a0] sm:$0xff]
        %v1103 = vld [vmem:[#allocation9 + $0x2a8] sm:$0xff]
        %v1104 = vld [vmem:[#allocation9 + $0x2b0] sm:$0xff]
        %v1105 = vld [vmem:[#allocation9 + $0x2b8] sm:$0xff]
        %v1106 = vld [vmem:[#allocation9 + $0x2c0] sm:$0xff]
        %v1107 = vld [vmem:[#allocation9 + $0x2c8] sm:$0xff]
        %v1108 = vld [vmem:[#allocation9 + $0x2d0] sm:$0xff]
        %v1109 = vld [vmem:[#allocation9 + $0x2d8] sm:$0xff]
        %v1110 = vld [vmem:[#allocation9 + $0x2e0] sm:$0xff]
        %v1111 = vld [vmem:[#allocation9 + $0x2e8] sm:$0xff]
        %v1112 = vld [vmem:[#allocation9 + $0x2f0] sm:$0xff]
        %v1113 = vld [vmem:[#allocation9 + $0x2f8] sm:$0xff]
        %v1114 = vld [vmem:[%s333] sm:$0x7]
        %v1116 = vperm.slane %v1114, 0
        %v1117 = vperm.slane %v1114, 1
        %v1118 = vperm.slane %v1114, 2
        %1122 = vmatpush.msra.mxu0 %v1063
        %1123 = vmatpush.msra.mxu0 %v1060
        %1124 = vmatpush.msra.mxu0 %v1057
        %1125 = vmatpush.msra.mxu0 %v1054
        %1126 = vmatpush.msra.mxu0 %v1051
        %1127 = vmatpush.msra.mxu0 %v1048
        %1128 = vmatpush.msra.mxu0 %v1045
        %1129 = vmatpush.msra.mxu0 %v1042
        %1130 = vmatpush.msra.mxu0 %v1039
        %1131 = vmatpush.msra.mxu0 %v1036
        %1132 = vmatpush.msra.mxu0 %v1033
        %1133 = vmatpush.msra.mxu0 %v1030
        %1134 = vmatpush.msra.mxu0 %v1027
        %1135 = vmatpush.msra.mxu0 %v1024
        %1136 = vmatpush.msra.mxu0 %v1021
        %1137 = vmatpush.msra.mxu0 %v1018
        %1138 = vmatmul.f32.gmra.mxu0 %v980
        %v1139 = vpop.f32.mrf.mxu0
        %v1140 = vadd.f32 %v1116, %v1139
        %1141 = vmatmul.f32.gmra.mxu0 %v982
        %v1142 = vpop.f32.mrf.mxu0
        %v1143 = vadd.f32 %v1116, %v1142
        %1144 = vmatmul.f32.gmra.mxu0 %v984
        %v1145 = vpop.f32.mrf.mxu0
        %v1146 = vadd.f32 %v1116, %v1145
        %1147 = vmatmul.f32.gmra.mxu0 %v986
        %v1148 = vpop.f32.mrf.mxu0
        %v1149 = vadd.f32 %v1116, %v1148
        %1150 = vmatmul.f32.gmra.mxu0 %v988
        %v1151 = vpop.f32.mrf.mxu0
        %v1152 = vadd.f32 %v1116, %v1151
        %1153 = vmatmul.f32.gmra.mxu0 %v990
        %v1154 = vpop.f32.mrf.mxu0
        %v1155 = vadd.f32 %v1116, %v1154
        %1156 = vmatmul.f32.gmra.mxu0 %v992
        %v1157 = vpop.f32.mrf.mxu0
        %v1158 = vadd.f32 %v1116, %v1157
        %1159 = vmatmul.f32.gmra.mxu0 %v994
        %v1160 = vpop.f32.mrf.mxu0
        %v1161 = vadd.f32 %v1116, %v1160
        %1162 = vmatmul.f32.gmra.mxu0 %v996
        %v1163 = vpop.f32.mrf.mxu0
        %v1164 = vadd.f32 %v1116, %v1163
        %1165 = vmatmul.f32.gmra.mxu0 %v998
        %v1166 = vpop.f32.mrf.mxu0
        %v1167 = vadd.f32 %v1116, %v1166
        %1168 = vmatmul.f32.gmra.mxu0 %v1000
        %v1169 = vpop.f32.mrf.mxu0
        %v1170 = vadd.f32 %v1116, %v1169
        %1171 = vmatmul.f32.gmra.mxu0 %v1002
        %v1172 = vpop.f32.mrf.mxu0
        %v1173 = vadd.f32 %v1116, %v1172
        %1174 = vmatmul.f32.gmra.mxu0 %v1004
        %v1175 = vpop.f32.mrf.mxu0
        %v1176 = vadd.f32 %v1116, %v1175
        %1177 = vmatmul.f32.gmra.mxu0 %v1006
        %v1178 = vpop.f32.mrf.mxu0
        %v1179 = vadd.f32 %v1116, %v1178
        %1180 = vmatmul.f32.gmra.mxu0 %v1008
        %v1181 = vpop.f32.mrf.mxu0
        %v1182 = vadd.f32 %v1116, %v1181
        %1183 = vmatmul.f32.gmra.mxu0 %v1010
        %v1184 = vpop.f32.mrf.mxu0
        %v1185 = vadd.f32 %v1116, %v1184
        %1186 = vmatmul.f32.gmra.mxu0 %v1012
        %v1187 = vpop.f32.mrf.mxu0
        %v1188 = vadd.f32 %v1116, %v1187
        %1189 = vmatmul.f32.gmra.mxu0 %v1014
        %v1190 = vpop.f32.mrf.mxu0
        %v1191 = vadd.f32 %v1116, %v1190
        %1192 = vmatmul.f32.gmra.mxu0 %v1016
        %v1193 = vpop.f32.mrf.mxu0
        %v1194 = vadd.f32 %v1116, %v1193
        %1195 = vdwg.mxu0
        %1196 = vmatpush.msra.mxu0 %v1111
        %1197 = vmatpush.msra.mxu0 %v1108
        %1198 = vmatpush.msra.mxu0 %v1105
        %1199 = vmatpush.msra.mxu0 %v1102
        %1200 = vmatpush.msra.mxu0 %v1099
        %1201 = vmatpush.msra.mxu0 %v1096
        %1202 = vmatpush.msra.mxu0 %v1093
        %1203 = vmatpush.msra.mxu0 %v1090
        %1204 = vmatpush.msra.mxu0 %v1087
        %1205 = vmatpush.msra.mxu0 %v1084
        %1206 = vmatpush.msra.mxu0 %v1081
        %1207 = vmatpush.msra.mxu0 %v1078
        %1208 = vmatpush.msra.mxu0 %v1075
        %1209 = vmatpush.msra.mxu0 %v1072
        %1210 = vmatpush.msra.mxu0 %v1069
        %1211 = vmatpush.msra.mxu0 %v1066
        %1212 = vmatmul.f32.gmra.mxu0 %v981
        %v1213 = vpop.f32.mrf.mxu0
        %v1214 = vadd.f32 %v1140, %v1213
        %1215 = vmatmul.f32.gmra.mxu0 %v983
        %v1216 = vpop.f32.mrf.mxu0
        %v1217 = vadd.f32 %v1143, %v1216
        %1218 = vmatmul.f32.gmra.mxu0 %v985
        %v1219 = vpop.f32.mrf.mxu0
        %v1220 = vadd.f32 %v1146, %v1219
        %1221 = vmatmul.f32.gmra.mxu0 %v987
        %v1222 = vpop.f32.mrf.mxu0
        %v1223 = vadd.f32 %v1149, %v1222
        %1224 = vmatmul.f32.gmra.mxu0 %v989
        %v1225 = vpop.f32.mrf.mxu0
        %v1226 = vadd.f32 %v1152, %v1225
        %1227 = vmatmul.f32.gmra.mxu0 %v991
        %v1228 = vpop.f32.mrf.mxu0
        %v1229 = vadd.f32 %v1155, %v1228
        %1230 = vmatmul.f32.gmra.mxu0 %v993
        %v1231 = vpop.f32.mrf.mxu0
        %v1232 = vadd.f32 %v1158, %v1231
        %1233 = vmatmul.f32.gmra.mxu0 %v995
        %v1234 = vpop.f32.mrf.mxu0
        %v1235 = vadd.f32 %v1161, %v1234
        %1236 = vmatmul.f32.gmra.mxu0 %v997
        %v1237 = vpop.f32.mrf.mxu0
        %v1238 = vadd.f32 %v1164, %v1237
        %1239 = vmatmul.f32.gmra.mxu0 %v999
        %v1240 = vpop.f32.mrf.mxu0
        %v1241 = vadd.f32 %v1167, %v1240
        %1242 = vmatmul.f32.gmra.mxu0 %v1001
        %v1243 = vpop.f32.mrf.mxu0
        %v1244 = vadd.f32 %v1170, %v1243
        %1245 = vmatmul.f32.gmra.mxu0 %v1003
        %v1246 = vpop.f32.mrf.mxu0
        %v1247 = vadd.f32 %v1173, %v1246
        %1248 = vmatmul.f32.gmra.mxu0 %v1005
        %v1249 = vpop.f32.mrf.mxu0
        %v1250 = vadd.f32 %v1176, %v1249
        %1251 = vmatmul.f32.gmra.mxu0 %v1007
        %v1252 = vpop.f32.mrf.mxu0
        %v1253 = vadd.f32 %v1179, %v1252
        %1254 = vmatmul.f32.gmra.mxu0 %v1009
        %v1255 = vpop.f32.mrf.mxu0
        %v1256 = vadd.f32 %v1182, %v1255
        %1257 = vmatmul.f32.gmra.mxu0 %v1011
        %v1258 = vpop.f32.mrf.mxu0
        %v1259 = vadd.f32 %v1185, %v1258
        %1260 = vmatmul.f32.gmra.mxu0 %v1013
        %v1261 = vpop.f32.mrf.mxu0
        %v1262 = vadd.f32 %v1188, %v1261
        %1263 = vmatmul.f32.gmra.mxu0 %v1015
        %v1264 = vpop.f32.mrf.mxu0
        %v1265 = vadd.f32 %v1191, %v1264
        %1266 = vmatmul.f32.gmra.mxu0 %v1017
        %v1267 = vpop.f32.mrf.mxu0
        %v1268 = vadd.f32 %v1194, %v1267
        %1269 = vdwg.mxu0
        %1270 = vmatpush.msra.mxu0 %v1064
        %1271 = vmatpush.msra.mxu0 %v1061
        %1272 = vmatpush.msra.mxu0 %v1058
        %1273 = vmatpush.msra.mxu0 %v1055
        %1274 = vmatpush.msra.mxu0 %v1052
        %1275 = vmatpush.msra.mxu0 %v1049
        %1276 = vmatpush.msra.mxu0 %v1046
        %1277 = vmatpush.msra.mxu0 %v1043
        %1278 = vmatpush.msra.mxu0 %v1040
        %1279 = vmatpush.msra.mxu0 %v1037
        %1280 = vmatpush.msra.mxu0 %v1034
        %1281 = vmatpush.msra.mxu0 %v1031
        %1282 = vmatpush.msra.mxu0 %v1028
        %1283 = vmatpush.msra.mxu0 %v1025
        %1284 = vmatpush.msra.mxu0 %v1022
        %1285 = vmatpush.msra.mxu0 %v1019
        %1286 = vmatmul.f32.gmra.mxu0 %v980
        %v1287 = vpop.f32.mrf.mxu0
        %v1288 = vadd.f32 %v1117, %v1287
        %1289 = vmatmul.f32.gmra.mxu0 %v982
        %v1290 = vpop.f32.mrf.mxu0
        %v1291 = vadd.f32 %v1117, %v1290
        %1292 = vmatmul.f32.gmra.mxu0 %v984
        %v1293 = vpop.f32.mrf.mxu0
        %v1294 = vadd.f32 %v1117, %v1293
        %1295 = vmatmul.f32.gmra.mxu0 %v986
        %v1296 = vpop.f32.mrf.mxu0
        %v1297 = vadd.f32 %v1117, %v1296
        %1298 = vmatmul.f32.gmra.mxu0 %v988
        %v1299 = vpop.f32.mrf.mxu0
        %v1300 = vadd.f32 %v1117, %v1299
        %1301 = vmatmul.f32.gmra.mxu0 %v990
        %v1302 = vpop.f32.mrf.mxu0
        %v1303 = vadd.f32 %v1117, %v1302
        %1304 = vmatmul.f32.gmra.mxu0 %v992
        %v1305 = vpop.f32.mrf.mxu0
        %v1306 = vadd.f32 %v1117, %v1305
        %1307 = vmatmul.f32.gmra.mxu0 %v994
        %v1308 = vpop.f32.mrf.mxu0
        %v1309 = vadd.f32 %v1117, %v1308
        %1310 = vmatmul.f32.gmra.mxu0 %v996
        %v1311 = vpop.f32.mrf.mxu0
        %v1312 = vadd.f32 %v1117, %v1311
        %1313 = vmatmul.f32.gmra.mxu0 %v998
        %v1314 = vpop.f32.mrf.mxu0
        %v1315 = vadd.f32 %v1117, %v1314
        %1316 = vmatmul.f32.gmra.mxu0 %v1000
        %v1317 = vpop.f32.mrf.mxu0
        %v1318 = vadd.f32 %v1117, %v1317
        %1319 = vmatmul.f32.gmra.mxu0 %v1002
        %v1320 = vpop.f32.mrf.mxu0
        %v1321 = vadd.f32 %v1117, %v1320
        %1322 = vmatmul.f32.gmra.mxu0 %v1004
        %v1323 = vpop.f32.mrf.mxu0
        %v1324 = vadd.f32 %v1117, %v1323
        %1325 = vmatmul.f32.gmra.mxu0 %v1006
        %v1326 = vpop.f32.mrf.mxu0
        %v1327 = vadd.f32 %v1117, %v1326
        %1328 = vmatmul.f32.gmra.mxu0 %v1008
        %v1329 = vpop.f32.mrf.mxu0
        %v1330 = vadd.f32 %v1117, %v1329
        %1331 = vmatmul.f32.gmra.mxu0 %v1010
        %v1332 = vpop.f32.mrf.mxu0
        %v1333 = vadd.f32 %v1117, %v1332
        %1334 = vmatmul.f32.gmra.mxu0 %v1012
        %v1335 = vpop.f32.mrf.mxu0
        %v1336 = vadd.f32 %v1117, %v1335
        %1337 = vmatmul.f32.gmra.mxu0 %v1014
        %v1338 = vpop.f32.mrf.mxu0
        %v1339 = vadd.f32 %v1117, %v1338
        %1340 = vmatmul.f32.gmra.mxu0 %v1016
        %v1341 = vpop.f32.mrf.mxu0
        %v1342 = vadd.f32 %v1117, %v1341
        %1343 = vdwg.mxu0
        %1344 = vmatpush.msra.mxu0 %v1112
        %1345 = vmatpush.msra.mxu0 %v1109
        %1346 = vmatpush.msra.mxu0 %v1106
        %1347 = vmatpush.msra.mxu0 %v1103
        %1348 = vmatpush.msra.mxu0 %v1100
        %1349 = vmatpush.msra.mxu0 %v1097
        %1350 = vmatpush.msra.mxu0 %v1094
        %1351 = vmatpush.msra.mxu0 %v1091
        %1352 = vmatpush.msra.mxu0 %v1088
        %1353 = vmatpush.msra.mxu0 %v1085
        %1354 = vmatpush.msra.mxu0 %v1082
        %1355 = vmatpush.msra.mxu0 %v1079
        %1356 = vmatpush.msra.mxu0 %v1076
        %1357 = vmatpush.msra.mxu0 %v1073
        %1358 = vmatpush.msra.mxu0 %v1070
        %1359 = vmatpush.msra.mxu0 %v1067
        %1360 = vmatmul.f32.gmra.mxu0 %v981
        %v1361 = vpop.f32.mrf.mxu0
        %v1362 = vadd.f32 %v1288, %v1361
        %1363 = vmatmul.f32.gmra.mxu0 %v983
        %v1364 = vpop.f32.mrf.mxu0
        %v1365 = vadd.f32 %v1291, %v1364
        %1366 = vmatmul.f32.gmra.mxu0 %v985
        %v1367 = vpop.f32.mrf.mxu0
        %v1368 = vadd.f32 %v1294, %v1367
        %1369 = vmatmul.f32.gmra.mxu0 %v987
        %v1370 = vpop.f32.mrf.mxu0
        %v1371 = vadd.f32 %v1297, %v1370
        %1372 = vmatmul.f32.gmra.mxu0 %v989
        %v1373 = vpop.f32.mrf.mxu0
        %v1374 = vadd.f32 %v1300, %v1373
        %1375 = vmatmul.f32.gmra.mxu0 %v991
        %v1376 = vpop.f32.mrf.mxu0
        %v1377 = vadd.f32 %v1303, %v1376
        %1378 = vmatmul.f32.gmra.mxu0 %v993
        %v1379 = vpop.f32.mrf.mxu0
        %v1380 = vadd.f32 %v1306, %v1379
        %1381 = vmatmul.f32.gmra.mxu0 %v995
        %v1382 = vpop.f32.mrf.mxu0
        %v1383 = vadd.f32 %v1309, %v1382
        %1384 = vmatmul.f32.gmra.mxu0 %v997
        %v1385 = vpop.f32.mrf.mxu0
        %v1386 = vadd.f32 %v1312, %v1385
        %1387 = vmatmul.f32.gmra.mxu0 %v999
        %v1388 = vpop.f32.mrf.mxu0
        %v1389 = vadd.f32 %v1315, %v1388
        %1390 = vmatmul.f32.gmra.mxu0 %v1001
        %v1391 = vpop.f32.mrf.mxu0
        %v1392 = vadd.f32 %v1318, %v1391
        %1393 = vmatmul.f32.gmra.mxu0 %v1003
        %v1394 = vpop.f32.mrf.mxu0
        %v1395 = vadd.f32 %v1321, %v1394
        %1396 = vmatmul.f32.gmra.mxu0 %v1005
        %v1397 = vpop.f32.mrf.mxu0
        %v1398 = vadd.f32 %v1324, %v1397
        %1399 = vmatmul.f32.gmra.mxu0 %v1007
        %v1400 = vpop.f32.mrf.mxu0
        %v1401 = vadd.f32 %v1327, %v1400
        %1402 = vmatmul.f32.gmra.mxu0 %v1009
        %v1403 = vpop.f32.mrf.mxu0
        %v1404 = vadd.f32 %v1330, %v1403
        %1405 = vmatmul.f32.gmra.mxu0 %v1011
        %v1406 = vpop.f32.mrf.mxu0
        %v1407 = vadd.f32 %v1333, %v1406
        %1408 = vmatmul.f32.gmra.mxu0 %v1013
        %v1409 = vpop.f32.mrf.mxu0
        %v1410 = vadd.f32 %v1336, %v1409
        %1411 = vmatmul.f32.gmra.mxu0 %v1015
        %v1412 = vpop.f32.mrf.mxu0
        %v1413 = vadd.f32 %v1339, %v1412
        %1414 = vmatmul.f32.gmra.mxu0 %v1017
        %v1415 = vpop.f32.mrf.mxu0
        %v1416 = vadd.f32 %v1342, %v1415
        %1417 = vdwg.mxu0
        %1418 = vmatpush.msra.mxu0 %v1065
        %1419 = vmatpush.msra.mxu0 %v1062
        %1420 = vmatpush.msra.mxu0 %v1059
        %1421 = vmatpush.msra.mxu0 %v1056
        %1422 = vmatpush.msra.mxu0 %v1053
        %1423 = vmatpush.msra.mxu0 %v1050
        %1424 = vmatpush.msra.mxu0 %v1047
        %1425 = vmatpush.msra.mxu0 %v1044
        %1426 = vmatpush.msra.mxu0 %v1041
        %1427 = vmatpush.msra.mxu0 %v1038
        %1428 = vmatpush.msra.mxu0 %v1035
        %1429 = vmatpush.msra.mxu0 %v1032
        %1430 = vmatpush.msra.mxu0 %v1029
        %1431 = vmatpush.msra.mxu0 %v1026
        %1432 = vmatpush.msra.mxu0 %v1023
        %1433 = vmatpush.msra.mxu0 %v1020
        %1434 = vmatmul.f32.gmra.mxu0 %v980
        %v1435 = vpop.f32.mrf.mxu0
        %v1436 = vadd.f32 %v1118, %v1435
        %1437 = vmatmul.f32.gmra.mxu0 %v982
        %v1438 = vpop.f32.mrf.mxu0
        %v1439 = vadd.f32 %v1118, %v1438
        %1440 = vmatmul.f32.gmra.mxu0 %v984
        %v1441 = vpop.f32.mrf.mxu0
        %v1442 = vadd.f32 %v1118, %v1441
        %1443 = vmatmul.f32.gmra.mxu0 %v986
        %v1444 = vpop.f32.mrf.mxu0
        %v1445 = vadd.f32 %v1118, %v1444
        %1446 = vmatmul.f32.gmra.mxu0 %v988
        %v1447 = vpop.f32.mrf.mxu0
        %v1448 = vadd.f32 %v1118, %v1447
        %1449 = vmatmul.f32.gmra.mxu0 %v990
        %v1450 = vpop.f32.mrf.mxu0
        %v1451 = vadd.f32 %v1118, %v1450
        %1452 = vmatmul.f32.gmra.mxu0 %v992
        %v1453 = vpop.f32.mrf.mxu0
        %v1454 = vadd.f32 %v1118, %v1453
        %1455 = vmatmul.f32.gmra.mxu0 %v994
        %v1456 = vpop.f32.mrf.mxu0
        %v1457 = vadd.f32 %v1118, %v1456
        %1458 = vmatmul.f32.gmra.mxu0 %v996
        %v1459 = vpop.f32.mrf.mxu0
        %v1460 = vadd.f32 %v1118, %v1459
        %1461 = vmatmul.f32.gmra.mxu0 %v998
        %v1462 = vpop.f32.mrf.mxu0
        %v1463 = vadd.f32 %v1118, %v1462
        %1464 = vmatmul.f32.gmra.mxu0 %v1000
        %v1465 = vpop.f32.mrf.mxu0
        %v1466 = vadd.f32 %v1118, %v1465
        %1467 = vmatmul.f32.gmra.mxu0 %v1002
        %v1468 = vpop.f32.mrf.mxu0
        %v1469 = vadd.f32 %v1118, %v1468
        %1470 = vmatmul.f32.gmra.mxu0 %v1004
        %v1471 = vpop.f32.mrf.mxu0
        %v1472 = vadd.f32 %v1118, %v1471
        %1473 = vmatmul.f32.gmra.mxu0 %v1006
        %v1474 = vpop.f32.mrf.mxu0
        %v1475 = vadd.f32 %v1118, %v1474
        %1476 = vmatmul.f32.gmra.mxu0 %v1008
        %v1477 = vpop.f32.mrf.mxu0
        %v1478 = vadd.f32 %v1118, %v1477
        %1479 = vmatmul.f32.gmra.mxu0 %v1010
        %v1480 = vpop.f32.mrf.mxu0
        %v1481 = vadd.f32 %v1118, %v1480
        %1482 = vmatmul.f32.gmra.mxu0 %v1012
        %v1483 = vpop.f32.mrf.mxu0
        %v1484 = vadd.f32 %v1118, %v1483
        %1485 = vmatmul.f32.gmra.mxu0 %v1014
        %v1486 = vpop.f32.mrf.mxu0
        %v1487 = vadd.f32 %v1118, %v1486
        %1488 = vmatmul.f32.gmra.mxu0 %v1016
        %v1489 = vpop.f32.mrf.mxu0
        %v1490 = vadd.f32 %v1118, %v1489
        %1491 = vdwg.mxu0
        %1492 = vmatpush.msra.mxu0 %v1113
        %1493 = vmatpush.msra.mxu0 %v1110
        %1494 = vmatpush.msra.mxu0 %v1107
        %1495 = vmatpush.msra.mxu0 %v1104
        %1496 = vmatpush.msra.mxu0 %v1101
        %1497 = vmatpush.msra.mxu0 %v1098
        %1498 = vmatpush.msra.mxu0 %v1095
        %1499 = vmatpush.msra.mxu0 %v1092
        %1500 = vmatpush.msra.mxu0 %v1089
        %1501 = vmatpush.msra.mxu0 %v1086
        %1502 = vmatpush.msra.mxu0 %v1083
        %1503 = vmatpush.msra.mxu0 %v1080
        %1504 = vmatpush.msra.mxu0 %v1077
        %1505 = vmatpush.msra.mxu0 %v1074
        %1506 = vmatpush.msra.mxu0 %v1071
        %1507 = vmatpush.msra.mxu0 %v1068
        %1508 = vmatmul.f32.gmra.mxu0 %v981
        %v1509 = vpop.f32.mrf.mxu0
        %v1510 = vadd.f32 %v1436, %v1509
        %1511 = vmatmul.f32.gmra.mxu0 %v983
        %v1512 = vpop.f32.mrf.mxu0
        %v1513 = vadd.f32 %v1439, %v1512
        %1514 = vmatmul.f32.gmra.mxu0 %v985
        %v1515 = vpop.f32.mrf.mxu0
        %v1516 = vadd.f32 %v1442, %v1515
        %1517 = vmatmul.f32.gmra.mxu0 %v987
        %v1518 = vpop.f32.mrf.mxu0
        %v1519 = vadd.f32 %v1445, %v1518
        %1520 = vmatmul.f32.gmra.mxu0 %v989
        %v1521 = vpop.f32.mrf.mxu0
        %v1522 = vadd.f32 %v1448, %v1521
        %1523 = vmatmul.f32.gmra.mxu0 %v991
        %v1524 = vpop.f32.mrf.mxu0
        %v1525 = vadd.f32 %v1451, %v1524
        %1526 = vmatmul.f32.gmra.mxu0 %v993
        %v1527 = vpop.f32.mrf.mxu0
        %v1528 = vadd.f32 %v1454, %v1527
        %1529 = vmatmul.f32.gmra.mxu0 %v995
        %v1530 = vpop.f32.mrf.mxu0
        %v1531 = vadd.f32 %v1457, %v1530
        %1532 = vmatmul.f32.gmra.mxu0 %v997
        %v1533 = vpop.f32.mrf.mxu0
        %v1534 = vadd.f32 %v1460, %v1533
        %1535 = vmatmul.f32.gmra.mxu0 %v999
        %v1536 = vpop.f32.mrf.mxu0
        %v1537 = vadd.f32 %v1463, %v1536
        %1538 = vmatmul.f32.gmra.mxu0 %v1001
        %v1539 = vpop.f32.mrf.mxu0
        %v1540 = vadd.f32 %v1466, %v1539
        %1541 = vmatmul.f32.gmra.mxu0 %v1003
        %v1542 = vpop.f32.mrf.mxu0
        %v1543 = vadd.f32 %v1469, %v1542
        %1544 = vmatmul.f32.gmra.mxu0 %v1005
        %v1545 = vpop.f32.mrf.mxu0
        %v1546 = vadd.f32 %v1472, %v1545
        %1547 = vmatmul.f32.gmra.mxu0 %v1007
        %v1548 = vpop.f32.mrf.mxu0
        %v1549 = vadd.f32 %v1475, %v1548
        %1550 = vmatmul.f32.gmra.mxu0 %v1009
        %v1551 = vpop.f32.mrf.mxu0
        %v1552 = vadd.f32 %v1478, %v1551
        %1553 = vmatmul.f32.gmra.mxu0 %v1011
        %v1554 = vpop.f32.mrf.mxu0
        %v1555 = vadd.f32 %v1481, %v1554
        %1556 = vmatmul.f32.gmra.mxu0 %v1013
        %v1557 = vpop.f32.mrf.mxu0
        %v1558 = vadd.f32 %v1484, %v1557
        %1559 = vmatmul.f32.gmra.mxu0 %v1015
        %v1560 = vpop.f32.mrf.mxu0
        %v1561 = vadd.f32 %v1487, %v1560
        %1562 = vmatmul.f32.gmra.mxu0 %v1017
        %v1563 = vpop.f32.mrf.mxu0
        %v1564 = vadd.f32 %v1490, %v1563
        %1565 = vdwg.mxu0
        %1566 = vst [vmem:[%s327] sm:$0xff] %v1214
        %1567 = vst [vmem:[%s327 + $0x8] sm:$0xff] %v1362
        %1568 = vst [vmem:[%s327 + $0x10] sm:$0xff] %v1510
        %1569 = vst [vmem:[%s327 + $0x18] sm:$0xff] %v1217
        %1570 = vst [vmem:[%s327 + $0x20] sm:$0xff] %v1365
        %1571 = vst [vmem:[%s327 + $0x28] sm:$0xff] %v1513
        %1572 = vst [vmem:[%s327 + $0x30] sm:$0xff] %v1220
        %1573 = vst [vmem:[%s327 + $0x38] sm:$0xff] %v1368
        %1574 = vst [vmem:[%s327 + $0x40] sm:$0xff] %v1516
        %1575 = vst [vmem:[%s327 + $0x48] sm:$0xff] %v1223
        %1576 = vst [vmem:[%s327 + $0x50] sm:$0xff] %v1371
        %1577 = vst [vmem:[%s327 + $0x58] sm:$0xff] %v1519
        %1578 = vst [vmem:[%s327 + $0x60] sm:$0xff] %v1226
        %1579 = vst [vmem:[%s327 + $0x68] sm:$0xff] %v1374
        %1580 = vst [vmem:[%s327 + $0x70] sm:$0xff] %v1522
        %1581 = vst [vmem:[%s327 + $0x78] sm:$0xff] %v1229
        %1582 = vst [vmem:[%s327 + $0x80] sm:$0xff] %v1377
        %1583 = vst [vmem:[%s327 + $0x88] sm:$0xff] %v1525
        %1584 = vst [vmem:[%s327 + $0x90] sm:$0xff] %v1232
        %1585 = vst [vmem:[%s327 + $0x98] sm:$0xff] %v1380
        %1586 = vst [vmem:[%s327 + $0xa0] sm:$0xff] %v1528
        %1587 = vst [vmem:[%s327 + $0xa8] sm:$0xff] %v1235
        %1588 = vst [vmem:[%s327 + $0xb0] sm:$0xff] %v1383
        %1589 = vst [vmem:[%s327 + $0xb8] sm:$0xff] %v1531
        %1590 = vst [vmem:[%s327 + $0xc0] sm:$0xff] %v1238
        %1591 = vst [vmem:[%s327 + $0xc8] sm:$0xff] %v1386
        %1592 = vst [vmem:[%s327 + $0xd0] sm:$0xff] %v1534
        %1593 = vst [vmem:[%s327 + $0xd8] sm:$0xff] %v1241
        %1594 = vst [vmem:[%s327 + $0xe0] sm:$0xff] %v1389
        %1595 = vst [vmem:[%s327 + $0xe8] sm:$0xff] %v1537
        %1596 = vst [vmem:[%s327 + $0xf0] sm:$0xff] %v1244
        %1597 = vst [vmem:[%s327 + $0xf8] sm:$0xff] %v1392
        %1598 = vst [vmem:[%s327 + $0x100] sm:$0xff] %v1540
        %1599 = vst [vmem:[%s327 + $0x108] sm:$0xff] %v1247
        %1600 = vst [vmem:[%s327 + $0x110] sm:$0xff] %v1395
        %1601 = vst [vmem:[%s327 + $0x118] sm:$0xff] %v1543
        %1602 = vst [vmem:[%s327 + $0x120] sm:$0xff] %v1250
        %1603 = vst [vmem:[%s327 + $0x128] sm:$0xff] %v1398
        %1604 = vst [vmem:[%s327 + $0x130] sm:$0xff] %v1546
        %1605 = vst [vmem:[%s327 + $0x138] sm:$0xff] %v1253
        %1606 = vst [vmem:[%s327 + $0x140] sm:$0xff] %v1401
        %1607 = vst [vmem:[%s327 + $0x148] sm:$0xff] %v1549
        %1608 = vst [vmem:[%s327 + $0x150] sm:$0xff] %v1256
        %1609 = vst [vmem:[%s327 + $0x158] sm:$0xff] %v1404
        %1610 = vst [vmem:[%s327 + $0x160] sm:$0xff] %v1552
        %1611 = vst [vmem:[%s327 + $0x168] sm:$0xff] %v1259
        %1612 = vst [vmem:[%s327 + $0x170] sm:$0xff] %v1407
        %1613 = vst [vmem:[%s327 + $0x178] sm:$0xff] %v1555
        %1614 = vst [vmem:[%s327 + $0x180] sm:$0xff] %v1262
        %1615 = vst [vmem:[%s327 + $0x188] sm:$0xff] %v1410
        %1616 = vst [vmem:[%s327 + $0x190] sm:$0xff] %v1558
        %1617 = vst [vmem:[%s327 + $0x198] sm:$0xff] %v1265
        %1618 = vst [vmem:[%s327 + $0x1a0] sm:$0xff] %v1413
        %1619 = vst [vmem:[%s327 + $0x1a8] sm:$0xff] %v1561
        %1620 = vst [vmem:[%s327 + $0x1b0] sm:$0xff] %v1268
        %1621 = vst [vmem:[%s327 + $0x1b8] sm:$0xff] %v1416
        %1622 = vst [vmem:[%s327 + $0x1c0] sm:$0xff] %v1564
        %s1623 = sand.u32 %s166, 1
        %s1624 = scalar_lea.sflag [#allocation5], %s1623
        %s1625 = sand.u32 %s166, 1
        %s1626 = smul.addr %s1625, 456
        %s1627 = scalar_lea.vmem [#allocation11], %s1626
        // Predicated region
        $region61: #{tpu_custom_call.1} parent=39 // pred_check
          %p1628 = pneg %p176
        $region62: #{tpu_custom_call.1} parent=39 // pred_check_branch
          %1630 = sbr.rel (%p1628) target = $region64
        $region63: #{tpu_custom_call.1} parent=39 // pred_region
          %s1631 = smul.u32 19, %s28
          %s1632 = smul.u32 3, %s29
          %1634 = vsyncadd %s1624, 0
          %s1635 = smul.addr %s1631, 3
          %s1636 = sadd.s32 %s1632, %s1635
          %s1637 = smul.addr %s1636, 8
          %s1638 = scalar_lea.hbm %s5, %s1637
          %s1639 = sshll.u32 %s1627, 4
          %s1640 = int_to_ptr.vmem [resolvable:$true] %s1639
          %s1641 = sshll.u32 %s1638, 4
          %s1642 = int_to_ptr.hbm [resolvable:$true] %s1641
          %1647 = dma.vmem_to_hbm [thread:$0]  %s1640, 7296, %s1642, %s1624, 384, 384, 24
        $region64: #{tpu_custom_call.1} parent=39 // pred_fallthru
          _
      $region40: #{tpu_custom_call.1} parent=5 // pred_fallthru
        _
      %p1648 = scmp.le.s32.totalorder 2, %s19
      // Predicated region
      $region65: #{tpu_custom_call.1} parent=5 // pred_check
        %p1649 = pneg %p1648
      $region66: #{tpu_custom_call.1} parent=5 // pred_check_branch
        %1651 = sbr.rel (%p1649) target = $region68
      $region67: #{tpu_custom_call.1} parent=5 // pred_region
        %s1652 = ssub.s32 %s19, 2
        // Predicated region
        $region69: #{tpu_custom_call.1} parent=67 // pred_check
          %p1653 = pneg %p182
        $region70: #{tpu_custom_call.1} parent=67 // pred_check_branch
          %1655 = sbr.rel (%p1653) target = $region72
        $region71: #{tpu_custom_call.1} parent=67 // pred_region
          %s1656 = sand.u32 %s167, 1
          %s1657 = scalar_lea.sflag [#allocation5], %s1656
          %s1658 = sand.u32 %s167, 1
          %s1659 = smul.addr %s1658, 456
          %s1660 = scalar_lea.vmem [#allocation11], %s1659
          %1662 = dma.done %s1657, 7296
        $region72: #{tpu_custom_call.1} parent=67 // pred_fallthru
          _
      $region68: #{tpu_custom_call.1} parent=5 // pred_fallthru
        _
    $region6: #{tpu_custom_call.1} parent=1 // loop_footer
      %s23 = sadd.s32 1, %s19
    $region7: #{tpu_custom_call.1} parent=1 // loop_footer_branch
      %18 = sbr.rel target = $region3
    $region8: #{tpu_custom_call.1} parent=1 // loop_exit
      _
    %1663 = vsyncpa [#allocation4], 1
    %s1664 = scalar_lea.sflag [#allocation4], 1
    %1665 = vsyncpa %s1664, 1
    %1666 = vsyncpa [#allocation7], 1
    %1667 = vsyncpa [#allocation10], 1
    %1668 = vsyncpa [#allocation5], 1
    %s1669 = scalar_lea.sflag [#allocation5], 1
    %1670 = vsyncpa %s1669, 1

</llo_original>
